<compile_context>
chip_gen: v6e
topology: v6e:2x2x1
jax: 0.10.0
libtpu: 0.0.40
codegen_flags: <defaults>
</compile_context>

<pallas_src>
import functools
import math

import jax
import jax.numpy as jnp
from jax.experimental import pallas as pl
from jax.experimental.pallas import tpu as pltpu


# Fixed ordering of the flat weight operands fed to the fused kernel.
_WEIGHT_ORDER = (
    # encoder self-attention (head-major 3D layouts)
    "e_wq", "e_bq", "e_wk", "e_bk", "e_wv", "e_bv", "e_wo", "e_bo",
    "e_ln1_g", "e_ln1_b",
    "e_ff_w1", "e_ff_b1", "e_ff_w2", "e_ff_b2",
    "e_ln2_g", "e_ln2_b",
    # decoder self-attention
    "d_wq", "d_bq", "d_wk", "d_bk", "d_wv", "d_bv", "d_wo", "d_bo",
    "d_ln1_g", "d_ln1_b",
    # decoder cross-attention
    "d_cwq", "d_cbq", "d_cwk", "d_cbk", "d_cwv", "d_cbv", "d_cwo", "d_cbo",
    "d_ln2_g", "d_ln2_b",
    "d_ff_w1", "d_ff_b1", "d_ff_w2", "d_ff_b2",
    "d_ln3_g", "d_ln3_b",
    # vocab head
    "out_w", "out_b",
)


# ----------------------------------------------------------------------------
# Fused kernel: embeddings-add + encoder + decoder + vocab head, per batch elem
# ----------------------------------------------------------------------------

def _fused_transformer_kernel(enc_ref, dec_ref, pos_ref, *refs,
                              num_heads, dk, dv):
    out_ref = refs[-1]
    W = {name: refs[i] for i, name in enumerate(_WEIGHT_ORDER)}
    f32 = jnp.float32
    H = num_heads

    def layernorm(x, g, b):
        # LayerNorm over last dim, eps matches nn.LayerNorm default (1e-5).
        mean = jnp.mean(x, axis=-1, keepdims=True)
        var = jnp.mean((x - mean) ** 2, axis=-1, keepdims=True)
        return (x - mean) * jax.lax.rsqrt(var + 1e-5) * g + b

    def mha(xq, xkv, pfx, mask):
        # Weights are pre-reshaped host-side: wq/wk: (H,C,dk), wv: (H,C,dv),
        # wo: (H,dv,C), bq/bk: (H,1,dk), bv: (H,1,dv), bo: (1,C).
        wq, bq = W[pfx + "wq"][...], W[pfx + "bq"][...]
        wk, bk = W[pfx + "wk"][...], W[pfx + "bk"][...]
        wv, bv = W[pfx + "wv"][...], W[pfx + "bv"][...]
        wo, bo = W[pfx + "wo"][...], W[pfx + "bo"][...]
        Tq, C = xq.shape
        Tk = xkv.shape[0]
        # Head-batched projections: one batched contraction per tensor,
        # no per-head Python loop / in-vreg lane slicing.
        xq_h = jnp.broadcast_to(xq[None], (H, Tq, C))
        xkv_h = jnp.broadcast_to(xkv[None], (H, Tk, C))
        q = jnp.einsum("htc,hcd->htd", xq_h, wq,
                       preferred_element_type=f32) + bq          # (H,Tq,dk)
        k = jnp.einsum("htc,hcd->htd", xkv_h, wk,
                       preferred_element_type=f32) + bk          # (H,Tk,dk)
        v = jnp.einsum("htc,hcd->htd", xkv_h, wv,
                       preferred_element_type=f32) + bv          # (H,Tk,dv)
        s = jnp.einsum("hqd,hkd->hqk", q, k,
                       preferred_element_type=f32) * (1.0 / math.sqrt(dk))
        if mask is not None:
            # finite large-negative (safer than -inf if rows ever fully mask)
            s = jnp.where(mask, s, -1e30)
        s = s - jnp.max(s, axis=-1, keepdims=True)
        p = jnp.exp(s)
        p = p * pl.reciprocal(jnp.sum(p, axis=-1, keepdims=True), approx=True)
        o = jnp.einsum("hqk,hkd->hqd", p, v,
                       preferred_element_type=f32)               # (H,Tq,dv)
        # concat(heads) @ wo  ==  sum_h (o_h @ wo_h)
        y = jnp.einsum("hqd,hdc->hqc", o, wo, preferred_element_type=f32)
        return jnp.sum(y, axis=0) + bo                           # (Tq,C)

    def ffn(x, pfx):
        w1, b1 = W[pfx + "ff_w1"][...], W[pfx + "ff_b1"][...]
        w2, b2 = W[pfx + "ff_w2"][...], W[pfx + "ff_b2"][...]
        h = jnp.maximum(jnp.dot(x, w1, preferred_element_type=f32) + b1, 0.0)
        return jnp.dot(h, w2, preferred_element_type=f32) + b2

    pos = pos_ref[...].astype(f32)                 # (T, C)
    T = pos.shape[0]
    # Causal mask built ONCE (hoisted; broadcast over heads, no duplication).
    row = jax.lax.broadcasted_iota(jnp.int32, (T, T), 0)
    col = jax.lax.broadcasted_iota(jnp.int32, (T, T), 1)
    causal = (col <= row)[None]                    # (1,T,T)

    # ---- encoder block (post-LN) ----
    x = enc_ref[...].astype(f32) + pos
    a = mha(x, x, "e_", None)
    x = layernorm(x + a, W["e_ln1_g"][...], W["e_ln1_b"][...])
    f = ffn(x, "e_")
    enc_out = layernorm(x + f, W["e_ln2_g"][...], W["e_ln2_b"][...])

    # ---- decoder block (post-LN) ----
    y = dec_ref[...].astype(f32) + pos
    a = mha(y, y, "d_", causal)
    y = layernorm(y + a, W["d_ln1_g"][...], W["d_ln1_b"][...])
    a = mha(y, enc_out, "d_c", None)
    y = layernorm(y + a, W["d_ln2_g"][...], W["d_ln2_b"][...])
    f = ffn(y, "d_")
    y = layernorm(y + f, W["d_ln3_g"][...], W["d_ln3_b"][...])

    # ---- vocab head ----
    logits = jnp.dot(y, W["out_w"][...],
                     preferred_element_type=f32) + W["out_b"][...]
    out_ref[...] = logits.astype(out_ref.dtype)


def fused_transformer(enc_emb, dec_emb, pos_emb, weights, *,
                      num_heads, dk, dv, vocab_size):
    """enc_emb/dec_emb: (B, T, C) token embeddings; pos_emb: (T, C)."""
    B, T, C = enc_emb.shape
    kernel = functools.partial(_fused_transformer_kernel,
                               num_heads=num_heads, dk=dk, dv=dv)

    def rep_spec(a):
        # Full weight, constant block index -> fetched once, VMEM-resident
        # across all grid iterations.
        return pl.BlockSpec(a.shape, lambda b, _n=a.ndim: (0,) * _n)

    in_specs = [
        pl.BlockSpec((None, T, C), lambda b: (b, 0, 0)),   # enc token embs
        pl.BlockSpec((None, T, C), lambda b: (b, 0, 0)),   # dec token embs
        pl.BlockSpec((T, C), lambda b: (0, 0)),            # positional embs
    ] + [rep_spec(w) for w in weights]

    return pl.pallas_call(
        kernel,
        out_shape=jax.ShapeDtypeStruct((B, T, vocab_size), enc_emb.dtype),
        grid=(B,),
        in_specs=in_specs,
        out_specs=pl.BlockSpec((None, T, vocab_size), lambda b: (b, 0, 0)),
        compiler_params=pltpu.CompilerParams(
            dimension_semantics=("parallel",)),
    )(enc_emb, dec_emb, pos_emb, *weights)


# ----------------------------------------------------------------------------
# Parameter init (deterministic, PyTorch-style defaults)
# ----------------------------------------------------------------------------

def _lin_w(key, fan_in, shape):
    bound = 1.0 / math.sqrt(fan_in)
    return jax.random.uniform(key, shape, jnp.float32, -bound, bound)


def _init_attn(key, C, H, dk, dv):
    ks = jax.random.split(key, 8)
    return dict(
        wq=_lin_w(ks[0], C, (C, H * dk)), bq=_lin_w(ks[1], C, (1, H * dk)),
        wk=_lin_w(ks[2], C, (C, H * dk)), bk=_lin_w(ks[3], C, (1, H * dk)),
        wv=_lin_w(ks[4], C, (C, H * dv)), bv=_lin_w(ks[5], C, (1, H * dv)),
        wo=_lin_w(ks[6], H * dv, (H * dv, C)), bo=_lin_w(ks[7], H * dv, (1, C)),
    )


def init_params(key, vocab_size, C, T, dim_ff, dim_k, dim_v, num_heads):
    ks = jax.random.split(key, 12)
    enc = dict(
        attn=_init_attn(ks[0], C, num_heads, dim_k, dim_v),
        ln1_g=jnp.ones((C,), jnp.float32), ln1_b=jnp.zeros((C,), jnp.float32),
        ff_w1=_lin_w(ks[1], C, (C, dim_ff)), ff_b1=_lin_w(ks[2], C, (dim_ff,)),
        ff_w2=_lin_w(ks[3], dim_ff, (dim_ff, C)), ff_b2=_lin_w(ks[4], dim_ff, (C,)),
        ln2_g=jnp.ones((C,), jnp.float32), ln2_b=jnp.zeros((C,), jnp.float32),
    )
    dec = dict(
        self_attn=_init_attn(ks[5], C, num_heads, dim_k, dim_v),
        ln1_g=jnp.ones((C,), jnp.float32), ln1_b=jnp.zeros((C,), jnp.float32),
        cross_attn=_init_attn(ks[6], C, num_heads, dim_k, dim_v),
        ln2_g=jnp.ones((C,), jnp.float32), ln2_b=jnp.zeros((C,), jnp.float32),
        ff_w1=_lin_w(ks[7], C, (C, dim_ff)), ff_b1=_lin_w(ks[8], C, (dim_ff,)),
        ff_w2=_lin_w(ks[9], dim_ff, (dim_ff, C)), ff_b2=_lin_w(ks[10], dim_ff, (C,)),
        ln3_g=jnp.ones((C,), jnp.float32), ln3_b=jnp.zeros((C,), jnp.float32),
    )
    ks2 = jax.random.split(ks[11], 4)
    return dict(
        token_embs=jax.random.normal(ks2[0], (vocab_size, C), jnp.float32),
        pos_embs=jax.random.normal(ks2[1], (T, C), jnp.float32),
        encoder=enc,
        decoder=dec,
        out_w=_lin_w(ks2[2], C, (C, vocab_size)),
        out_b=_lin_w(ks2[3], C, (vocab_size,)),
    )


def _flatten_params(params, *, num_heads, dk, dv):
    """Reshape attention weights to head-major 3D and flatten to kernel order."""
    H = num_heads

    def attn3(a):
        C = a["wq"].shape[0]
        Cout = a["wo"].shape[1]
        return dict(
            wq=a["wq"].reshape(C, H, dk).transpose(1, 0, 2),   # (H, C, dk)
            bq=a["bq"].reshape(H, 1, dk),
            wk=a["wk"].reshape(C, H, dk).transpose(1, 0, 2),
            bk=a["bk"].reshape(H, 1, dk),
            wv=a["wv"].reshape(C, H, dv).transpose(1, 0, 2),   # (H, C, dv)
            bv=a["bv"].reshape(H, 1, dv),
            wo=a["wo"].reshape(H, dv, Cout),                   # (H, dv, C)
            bo=a["bo"],                                        # (1, C)
        )

    enc, dec = params["encoder"], params["decoder"]
    ea, da, ca = attn3(enc["attn"]), attn3(dec["self_attn"]), attn3(dec["cross_attn"])
    C = params["out_w"].shape[0]

    flat = {
        "e_wq": ea["wq"], "e_bq": ea["bq"], "e_wk": ea["wk"], "e_bk": ea["bk"],
        "e_wv": ea["wv"], "e_bv": ea["bv"], "e_wo": ea["wo"], "e_bo": ea["bo"],
        "e_ln1_g": enc["ln1_g"].reshape(1, C), "e_ln1_b": enc["ln1_b"].reshape(1, C),
        "e_ff_w1": enc["ff_w1"], "e_ff_b1": enc["ff_b1"].reshape(1, -1),
        "e_ff_w2": enc["ff_w2"], "e_ff_b2": enc["ff_b2"].reshape(1, -1),
        "e_ln2_g": enc["ln2_g"].reshape(1, C), "e_ln2_b": enc["ln2_b"].reshape(1, C),

        "d_wq": da["wq"], "d_bq": da["bq"], "d_wk": da["wk"], "d_bk": da["bk"],
        "d_wv": da["wv"], "d_bv": da["bv"], "d_wo": da["wo"], "d_bo": da["bo"],
        "d_ln1_g": dec["ln1_g"].reshape(1, C), "d_ln1_b": dec["ln1_b"].reshape(1, C),

        "d_cwq": ca["wq"], "d_cbq": ca["bq"], "d_cwk": ca["wk"], "d_cbk": ca["bk"],
        "d_cwv": ca["wv"], "d_cbv": ca["bv"], "d_cwo": ca["wo"], "d_cbo": ca["bo"],
        "d_ln2_g": dec["ln2_g"].reshape(1, C), "d_ln2_b": dec["ln2_b"].reshape(1, C),

        "d_ff_w1": dec["ff_w1"], "d_ff_b1": dec["ff_b1"].reshape(1, -1),
        "d_ff_w2": dec["ff_w2"], "d_ff_b2": dec["ff_b2"].reshape(1, -1),
        "d_ln3_g": dec["ln3_g"].reshape(1, C), "d_ln3_b": dec["ln3_b"].reshape(1, C),

        "out_w": params["out_w"], "out_b": params["out_b"].reshape(1, -1),
    }
    return [flat[name] for name in _WEIGHT_ORDER]


# ----------------------------------------------------------------------------
# Forward pass
# ----------------------------------------------------------------------------

def transformer_forward(params, enc_input, dec_input, *, T, num_heads, dk, dv,
                        targets=None):
    # Truncate to last T tokens (matches enc_input[:, -T:]).
    trunc_enc = enc_input[:, -T:]
    trunc_dec = dec_input[:, -T:]
    assert trunc_enc.shape == trunc_dec.shape
    Tt = trunc_enc.shape[-1]

    tok = params["token_embs"]
    pos = params["pos_embs"][:Tt]
    # TODO(synk): the token-id gather stays in XLA (tiny); the positional add
    # is fused into the Pallas kernel.
    enc_emb = jnp.take(tok, trunc_enc, axis=0)     # (B, Tt, C)
    dec_emb = jnp.take(tok, trunc_dec, axis=0)     # (B, Tt, C)

    weights = _flatten_params(params, num_heads=num_heads, dk=dk, dv=dv)
    vocab_size = params["out_w"].shape[1]
    logits = fused_transformer(enc_emb, dec_emb, pos, weights,
                               num_heads=num_heads, dk=dk, dv=dv,
                               vocab_size=vocab_size)

    if targets is None:
        loss = None
    else:
        B, Tn, V = logits.shape
        flat = logits.reshape(B * Tn, V)
        logprobs = jax.nn.log_softmax(flat, axis=1)
        rel = logprobs[jnp.arange(B * Tn), targets.reshape(-1)]
        loss = -jnp.sum(rel) / (B * Tn)
    return logits, loss


# ----------------------------------------------------------------------------
# Main
# ----------------------------------------------------------------------------

if __name__ == "__main__":
    vocab_size = 32
    C = 32
    T = 8
    dim_ff = 64
    dim_k = 16
    dim_v = 16
    num_heads = 2
    B = 2
    seq_len = 12  # longer than T to exercise the [:, -T:] truncation

    root = jax.random.PRNGKey(0)
    kp, ke, kd = jax.random.split(root, 3)
    params = init_params(kp, vocab_size, C, T, dim_ff, dim_k, dim_v, num_heads)

    enc_input = jax.random.randint(ke, (B, seq_len), 0, vocab_size, jnp.int32)
    dec_input = jax.random.randint(kd, (B, seq_len), 0, vocab_size, jnp.int32)

    # Jit the full forward so weight re-layout, the token gather and the fused
    # Pallas call compile into one program (no per-op dispatch overhead).
    fwd = jax.jit(functools.partial(transformer_forward,
                                    T=T, num_heads=num_heads,
                                    dk=dim_k, dv=dim_v))

    logits, loss = fwd(params, enc_input, dec_input)

    logits = jax.block_until_ready(logits)
    assert logits.shape == (B, T, vocab_size)
    assert bool(jnp.all(jnp.isfinite(logits)))
    print("KERNEL_OK")
</pallas_src>

<mosaic_0001>
module attributes {stable_mosaic.version = 11 : i64} {
  func.func @_fused_transformer_kernel(%arg0: i32, %arg1: memref<1x8x32xf32, #tpu.memory_space<vmem>>, %arg2: memref<1x8x32xf32, #tpu.memory_space<vmem>>, %arg3: memref<8x32xf32, #tpu.memory_space<vmem>>, %arg4: memref<2x32x16xf32, #tpu.memory_space<vmem>>, %arg5: memref<2x1x16xf32, #tpu.memory_space<vmem>>, %arg6: memref<2x32x16xf32, #tpu.memory_space<vmem>>, %arg7: memref<2x1x16xf32, #tpu.memory_space<vmem>>, %arg8: memref<2x32x16xf32, #tpu.memory_space<vmem>>, %arg9: memref<2x1x16xf32, #tpu.memory_space<vmem>>, %arg10: memref<2x16x32xf32, #tpu.memory_space<vmem>>, %arg11: memref<1x32xf32, #tpu.memory_space<vmem>>, %arg12: memref<1x32xf32, #tpu.memory_space<vmem>>, %arg13: memref<1x32xf32, #tpu.memory_space<vmem>>, %arg14: memref<32x64xf32, #tpu.memory_space<vmem>>, %arg15: memref<1x64xf32, #tpu.memory_space<vmem>>, %arg16: memref<64x32xf32, #tpu.memory_space<vmem>>, %arg17: memref<1x32xf32, #tpu.memory_space<vmem>>, %arg18: memref<1x32xf32, #tpu.memory_space<vmem>>, %arg19: memref<1x32xf32, #tpu.memory_space<vmem>>, %arg20: memref<2x32x16xf32, #tpu.memory_space<vmem>>, %arg21: memref<2x1x16xf32, #tpu.memory_space<vmem>>, %arg22: memref<2x32x16xf32, #tpu.memory_space<vmem>>, %arg23: memref<2x1x16xf32, #tpu.memory_space<vmem>>, %arg24: memref<2x32x16xf32, #tpu.memory_space<vmem>>, %arg25: memref<2x1x16xf32, #tpu.memory_space<vmem>>, %arg26: memref<2x16x32xf32, #tpu.memory_space<vmem>>, %arg27: memref<1x32xf32, #tpu.memory_space<vmem>>, %arg28: memref<1x32xf32, #tpu.memory_space<vmem>>, %arg29: memref<1x32xf32, #tpu.memory_space<vmem>>, %arg30: memref<2x32x16xf32, #tpu.memory_space<vmem>>, %arg31: memref<2x1x16xf32, #tpu.memory_space<vmem>>, %arg32: memref<2x32x16xf32, #tpu.memory_space<vmem>>, %arg33: memref<2x1x16xf32, #tpu.memory_space<vmem>>, %arg34: memref<2x32x16xf32, #tpu.memory_space<vmem>>, %arg35: memref<2x1x16xf32, #tpu.memory_space<vmem>>, %arg36: memref<2x16x32xf32, #tpu.memory_space<vmem>>, %arg37: memref<1x32xf32, #tpu.memory_space<vmem>>, %arg38: memref<1x32xf32, #tpu.memory_space<vmem>>, %arg39: memref<1x32xf32, #tpu.memory_space<vmem>>, %arg40: memref<32x64xf32, #tpu.memory_space<vmem>>, %arg41: memref<1x64xf32, #tpu.memory_space<vmem>>, %arg42: memref<64x32xf32, #tpu.memory_space<vmem>>, %arg43: memref<1x32xf32, #tpu.memory_space<vmem>>, %arg44: memref<1x32xf32, #tpu.memory_space<vmem>>, %arg45: memref<1x32xf32, #tpu.memory_space<vmem>>, %arg46: memref<32x32xf32, #tpu.memory_space<vmem>>, %arg47: memref<1x32xf32, #tpu.memory_space<vmem>>, %arg48: memref<1x8x32xf32, #tpu.memory_space<vmem>>) attributes {dimension_semantics = [#tpu.dimension_semantics<parallel>], iteration_bounds = array<i64: 2>, scalar_prefetch = 0 : i64, scratch_operands = 0 : i64, tpu.core_type = #tpu.core_type<tc>, window_params = [{transform_indices = @transform_0, window_bounds = array<i64: 1, 8, 32>}, {transform_indices = @transform_1, window_bounds = array<i64: 1, 8, 32>}, {pipeline_mode = #tpu.pipeline_mode<synchronous>, transform_indices = @transform_2, window_bounds = array<i64: 8, 32>}, {pipeline_mode = #tpu.pipeline_mode<synchronous>, transform_indices = @transform_3, window_bounds = array<i64: 2, 32, 16>}, {pipeline_mode = #tpu.pipeline_mode<synchronous>, transform_indices = @transform_4, window_bounds = array<i64: 2, 1, 16>}, {pipeline_mode = #tpu.pipeline_mode<synchronous>, transform_indices = @transform_5, window_bounds = array<i64: 2, 32, 16>}, {pipeline_mode = #tpu.pipeline_mode<synchronous>, transform_indices = @transform_6, window_bounds = array<i64: 2, 1, 16>}, {pipeline_mode = #tpu.pipeline_mode<synchronous>, transform_indices = @transform_7, window_bounds = array<i64: 2, 32, 16>}, {pipeline_mode = #tpu.pipeline_mode<synchronous>, transform_indices = @transform_8, window_bounds = array<i64: 2, 1, 16>}, {pipeline_mode = #tpu.pipeline_mode<synchronous>, transform_indices = @transform_9, window_bounds = array<i64: 2, 16, 32>}, {pipeline_mode = #tpu.pipeline_mode<synchronous>, transform_indices = @transform_10, window_bounds = array<i64: 1, 32>}, {pipeline_mode = #tpu.pipeline_mode<synchronous>, transform_indices = @transform_11, window_bounds = array<i64: 1, 32>}, {pipeline_mode = #tpu.pipeline_mode<synchronous>, transform_indices = @transform_12, window_bounds = array<i64: 1, 32>}, {pipeline_mode = #tpu.pipeline_mode<synchronous>, transform_indices = @transform_13, window_bounds = array<i64: 32, 64>}, {pipeline_mode = #tpu.pipeline_mode<synchronous>, transform_indices = @transform_14, window_bounds = array<i64: 1, 64>}, {pipeline_mode = #tpu.pipeline_mode<synchronous>, transform_indices = @transform_15, window_bounds = array<i64: 64, 32>}, {pipeline_mode = #tpu.pipeline_mode<synchronous>, transform_indices = @transform_16, window_bounds = array<i64: 1, 32>}, {pipeline_mode = #tpu.pipeline_mode<synchronous>, transform_indices = @transform_17, window_bounds = array<i64: 1, 32>}, {pipeline_mode = #tpu.pipeline_mode<synchronous>, transform_indices = @transform_18, window_bounds = array<i64: 1, 32>}, {pipeline_mode = #tpu.pipeline_mode<synchronous>, transform_indices = @transform_19, window_bounds = array<i64: 2, 32, 16>}, {pipeline_mode = #tpu.pipeline_mode<synchronous>, transform_indices = @transform_20, window_bounds = array<i64: 2, 1, 16>}, {pipeline_mode = #tpu.pipeline_mode<synchronous>, transform_indices = @transform_21, window_bounds = array<i64: 2, 32, 16>}, {pipeline_mode = #tpu.pipeline_mode<synchronous>, transform_indices = @transform_22, window_bounds = array<i64: 2, 1, 16>}, {pipeline_mode = #tpu.pipeline_mode<synchronous>, transform_indices = @transform_23, window_bounds = array<i64: 2, 32, 16>}, {pipeline_mode = #tpu.pipeline_mode<synchronous>, transform_indices = @transform_24, window_bounds = array<i64: 2, 1, 16>}, {pipeline_mode = #tpu.pipeline_mode<synchronous>, transform_indices = @transform_25, window_bounds = array<i64: 2, 16, 32>}, {pipeline_mode = #tpu.pipeline_mode<synchronous>, transform_indices = @transform_26, window_bounds = array<i64: 1, 32>}, {pipeline_mode = #tpu.pipeline_mode<synchronous>, transform_indices = @transform_27, window_bounds = array<i64: 1, 32>}, {pipeline_mode = #tpu.pipeline_mode<synchronous>, transform_indices = @transform_28, window_bounds = array<i64: 1, 32>}, {pipeline_mode = #tpu.pipeline_mode<synchronous>, transform_indices = @transform_29, window_bounds = array<i64: 2, 32, 16>}, {pipeline_mode = #tpu.pipeline_mode<synchronous>, transform_indices = @transform_30, window_bounds = array<i64: 2, 1, 16>}, {pipeline_mode = #tpu.pipeline_mode<synchronous>, transform_indices = @transform_31, window_bounds = array<i64: 2, 32, 16>}, {pipeline_mode = #tpu.pipeline_mode<synchronous>, transform_indices = @transform_32, window_bounds = array<i64: 2, 1, 16>}, {pipeline_mode = #tpu.pipeline_mode<synchronous>, transform_indices = @transform_33, window_bounds = array<i64: 2, 32, 16>}, {pipeline_mode = #tpu.pipeline_mode<synchronous>, transform_indices = @transform_34, window_bounds = array<i64: 2, 1, 16>}, {pipeline_mode = #tpu.pipeline_mode<synchronous>, transform_indices = @transform_35, window_bounds = array<i64: 2, 16, 32>}, {pipeline_mode = #tpu.pipeline_mode<synchronous>, transform_indices = @transform_36, window_bounds = array<i64: 1, 32>}, {pipeline_mode = #tpu.pipeline_mode<synchronous>, transform_indices = @transform_37, window_bounds = array<i64: 1, 32>}, {pipeline_mode = #tpu.pipeline_mode<synchronous>, transform_indices = @transform_38, window_bounds = array<i64: 1, 32>}, {pipeline_mode = #tpu.pipeline_mode<synchronous>, transform_indices = @transform_39, window_bounds = array<i64: 32, 64>}, {pipeline_mode = #tpu.pipeline_mode<synchronous>, transform_indices = @transform_40, window_bounds = array<i64: 1, 64>}, {pipeline_mode = #tpu.pipeline_mode<synchronous>, transform_indices = @transform_41, window_bounds = array<i64: 64, 32>}, {pipeline_mode = #tpu.pipeline_mode<synchronous>, transform_indices = @transform_42, window_bounds = array<i64: 1, 32>}, {pipeline_mode = #tpu.pipeline_mode<synchronous>, transform_indices = @transform_43, window_bounds = array<i64: 1, 32>}, {pipeline_mode = #tpu.pipeline_mode<synchronous>, transform_indices = @transform_44, window_bounds = array<i64: 1, 32>}, {pipeline_mode = #tpu.pipeline_mode<synchronous>, transform_indices = @transform_45, window_bounds = array<i64: 32, 32>}, {pipeline_mode = #tpu.pipeline_mode<synchronous>, transform_indices = @transform_46, window_bounds = array<i64: 1, 32>}, {transform_indices = @transform_47, window_bounds = array<i64: 1, 8, 32>}]} {
    %c0 = arith.constant 0 : index
    %c0_0 = arith.constant 0 : index
    %0 = vector.load %arg3[%c0, %c0_0] : memref<8x32xf32, #tpu.memory_space<vmem>>, vector<8x32xf32>
    %1 = tpu.iota {dimensions = array<i32: 0>} : vector<8x8xi32>
    %2 = tpu.iota {dimensions = array<i32: 1>} : vector<8x8xi32>
    %3 = arith.cmpi sle, %2, %1 : vector<8x8xi32>
    %4 = vector.shape_cast %3 : vector<8x8xi1> to vector<1x8x8xi1>
    %c0_1 = arith.constant 0 : index
    %c0_2 = arith.constant 0 : index
    %c0_3 = arith.constant 0 : index
    %5 = vector.load %arg1[%c0_1, %c0_2, %c0_3] : memref<1x8x32xf32, #tpu.memory_space<vmem>>, vector<1x8x32xf32>
    %6 = vector.shape_cast %5 : vector<1x8x32xf32> to vector<8x32xf32>
    %7 = arith.addf %6, %0 : vector<8x32xf32>
    %c0_4 = arith.constant 0 : index
    %c0_5 = arith.constant 0 : index
    %c0_6 = arith.constant 0 : index
    %8 = vector.load %arg4[%c0_4, %c0_5, %c0_6] : memref<2x32x16xf32, #tpu.memory_space<vmem>>, vector<2x32x16xf32>
    %c0_7 = arith.constant 0 : index
    %c0_8 = arith.constant 0 : index
    %c0_9 = arith.constant 0 : index
    %9 = vector.load %arg5[%c0_7, %c0_8, %c0_9] : memref<2x1x16xf32, #tpu.memory_space<vmem>>, vector<2x1x16xf32>
    %c0_10 = arith.constant 0 : index
    %c0_11 = arith.constant 0 : index
    %c0_12 = arith.constant 0 : index
    %10 = vector.load %arg6[%c0_10, %c0_11, %c0_12] : memref<2x32x16xf32, #tpu.memory_space<vmem>>, vector<2x32x16xf32>
    %c0_13 = arith.constant 0 : index
    %c0_14 = arith.constant 0 : index
    %c0_15 = arith.constant 0 : index
    %11 = vector.load %arg7[%c0_13, %c0_14, %c0_15] : memref<2x1x16xf32, #tpu.memory_space<vmem>>, vector<2x1x16xf32>
    %c0_16 = arith.constant 0 : index
    %c0_17 = arith.constant 0 : index
    %c0_18 = arith.constant 0 : index
    %12 = vector.load %arg8[%c0_16, %c0_17, %c0_18] : memref<2x32x16xf32, #tpu.memory_space<vmem>>, vector<2x32x16xf32>
    %c0_19 = arith.constant 0 : index
    %c0_20 = arith.constant 0 : index
    %c0_21 = arith.constant 0 : index
    %13 = vector.load %arg9[%c0_19, %c0_20, %c0_21] : memref<2x1x16xf32, #tpu.memory_space<vmem>>, vector<2x1x16xf32>
    %c0_22 = arith.constant 0 : index
    %c0_23 = arith.constant 0 : index
    %c0_24 = arith.constant 0 : index
    %14 = vector.load %arg10[%c0_22, %c0_23, %c0_24] : memref<2x16x32xf32, #tpu.memory_space<vmem>>, vector<2x16x32xf32>
    %c0_25 = arith.constant 0 : index
    %c0_26 = arith.constant 0 : index
    %15 = vector.load %arg11[%c0_25, %c0_26] : memref<1x32xf32, #tpu.memory_space<vmem>>, vector<1x32xf32>
    %16 = vector.shape_cast %7 : vector<8x32xf32> to vector<1x8x32xf32>
    %17 = vector.shape_cast %16 : vector<1x8x32xf32> to vector<1x8x32xf32>
    %18 = vector.broadcast %17 : vector<1x8x32xf32> to vector<2x8x32xf32>
    %19 = vector.shape_cast %7 : vector<8x32xf32> to vector<1x8x32xf32>
    %20 = vector.shape_cast %19 : vector<1x8x32xf32> to vector<1x8x32xf32>
    %21 = vector.broadcast %20 : vector<1x8x32xf32> to vector<2x8x32xf32>
    "tpu.trace_start"() <{level = 10 : i32, message = "htc,hcd->htd"}> : () -> ()
    %cst = arith.constant dense<0.000000e+00> : vector<2x8x16xf32>
    %22 = tpu.matmul %18, %8, %cst {dimension_numbers = #tpu.dot_dimension_numbers<[2], [1], [1], [2], [0, 0, 0, 1, 1, 2], [0], [0]>} : vector<2x8x32xf32>, vector<2x32x16xf32>, vector<2x8x16xf32> -> vector<2x8x16xf32>
    "tpu.trace_stop"() : () -> ()
    %23 = vector.broadcast %9 : vector<2x1x16xf32> to vector<2x8x16xf32>
    %24 = arith.addf %22, %23 : vector<2x8x16xf32>
    "tpu.trace_start"() <{level = 10 : i32, message = "htc,hcd->htd"}> : () -> ()
    %cst_27 = arith.constant dense<0.000000e+00> : vector<2x8x16xf32>
    %25 = tpu.matmul %21, %10, %cst_27 {dimension_numbers = #tpu.dot_dimension_numbers<[2], [1], [1], [2], [0, 0, 0, 1, 1, 2], [0], [0]>} : vector<2x8x32xf32>, vector<2x32x16xf32>, vector<2x8x16xf32> -> vector<2x8x16xf32>
    "tpu.trace_stop"() : () -> ()
    %26 = vector.broadcast %11 : vector<2x1x16xf32> to vector<2x8x16xf32>
    %27 = arith.addf %25, %26 : vector<2x8x16xf32>
    "tpu.trace_start"() <{level = 10 : i32, message = "htc,hcd->htd"}> : () -> ()
    %cst_28 = arith.constant dense<0.000000e+00> : vector<2x8x16xf32>
    %28 = tpu.matmul %21, %12, %cst_28 {dimension_numbers = #tpu.dot_dimension_numbers<[2], [1], [1], [2], [0, 0, 0, 1, 1, 2], [0], [0]>} : vector<2x8x32xf32>, vector<2x32x16xf32>, vector<2x8x16xf32> -> vector<2x8x16xf32>
    "tpu.trace_stop"() : () -> ()
    %29 = vector.broadcast %13 : vector<2x1x16xf32> to vector<2x8x16xf32>
    %30 = arith.addf %28, %29 : vector<2x8x16xf32>
    "tpu.trace_start"() <{level = 10 : i32, message = "hqd,hkd->hqk"}> : () -> ()
    %cst_29 = arith.constant dense<0.000000e+00> : vector<2x8x8xf32>
    %31 = tpu.matmul %24, %27, %cst_29 {dimension_numbers = #tpu.dot_dimension_numbers<[2], [2], [1], [1], [0, 0, 0, 1, 1, 1], [0], [0]>} : vector<2x8x16xf32>, vector<2x8x16xf32>, vector<2x8x8xf32> -> vector<2x8x8xf32>
    "tpu.trace_stop"() : () -> ()
    %cst_30 = arith.constant 2.500000e-01 : f32
    %32 = vector.broadcast %cst_30 : f32 to vector<2x8x8xf32>
    %33 = arith.mulf %31, %32 : vector<2x8x8xf32>
    %cst_31 = arith.constant dense<0xFF800000> : vector<2x8xf32>
    %34 = vector.multi_reduction <maximumf>, %33, %cst_31 [2] : vector<2x8x8xf32> to vector<2x8xf32>
    %35 = vector.shape_cast %34 : vector<2x8xf32> to vector<2x8x1xf32>
    %36 = vector.broadcast %35 : vector<2x8x1xf32> to vector<2x8x8xf32>
    %37 = arith.subf %33, %36 : vector<2x8x8xf32>
    %38 = math.exp %37 : vector<2x8x8xf32>
    %cst_32 = arith.constant dense<0.000000e+00> : vector<2x8xf32>
    %39 = vector.multi_reduction <add>, %38, %cst_32 [2] : vector<2x8x8xf32> to vector<2x8xf32>
    %40 = vector.shape_cast %39 : vector<2x8xf32> to vector<2x8x1xf32>
    %41 = tpu.reciprocal %40 {approx = true} : vector<2x8x1xf32> -> vector<2x8x1xf32>
    %42 = vector.broadcast %41 : vector<2x8x1xf32> to vector<2x8x8xf32>
    %43 = arith.mulf %38, %42 : vector<2x8x8xf32>
    "tpu.trace_start"() <{level = 10 : i32, message = "hqk,hkd->hqd"}> : () -> ()
    %cst_33 = arith.constant dense<0.000000e+00> : vector<2x8x16xf32>
    %44 = tpu.matmul %43, %30, %cst_33 {dimension_numbers = #tpu.dot_dimension_numbers<[2], [1], [1], [2], [0, 0, 0, 1, 1, 2], [0], [0]>} : vector<2x8x8xf32>, vector<2x8x16xf32>, vector<2x8x16xf32> -> vector<2x8x16xf32>
    "tpu.trace_stop"() : () -> ()
    "tpu.trace_start"() <{level = 10 : i32, message = "hqd,hdc->hqc"}> : () -> ()
    %cst_34 = arith.constant dense<0.000000e+00> : vector<2x8x32xf32>
    %45 = tpu.matmul %44, %14, %cst_34 {dimension_numbers = #tpu.dot_dimension_numbers<[2], [1], [1], [2], [0, 0, 0, 1, 1, 2], [0], [0]>} : vector<2x8x16xf32>, vector<2x16x32xf32>, vector<2x8x32xf32> -> vector<2x8x32xf32>
    "tpu.trace_stop"() : () -> ()
    %cst_35 = arith.constant dense<0.000000e+00> : vector<8x32xf32>
    %46 = vector.multi_reduction <add>, %45, %cst_35 [0] : vector<2x8x32xf32> to vector<8x32xf32>
    %47 = vector.broadcast %15 : vector<1x32xf32> to vector<8x32xf32>
    %48 = arith.addf %46, %47 : vector<8x32xf32>
    %49 = arith.addf %7, %48 : vector<8x32xf32>
    %c0_36 = arith.constant 0 : index
    %c0_37 = arith.constant 0 : index
    %50 = vector.load %arg12[%c0_36, %c0_37] : memref<1x32xf32, #tpu.memory_space<vmem>>, vector<1x32xf32>
    %c0_38 = arith.constant 0 : index
    %c0_39 = arith.constant 0 : index
    %51 = vector.load %arg13[%c0_38, %c0_39] : memref<1x32xf32, #tpu.memory_space<vmem>>, vector<1x32xf32>
    %cst_40 = arith.constant dense<0.000000e+00> : vector<8xf32>
    %52 = vector.multi_reduction <add>, %49, %cst_40 [1] : vector<8x32xf32> to vector<8xf32>
    %53 = vector.shape_cast %52 : vector<8xf32> to vector<8x1xf32>
    %cst_41 = arith.constant 3.200000e+01 : f32
    %54 = vector.broadcast %cst_41 : f32 to vector<8x1xf32>
    %55 = arith.divf %53, %54 : vector<8x1xf32>
    %56 = vector.broadcast %55 : vector<8x1xf32> to vector<8x32xf32>
    %57 = arith.subf %49, %56 : vector<8x32xf32>
    %58 = arith.mulf %57, %57 : vector<8x32xf32>
    %cst_42 = arith.constant dense<0.000000e+00> : vector<8xf32>
    %59 = vector.multi_reduction <add>, %58, %cst_42 [1] : vector<8x32xf32> to vector<8xf32>
    %60 = vector.shape_cast %59 : vector<8xf32> to vector<8x1xf32>
    %cst_43 = arith.constant 3.200000e+01 : f32
    %61 = vector.broadcast %cst_43 : f32 to vector<8x1xf32>
    %62 = arith.divf %60, %61 : vector<8x1xf32>
    %63 = vector.broadcast %55 : vector<8x1xf32> to vector<8x32xf32>
    %64 = arith.subf %49, %63 : vector<8x32xf32>
    %cst_44 = arith.constant 9.99999974E-6 : f32
    %65 = vector.broadcast %cst_44 : f32 to vector<8x1xf32>
    %66 = arith.addf %62, %65 : vector<8x1xf32>
    %67 = math.rsqrt %66 : vector<8x1xf32>
    %68 = vector.broadcast %67 : vector<8x1xf32> to vector<8x32xf32>
    %69 = arith.mulf %64, %68 : vector<8x32xf32>
    %70 = vector.broadcast %50 : vector<1x32xf32> to vector<8x32xf32>
    %71 = arith.mulf %69, %70 : vector<8x32xf32>
    %72 = vector.broadcast %51 : vector<1x32xf32> to vector<8x32xf32>
    %73 = arith.addf %71, %72 : vector<8x32xf32>
    %c0_45 = arith.constant 0 : index
    %c0_46 = arith.constant 0 : index
    %74 = vector.load %arg14[%c0_45, %c0_46] : memref<32x64xf32, #tpu.memory_space<vmem>>, vector<32x64xf32>
    %c0_47 = arith.constant 0 : index
    %c0_48 = arith.constant 0 : index
    %75 = vector.load %arg15[%c0_47, %c0_48] : memref<1x64xf32, #tpu.memory_space<vmem>>, vector<1x64xf32>
    %c0_49 = arith.constant 0 : index
    %c0_50 = arith.constant 0 : index
    %76 = vector.load %arg16[%c0_49, %c0_50] : memref<64x32xf32, #tpu.memory_space<vmem>>, vector<64x32xf32>
    %c0_51 = arith.constant 0 : index
    %c0_52 = arith.constant 0 : index
    %77 = vector.load %arg17[%c0_51, %c0_52] : memref<1x32xf32, #tpu.memory_space<vmem>>, vector<1x32xf32>
    %cst_53 = arith.constant dense<0.000000e+00> : vector<8x64xf32>
    %78 = tpu.matmul %73, %74, %cst_53 {dimension_numbers = #tpu.dot_dimension_numbers<[1], [0], [0], [1], [0, 0, 1, 1], [], []>} : vector<8x32xf32>, vector<32x64xf32>, vector<8x64xf32> -> vector<8x64xf32>
    %79 = vector.broadcast %75 : vector<1x64xf32> to vector<8x64xf32>
    %80 = arith.addf %78, %79 : vector<8x64xf32>
    %cst_54 = arith.constant 0.000000e+00 : f32
    %81 = vector.broadcast %cst_54 : f32 to vector<8x64xf32>
    %82 = arith.maximumf %80, %81 : vector<8x64xf32>
    %cst_55 = arith.constant dense<0.000000e+00> : vector<8x32xf32>
    %83 = tpu.matmul %82, %76, %cst_55 {dimension_numbers = #tpu.dot_dimension_numbers<[1], [0], [0], [1], [0, 0, 1, 1], [], []>} : vector<8x64xf32>, vector<64x32xf32>, vector<8x32xf32> -> vector<8x32xf32>
    %84 = vector.broadcast %77 : vector<1x32xf32> to vector<8x32xf32>
    %85 = arith.addf %83, %84 : vector<8x32xf32>
    %86 = arith.addf %73, %85 : vector<8x32xf32>
    %c0_56 = arith.constant 0 : index
    %c0_57 = arith.constant 0 : index
    %87 = vector.load %arg18[%c0_56, %c0_57] : memref<1x32xf32, #tpu.memory_space<vmem>>, vector<1x32xf32>
    %c0_58 = arith.constant 0 : index
    %c0_59 = arith.constant 0 : index
    %88 = vector.load %arg19[%c0_58, %c0_59] : memref<1x32xf32, #tpu.memory_space<vmem>>, vector<1x32xf32>
    %cst_60 = arith.constant dense<0.000000e+00> : vector<8xf32>
    %89 = vector.multi_reduction <add>, %86, %cst_60 [1] : vector<8x32xf32> to vector<8xf32>
    %90 = vector.shape_cast %89 : vector<8xf32> to vector<8x1xf32>
    %cst_61 = arith.constant 3.200000e+01 : f32
    %91 = vector.broadcast %cst_61 : f32 to vector<8x1xf32>
    %92 = arith.divf %90, %91 : vector<8x1xf32>
    %93 = vector.broadcast %92 : vector<8x1xf32> to vector<8x32xf32>
    %94 = arith.subf %86, %93 : vector<8x32xf32>
    %95 = arith.mulf %94, %94 : vector<8x32xf32>
    %cst_62 = arith.constant dense<0.000000e+00> : vector<8xf32>
    %96 = vector.multi_reduction <add>, %95, %cst_62 [1] : vector<8x32xf32> to vector<8xf32>
    %97 = vector.shape_cast %96 : vector<8xf32> to vector<8x1xf32>
    %cst_63 = arith.constant 3.200000e+01 : f32
    %98 = vector.broadcast %cst_63 : f32 to vector<8x1xf32>
    %99 = arith.divf %97, %98 : vector<8x1xf32>
    %100 = vector.broadcast %92 : vector<8x1xf32> to vector<8x32xf32>
    %101 = arith.subf %86, %100 : vector<8x32xf32>
    %cst_64 = arith.constant 9.99999974E-6 : f32
    %102 = vector.broadcast %cst_64 : f32 to vector<8x1xf32>
    %103 = arith.addf %99, %102 : vector<8x1xf32>
    %104 = math.rsqrt %103 : vector<8x1xf32>
    %105 = vector.broadcast %104 : vector<8x1xf32> to vector<8x32xf32>
    %106 = arith.mulf %101, %105 : vector<8x32xf32>
    %107 = vector.broadcast %87 : vector<1x32xf32> to vector<8x32xf32>
    %108 = arith.mulf %106, %107 : vector<8x32xf32>
    %109 = vector.broadcast %88 : vector<1x32xf32> to vector<8x32xf32>
    %110 = arith.addf %108, %109 : vector<8x32xf32>
    %c0_65 = arith.constant 0 : index
    %c0_66 = arith.constant 0 : index
    %c0_67 = arith.constant 0 : index
    %111 = vector.load %arg2[%c0_65, %c0_66, %c0_67] : memref<1x8x32xf32, #tpu.memory_space<vmem>>, vector<1x8x32xf32>
    %112 = vector.shape_cast %111 : vector<1x8x32xf32> to vector<8x32xf32>
    %113 = arith.addf %112, %0 : vector<8x32xf32>
    %c0_68 = arith.constant 0 : index
    %c0_69 = arith.constant 0 : index
    %c0_70 = arith.constant 0 : index
    %114 = vector.load %arg20[%c0_68, %c0_69, %c0_70] : memref<2x32x16xf32, #tpu.memory_space<vmem>>, vector<2x32x16xf32>
    %c0_71 = arith.constant 0 : index
    %c0_72 = arith.constant 0 : index
    %c0_73 = arith.constant 0 : index
    %115 = vector.load %arg21[%c0_71, %c0_72, %c0_73] : memref<2x1x16xf32, #tpu.memory_space<vmem>>, vector<2x1x16xf32>
    %c0_74 = arith.constant 0 : index
    %c0_75 = arith.constant 0 : index
    %c0_76 = arith.constant 0 : index
    %116 = vector.load %arg22[%c0_74, %c0_75, %c0_76] : memref<2x32x16xf32, #tpu.memory_space<vmem>>, vector<2x32x16xf32>
    %c0_77 = arith.constant 0 : index
    %c0_78 = arith.constant 0 : index
    %c0_79 = arith.constant 0 : index
    %117 = vector.load %arg23[%c0_77, %c0_78, %c0_79] : memref<2x1x16xf32, #tpu.memory_space<vmem>>, vector<2x1x16xf32>
    %c0_80 = arith.constant 0 : index
    %c0_81 = arith.constant 0 : index
    %c0_82 = arith.constant 0 : index
    %118 = vector.load %arg24[%c0_80, %c0_81, %c0_82] : memref<2x32x16xf32, #tpu.memory_space<vmem>>, vector<2x32x16xf32>
    %c0_83 = arith.constant 0 : index
    %c0_84 = arith.constant 0 : index
    %c0_85 = arith.constant 0 : index
    %119 = vector.load %arg25[%c0_83, %c0_84, %c0_85] : memref<2x1x16xf32, #tpu.memory_space<vmem>>, vector<2x1x16xf32>
    %c0_86 = arith.constant 0 : index
    %c0_87 = arith.constant 0 : index
    %c0_88 = arith.constant 0 : index
    %120 = vector.load %arg26[%c0_86, %c0_87, %c0_88] : memref<2x16x32xf32, #tpu.memory_space<vmem>>, vector<2x16x32xf32>
    %c0_89 = arith.constant 0 : index
    %c0_90 = arith.constant 0 : index
    %121 = vector.load %arg27[%c0_89, %c0_90] : memref<1x32xf32, #tpu.memory_space<vmem>>, vector<1x32xf32>
    %122 = vector.shape_cast %113 : vector<8x32xf32> to vector<1x8x32xf32>
    %123 = vector.shape_cast %122 : vector<1x8x32xf32> to vector<1x8x32xf32>
    %124 = vector.broadcast %123 : vector<1x8x32xf32> to vector<2x8x32xf32>
    %125 = vector.shape_cast %113 : vector<8x32xf32> to vector<1x8x32xf32>
    %126 = vector.shape_cast %125 : vector<1x8x32xf32> to vector<1x8x32xf32>
    %127 = vector.broadcast %126 : vector<1x8x32xf32> to vector<2x8x32xf32>
    "tpu.trace_start"() <{level = 10 : i32, message = "htc,hcd->htd"}> : () -> ()
    %cst_91 = arith.constant dense<0.000000e+00> : vector<2x8x16xf32>
    %128 = tpu.matmul %124, %114, %cst_91 {dimension_numbers = #tpu.dot_dimension_numbers<[2], [1], [1], [2], [0, 0, 0, 1, 1, 2], [0], [0]>} : vector<2x8x32xf32>, vector<2x32x16xf32>, vector<2x8x16xf32> -> vector<2x8x16xf32>
    "tpu.trace_stop"() : () -> ()
    %129 = vector.broadcast %115 : vector<2x1x16xf32> to vector<2x8x16xf32>
    %130 = arith.addf %128, %129 : vector<2x8x16xf32>
    "tpu.trace_start"() <{level = 10 : i32, message = "htc,hcd->htd"}> : () -> ()
    %cst_92 = arith.constant dense<0.000000e+00> : vector<2x8x16xf32>
    %131 = tpu.matmul %127, %116, %cst_92 {dimension_numbers = #tpu.dot_dimension_numbers<[2], [1], [1], [2], [0, 0, 0, 1, 1, 2], [0], [0]>} : vector<2x8x32xf32>, vector<2x32x16xf32>, vector<2x8x16xf32> -> vector<2x8x16xf32>
    "tpu.trace_stop"() : () -> ()
    %132 = vector.broadcast %117 : vector<2x1x16xf32> to vector<2x8x16xf32>
    %133 = arith.addf %131, %132 : vector<2x8x16xf32>
    "tpu.trace_start"() <{level = 10 : i32, message = "htc,hcd->htd"}> : () -> ()
    %cst_93 = arith.constant dense<0.000000e+00> : vector<2x8x16xf32>
    %134 = tpu.matmul %127, %118, %cst_93 {dimension_numbers = #tpu.dot_dimension_numbers<[2], [1], [1], [2], [0, 0, 0, 1, 1, 2], [0], [0]>} : vector<2x8x32xf32>, vector<2x32x16xf32>, vector<2x8x16xf32> -> vector<2x8x16xf32>
    "tpu.trace_stop"() : () -> ()
    %135 = vector.broadcast %119 : vector<2x1x16xf32> to vector<2x8x16xf32>
    %136 = arith.addf %134, %135 : vector<2x8x16xf32>
    "tpu.trace_start"() <{level = 10 : i32, message = "hqd,hkd->hqk"}> : () -> ()
    %cst_94 = arith.constant dense<0.000000e+00> : vector<2x8x8xf32>
    %137 = tpu.matmul %130, %133, %cst_94 {dimension_numbers = #tpu.dot_dimension_numbers<[2], [2], [1], [1], [0, 0, 0, 1, 1, 1], [0], [0]>} : vector<2x8x16xf32>, vector<2x8x16xf32>, vector<2x8x8xf32> -> vector<2x8x8xf32>
    "tpu.trace_stop"() : () -> ()
    %cst_95 = arith.constant 2.500000e-01 : f32
    %138 = vector.broadcast %cst_95 : f32 to vector<2x8x8xf32>
    %139 = arith.mulf %137, %138 : vector<2x8x8xf32>
    %cst_96 = arith.constant -1.000000e+30 : f32
    %140 = vector.shape_cast %4 : vector<1x8x8xi1> to vector<1x8x8xi1>
    %141 = vector.broadcast %140 : vector<1x8x8xi1> to vector<2x8x8xi1>
    %142 = vector.broadcast %cst_96 : f32 to vector<2x8x8xf32>
    %143 = arith.select %141, %139, %142 : vector<2x8x8xi1>, vector<2x8x8xf32>
    %cst_97 = arith.constant dense<0xFF800000> : vector<2x8xf32>
    %144 = vector.multi_reduction <maximumf>, %143, %cst_97 [2] : vector<2x8x8xf32> to vector<2x8xf32>
    %145 = vector.shape_cast %144 : vector<2x8xf32> to vector<2x8x1xf32>
    %146 = vector.broadcast %145 : vector<2x8x1xf32> to vector<2x8x8xf32>
    %147 = arith.subf %143, %146 : vector<2x8x8xf32>
    %148 = math.exp %147 : vector<2x8x8xf32>
    %cst_98 = arith.constant dense<0.000000e+00> : vector<2x8xf32>
    %149 = vector.multi_reduction <add>, %148, %cst_98 [2] : vector<2x8x8xf32> to vector<2x8xf32>
    %150 = vector.shape_cast %149 : vector<2x8xf32> to vector<2x8x1xf32>
    %151 = tpu.reciprocal %150 {approx = true} : vector<2x8x1xf32> -> vector<2x8x1xf32>
    %152 = vector.broadcast %151 : vector<2x8x1xf32> to vector<2x8x8xf32>
    %153 = arith.mulf %148, %152 : vector<2x8x8xf32>
    "tpu.trace_start"() <{level = 10 : i32, message = "hqk,hkd->hqd"}> : () -> ()
    %cst_99 = arith.constant dense<0.000000e+00> : vector<2x8x16xf32>
    %154 = tpu.matmul %153, %136, %cst_99 {dimension_numbers = #tpu.dot_dimension_numbers<[2], [1], [1], [2], [0, 0, 0, 1, 1, 2], [0], [0]>} : vector<2x8x8xf32>, vector<2x8x16xf32>, vector<2x8x16xf32> -> vector<2x8x16xf32>
    "tpu.trace_stop"() : () -> ()
    "tpu.trace_start"() <{level = 10 : i32, message = "hqd,hdc->hqc"}> : () -> ()
    %cst_100 = arith.constant dense<0.000000e+00> : vector<2x8x32xf32>
    %155 = tpu.matmul %154, %120, %cst_100 {dimension_numbers = #tpu.dot_dimension_numbers<[2], [1], [1], [2], [0, 0, 0, 1, 1, 2], [0], [0]>} : vector<2x8x16xf32>, vector<2x16x32xf32>, vector<2x8x32xf32> -> vector<2x8x32xf32>
    "tpu.trace_stop"() : () -> ()
    %cst_101 = arith.constant dense<0.000000e+00> : vector<8x32xf32>
    %156 = vector.multi_reduction <add>, %155, %cst_101 [0] : vector<2x8x32xf32> to vector<8x32xf32>
    %157 = vector.broadcast %121 : vector<1x32xf32> to vector<8x32xf32>
    %158 = arith.addf %156, %157 : vector<8x32xf32>
    %159 = arith.addf %113, %158 : vector<8x32xf32>
    %c0_102 = arith.constant 0 : index
    %c0_103 = arith.constant 0 : index
    %160 = vector.load %arg28[%c0_102, %c0_103] : memref<1x32xf32, #tpu.memory_space<vmem>>, vector<1x32xf32>
    %c0_104 = arith.constant 0 : index
    %c0_105 = arith.constant 0 : index
    %161 = vector.load %arg29[%c0_104, %c0_105] : memref<1x32xf32, #tpu.memory_space<vmem>>, vector<1x32xf32>
    %cst_106 = arith.constant dense<0.000000e+00> : vector<8xf32>
    %162 = vector.multi_reduction <add>, %159, %cst_106 [1] : vector<8x32xf32> to vector<8xf32>
    %163 = vector.shape_cast %162 : vector<8xf32> to vector<8x1xf32>
    %cst_107 = arith.constant 3.200000e+01 : f32
    %164 = vector.broadcast %cst_107 : f32 to vector<8x1xf32>
    %165 = arith.divf %163, %164 : vector<8x1xf32>
    %166 = vector.broadcast %165 : vector<8x1xf32> to vector<8x32xf32>
    %167 = arith.subf %159, %166 : vector<8x32xf32>
    %168 = arith.mulf %167, %167 : vector<8x32xf32>
    %cst_108 = arith.constant dense<0.000000e+00> : vector<8xf32>
    %169 = vector.multi_reduction <add>, %168, %cst_108 [1] : vector<8x32xf32> to vector<8xf32>
    %170 = vector.shape_cast %169 : vector<8xf32> to vector<8x1xf32>
    %cst_109 = arith.constant 3.200000e+01 : f32
    %171 = vector.broadcast %cst_109 : f32 to vector<8x1xf32>
    %172 = arith.divf %170, %171 : vector<8x1xf32>
    %173 = vector.broadcast %165 : vector<8x1xf32> to vector<8x32xf32>
    %174 = arith.subf %159, %173 : vector<8x32xf32>
    %cst_110 = arith.constant 9.99999974E-6 : f32
    %175 = vector.broadcast %cst_110 : f32 to vector<8x1xf32>
    %176 = arith.addf %172, %175 : vector<8x1xf32>
    %177 = math.rsqrt %176 : vector<8x1xf32>
    %178 = vector.broadcast %177 : vector<8x1xf32> to vector<8x32xf32>
    %179 = arith.mulf %174, %178 : vector<8x32xf32>
    %180 = vector.broadcast %160 : vector<1x32xf32> to vector<8x32xf32>
    %181 = arith.mulf %179, %180 : vector<8x32xf32>
    %182 = vector.broadcast %161 : vector<1x32xf32> to vector<8x32xf32>
    %183 = arith.addf %181, %182 : vector<8x32xf32>
    %c0_111 = arith.constant 0 : index
    %c0_112 = arith.constant 0 : index
    %c0_113 = arith.constant 0 : index
    %184 = vector.load %arg30[%c0_111, %c0_112, %c0_113] : memref<2x32x16xf32, #tpu.memory_space<vmem>>, vector<2x32x16xf32>
    %c0_114 = arith.constant 0 : index
    %c0_115 = arith.constant 0 : index
    %c0_116 = arith.constant 0 : index
    %185 = vector.load %arg31[%c0_114, %c0_115, %c0_116] : memref<2x1x16xf32, #tpu.memory_space<vmem>>, vector<2x1x16xf32>
    %c0_117 = arith.constant 0 : index
    %c0_118 = arith.constant 0 : index
    %c0_119 = arith.constant 0 : index
    %186 = vector.load %arg32[%c0_117, %c0_118, %c0_119] : memref<2x32x16xf32, #tpu.memory_space<vmem>>, vector<2x32x16xf32>
    %c0_120 = arith.constant 0 : index
    %c0_121 = arith.constant 0 : index
    %c0_122 = arith.constant 0 : index
    %187 = vector.load %arg33[%c0_120, %c0_121, %c0_122] : memref<2x1x16xf32, #tpu.memory_space<vmem>>, vector<2x1x16xf32>
    %c0_123 = arith.constant 0 : index
    %c0_124 = arith.constant 0 : index
    %c0_125 = arith.constant 0 : index
    %188 = vector.load %arg34[%c0_123, %c0_124, %c0_125] : memref<2x32x16xf32, #tpu.memory_space<vmem>>, vector<2x32x16xf32>
    %c0_126 = arith.constant 0 : index
    %c0_127 = arith.constant 0 : index
    %c0_128 = arith.constant 0 : index
    %189 = vector.load %arg35[%c0_126, %c0_127, %c0_128] : memref<2x1x16xf32, #tpu.memory_space<vmem>>, vector<2x1x16xf32>
    %c0_129 = arith.constant 0 : index
    %c0_130 = arith.constant 0 : index
    %c0_131 = arith.constant 0 : index
    %190 = vector.load %arg36[%c0_129, %c0_130, %c0_131] : memref<2x16x32xf32, #tpu.memory_space<vmem>>, vector<2x16x32xf32>
    %c0_132 = arith.constant 0 : index
    %c0_133 = arith.constant 0 : index
    %191 = vector.load %arg37[%c0_132, %c0_133] : memref<1x32xf32, #tpu.memory_space<vmem>>, vector<1x32xf32>
    %192 = vector.shape_cast %183 : vector<8x32xf32> to vector<1x8x32xf32>
    %193 = vector.shape_cast %192 : vector<1x8x32xf32> to vector<1x8x32xf32>
    %194 = vector.broadcast %193 : vector<1x8x32xf32> to vector<2x8x32xf32>
    %195 = vector.shape_cast %110 : vector<8x32xf32> to vector<1x8x32xf32>
    %196 = vector.shape_cast %195 : vector<1x8x32xf32> to vector<1x8x32xf32>
    %197 = vector.broadcast %196 : vector<1x8x32xf32> to vector<2x8x32xf32>
    "tpu.trace_start"() <{level = 10 : i32, message = "htc,hcd->htd"}> : () -> ()
    %cst_134 = arith.constant dense<0.000000e+00> : vector<2x8x16xf32>
    %198 = tpu.matmul %194, %184, %cst_134 {dimension_numbers = #tpu.dot_dimension_numbers<[2], [1], [1], [2], [0, 0, 0, 1, 1, 2], [0], [0]>} : vector<2x8x32xf32>, vector<2x32x16xf32>, vector<2x8x16xf32> -> vector<2x8x16xf32>
    "tpu.trace_stop"() : () -> ()
    %199 = vector.broadcast %185 : vector<2x1x16xf32> to vector<2x8x16xf32>
    %200 = arith.addf %198, %199 : vector<2x8x16xf32>
    "tpu.trace_start"() <{level = 10 : i32, message = "htc,hcd->htd"}> : () -> ()
    %cst_135 = arith.constant dense<0.000000e+00> : vector<2x8x16xf32>
    %201 = tpu.matmul %197, %186, %cst_135 {dimension_numbers = #tpu.dot_dimension_numbers<[2], [1], [1], [2], [0, 0, 0, 1, 1, 2], [0], [0]>} : vector<2x8x32xf32>, vector<2x32x16xf32>, vector<2x8x16xf32> -> vector<2x8x16xf32>
    "tpu.trace_stop"() : () -> ()
    %202 = vector.broadcast %187 : vector<2x1x16xf32> to vector<2x8x16xf32>
    %203 = arith.addf %201, %202 : vector<2x8x16xf32>
    "tpu.trace_start"() <{level = 10 : i32, message = "htc,hcd->htd"}> : () -> ()
    %cst_136 = arith.constant dense<0.000000e+00> : vector<2x8x16xf32>
    %204 = tpu.matmul %197, %188, %cst_136 {dimension_numbers = #tpu.dot_dimension_numbers<[2], [1], [1], [2], [0, 0, 0, 1, 1, 2], [0], [0]>} : vector<2x8x32xf32>, vector<2x32x16xf32>, vector<2x8x16xf32> -> vector<2x8x16xf32>
    "tpu.trace_stop"() : () -> ()
    %205 = vector.broadcast %189 : vector<2x1x16xf32> to vector<2x8x16xf32>
    %206 = arith.addf %204, %205 : vector<2x8x16xf32>
    "tpu.trace_start"() <{level = 10 : i32, message = "hqd,hkd->hqk"}> : () -> ()
    %cst_137 = arith.constant dense<0.000000e+00> : vector<2x8x8xf32>
    %207 = tpu.matmul %200, %203, %cst_137 {dimension_numbers = #tpu.dot_dimension_numbers<[2], [2], [1], [1], [0, 0, 0, 1, 1, 1], [0], [0]>} : vector<2x8x16xf32>, vector<2x8x16xf32>, vector<2x8x8xf32> -> vector<2x8x8xf32>
    "tpu.trace_stop"() : () -> ()
    %cst_138 = arith.constant 2.500000e-01 : f32
    %208 = vector.broadcast %cst_138 : f32 to vector<2x8x8xf32>
    %209 = arith.mulf %207, %208 : vector<2x8x8xf32>
    %cst_139 = arith.constant dense<0xFF800000> : vector<2x8xf32>
    %210 = vector.multi_reduction <maximumf>, %209, %cst_139 [2] : vector<2x8x8xf32> to vector<2x8xf32>
    %211 = vector.shape_cast %210 : vector<2x8xf32> to vector<2x8x1xf32>
    %212 = vector.broadcast %211 : vector<2x8x1xf32> to vector<2x8x8xf32>
    %213 = arith.subf %209, %212 : vector<2x8x8xf32>
    %214 = math.exp %213 : vector<2x8x8xf32>
    %cst_140 = arith.constant dense<0.000000e+00> : vector<2x8xf32>
    %215 = vector.multi_reduction <add>, %214, %cst_140 [2] : vector<2x8x8xf32> to vector<2x8xf32>
    %216 = vector.shape_cast %215 : vector<2x8xf32> to vector<2x8x1xf32>
    %217 = tpu.reciprocal %216 {approx = true} : vector<2x8x1xf32> -> vector<2x8x1xf32>
    %218 = vector.broadcast %217 : vector<2x8x1xf32> to vector<2x8x8xf32>
    %219 = arith.mulf %214, %218 : vector<2x8x8xf32>
    "tpu.trace_start"() <{level = 10 : i32, message = "hqk,hkd->hqd"}> : () -> ()
    %cst_141 = arith.constant dense<0.000000e+00> : vector<2x8x16xf32>
    %220 = tpu.matmul %219, %206, %cst_141 {dimension_numbers = #tpu.dot_dimension_numbers<[2], [1], [1], [2], [0, 0, 0, 1, 1, 2], [0], [0]>} : vector<2x8x8xf32>, vector<2x8x16xf32>, vector<2x8x16xf32> -> vector<2x8x16xf32>
    "tpu.trace_stop"() : () -> ()
    "tpu.trace_start"() <{level = 10 : i32, message = "hqd,hdc->hqc"}> : () -> ()
    %cst_142 = arith.constant dense<0.000000e+00> : vector<2x8x32xf32>
    %221 = tpu.matmul %220, %190, %cst_142 {dimension_numbers = #tpu.dot_dimension_numbers<[2], [1], [1], [2], [0, 0, 0, 1, 1, 2], [0], [0]>} : vector<2x8x16xf32>, vector<2x16x32xf32>, vector<2x8x32xf32> -> vector<2x8x32xf32>
    "tpu.trace_stop"() : () -> ()
    %cst_143 = arith.constant dense<0.000000e+00> : vector<8x32xf32>
    %222 = vector.multi_reduction <add>, %221, %cst_143 [0] : vector<2x8x32xf32> to vector<8x32xf32>
    %223 = vector.broadcast %191 : vector<1x32xf32> to vector<8x32xf32>
    %224 = arith.addf %222, %223 : vector<8x32xf32>
    %225 = arith.addf %183, %224 : vector<8x32xf32>
    %c0_144 = arith.constant 0 : index
    %c0_145 = arith.constant 0 : index
    %226 = vector.load %arg38[%c0_144, %c0_145] : memref<1x32xf32, #tpu.memory_space<vmem>>, vector<1x32xf32>
    %c0_146 = arith.constant 0 : index
    %c0_147 = arith.constant 0 : index
    %227 = vector.load %arg39[%c0_146, %c0_147] : memref<1x32xf32, #tpu.memory_space<vmem>>, vector<1x32xf32>
    %cst_148 = arith.constant dense<0.000000e+00> : vector<8xf32>
    %228 = vector.multi_reduction <add>, %225, %cst_148 [1] : vector<8x32xf32> to vector<8xf32>
    %229 = vector.shape_cast %228 : vector<8xf32> to vector<8x1xf32>
    %cst_149 = arith.constant 3.200000e+01 : f32
    %230 = vector.broadcast %cst_149 : f32 to vector<8x1xf32>
    %231 = arith.divf %229, %230 : vector<8x1xf32>
    %232 = vector.broadcast %231 : vector<8x1xf32> to vector<8x32xf32>
    %233 = arith.subf %225, %232 : vector<8x32xf32>
    %234 = arith.mulf %233, %233 : vector<8x32xf32>
    %cst_150 = arith.constant dense<0.000000e+00> : vector<8xf32>
    %235 = vector.multi_reduction <add>, %234, %cst_150 [1] : vector<8x32xf32> to vector<8xf32>
    %236 = vector.shape_cast %235 : vector<8xf32> to vector<8x1xf32>
    %cst_151 = arith.constant 3.200000e+01 : f32
    %237 = vector.broadcast %cst_151 : f32 to vector<8x1xf32>
    %238 = arith.divf %236, %237 : vector<8x1xf32>
    %239 = vector.broadcast %231 : vector<8x1xf32> to vector<8x32xf32>
    %240 = arith.subf %225, %239 : vector<8x32xf32>
    %cst_152 = arith.constant 9.99999974E-6 : f32
    %241 = vector.broadcast %cst_152 : f32 to vector<8x1xf32>
    %242 = arith.addf %238, %241 : vector<8x1xf32>
    %243 = math.rsqrt %242 : vector<8x1xf32>
    %244 = vector.broadcast %243 : vector<8x1xf32> to vector<8x32xf32>
    %245 = arith.mulf %240, %244 : vector<8x32xf32>
    %246 = vector.broadcast %226 : vector<1x32xf32> to vector<8x32xf32>
    %247 = arith.mulf %245, %246 : vector<8x32xf32>
    %248 = vector.broadcast %227 : vector<1x32xf32> to vector<8x32xf32>
    %249 = arith.addf %247, %248 : vector<8x32xf32>
    %c0_153 = arith.constant 0 : index
    %c0_154 = arith.constant 0 : index
    %250 = vector.load %arg40[%c0_153, %c0_154] : memref<32x64xf32, #tpu.memory_space<vmem>>, vector<32x64xf32>
    %c0_155 = arith.constant 0 : index
    %c0_156 = arith.constant 0 : index
    %251 = vector.load %arg41[%c0_155, %c0_156] : memref<1x64xf32, #tpu.memory_space<vmem>>, vector<1x64xf32>
    %c0_157 = arith.constant 0 : index
    %c0_158 = arith.constant 0 : index
    %252 = vector.load %arg42[%c0_157, %c0_158] : memref<64x32xf32, #tpu.memory_space<vmem>>, vector<64x32xf32>
    %c0_159 = arith.constant 0 : index
    %c0_160 = arith.constant 0 : index
    %253 = vector.load %arg43[%c0_159, %c0_160] : memref<1x32xf32, #tpu.memory_space<vmem>>, vector<1x32xf32>
    %cst_161 = arith.constant dense<0.000000e+00> : vector<8x64xf32>
    %254 = tpu.matmul %249, %250, %cst_161 {dimension_numbers = #tpu.dot_dimension_numbers<[1], [0], [0], [1], [0, 0, 1, 1], [], []>} : vector<8x32xf32>, vector<32x64xf32>, vector<8x64xf32> -> vector<8x64xf32>
    %255 = vector.broadcast %251 : vector<1x64xf32> to vector<8x64xf32>
    %256 = arith.addf %254, %255 : vector<8x64xf32>
    %cst_162 = arith.constant 0.000000e+00 : f32
    %257 = vector.broadcast %cst_162 : f32 to vector<8x64xf32>
    %258 = arith.maximumf %256, %257 : vector<8x64xf32>
    %cst_163 = arith.constant dense<0.000000e+00> : vector<8x32xf32>
    %259 = tpu.matmul %258, %252, %cst_163 {dimension_numbers = #tpu.dot_dimension_numbers<[1], [0], [0], [1], [0, 0, 1, 1], [], []>} : vector<8x64xf32>, vector<64x32xf32>, vector<8x32xf32> -> vector<8x32xf32>
    %260 = vector.broadcast %253 : vector<1x32xf32> to vector<8x32xf32>
    %261 = arith.addf %259, %260 : vector<8x32xf32>
    %262 = arith.addf %249, %261 : vector<8x32xf32>
    %c0_164 = arith.constant 0 : index
    %c0_165 = arith.constant 0 : index
    %263 = vector.load %arg44[%c0_164, %c0_165] : memref<1x32xf32, #tpu.memory_space<vmem>>, vector<1x32xf32>
    %c0_166 = arith.constant 0 : index
    %c0_167 = arith.constant 0 : index
    %264 = vector.load %arg45[%c0_166, %c0_167] : memref<1x32xf32, #tpu.memory_space<vmem>>, vector<1x32xf32>
    %cst_168 = arith.constant dense<0.000000e+00> : vector<8xf32>
    %265 = vector.multi_reduction <add>, %262, %cst_168 [1] : vector<8x32xf32> to vector<8xf32>
    %266 = vector.shape_cast %265 : vector<8xf32> to vector<8x1xf32>
    %cst_169 = arith.constant 3.200000e+01 : f32
    %267 = vector.broadcast %cst_169 : f32 to vector<8x1xf32>
    %268 = arith.divf %266, %267 : vector<8x1xf32>
    %269 = vector.broadcast %268 : vector<8x1xf32> to vector<8x32xf32>
    %270 = arith.subf %262, %269 : vector<8x32xf32>
    %271 = arith.mulf %270, %270 : vector<8x32xf32>
    %cst_170 = arith.constant dense<0.000000e+00> : vector<8xf32>
    %272 = vector.multi_reduction <add>, %271, %cst_170 [1] : vector<8x32xf32> to vector<8xf32>
    %273 = vector.shape_cast %272 : vector<8xf32> to vector<8x1xf32>
    %cst_171 = arith.constant 3.200000e+01 : f32
    %274 = vector.broadcast %cst_171 : f32 to vector<8x1xf32>
    %275 = arith.divf %273, %274 : vector<8x1xf32>
    %276 = vector.broadcast %268 : vector<8x1xf32> to vector<8x32xf32>
    %277 = arith.subf %262, %276 : vector<8x32xf32>
    %cst_172 = arith.constant 9.99999974E-6 : f32
    %278 = vector.broadcast %cst_172 : f32 to vector<8x1xf32>
    %279 = arith.addf %275, %278 : vector<8x1xf32>
    %280 = math.rsqrt %279 : vector<8x1xf32>
    %281 = vector.broadcast %280 : vector<8x1xf32> to vector<8x32xf32>
    %282 = arith.mulf %277, %281 : vector<8x32xf32>
    %283 = vector.broadcast %263 : vector<1x32xf32> to vector<8x32xf32>
    %284 = arith.mulf %282, %283 : vector<8x32xf32>
    %285 = vector.broadcast %264 : vector<1x32xf32> to vector<8x32xf32>
    %286 = arith.addf %284, %285 : vector<8x32xf32>
    %c0_173 = arith.constant 0 : index
    %c0_174 = arith.constant 0 : index
    %287 = vector.load %arg46[%c0_173, %c0_174] : memref<32x32xf32, #tpu.memory_space<vmem>>, vector<32x32xf32>
    %cst_175 = arith.constant dense<0.000000e+00> : vector<8x32xf32>
    %288 = tpu.matmul %286, %287, %cst_175 {dimension_numbers = #tpu.dot_dimension_numbers<[1], [0], [0], [1], [0, 0, 1, 1], [], []>} : vector<8x32xf32>, vector<32x32xf32>, vector<8x32xf32> -> vector<8x32xf32>
    %c0_176 = arith.constant 0 : index
    %c0_177 = arith.constant 0 : index
    %289 = vector.load %arg47[%c0_176, %c0_177] : memref<1x32xf32, #tpu.memory_space<vmem>>, vector<1x32xf32>
    %290 = vector.broadcast %289 : vector<1x32xf32> to vector<8x32xf32>
    %291 = arith.addf %288, %290 : vector<8x32xf32>
    %c0_178 = arith.constant 0 : index
    %c0_179 = arith.constant 0 : index
    %c0_180 = arith.constant 0 : index
    %292 = vector.load %arg48[%c0_178, %c0_179, %c0_180] : memref<1x8x32xf32, #tpu.memory_space<vmem>>, vector<1x8x32xf32>
    %293 = vector.shape_cast %292 : vector<1x8x32xf32> to vector<8x32xf32>
    %294 = vector.shape_cast %291 : vector<8x32xf32> to vector<1x8x32xf32>
    tpu.vector_store %arg48[%c0_178, %c0_179, %c0_180], %294 {strides = array<i32>} : memref<1x8x32xf32, #tpu.memory_space<vmem>>, vector<1x8x32xf32>,
    return
  }
  func.func @transform_0(%arg0: i32) -> (i32, i32, i32) {
    %c0_i32 = arith.constant 0 : i32
    %c0_i32_0 = arith.constant 0 : i32
    %c0_i32_1 = arith.constant 0 : i32
    return %arg0, %c0_i32, %c0_i32_0 : i32, i32, i32
  }
  func.func @transform_1(%arg0: i32) -> (i32, i32, i32) {
    %c0_i32 = arith.constant 0 : i32
    %c0_i32_0 = arith.constant 0 : i32
    %c0_i32_1 = arith.constant 0 : i32
    return %arg0, %c0_i32, %c0_i32_0 : i32, i32, i32
  }
  func.func @transform_2(%arg0: i32) -> (i32, i32) {
    %c0_i32 = arith.constant 0 : i32
    %c0_i32_0 = arith.constant 0 : i32
    %c0_i32_1 = arith.constant 0 : i32
    return %c0_i32, %c0_i32_0 : i32, i32
  }
  func.func @transform_3(%arg0: i32) -> (i32, i32, i32) {
    %c0_i32 = arith.constant 0 : i32
    %c0_i32_0 = arith.constant 0 : i32
    %c0_i32_1 = arith.constant 0 : i32
    %c0_i32_2 = arith.constant 0 : i32
    return %c0_i32, %c0_i32_0, %c0_i32_1 : i32, i32, i32
  }
  func.func @transform_4(%arg0: i32) -> (i32, i32, i32) {
    %c0_i32 = arith.constant 0 : i32
    %c0_i32_0 = arith.constant 0 : i32
    %c0_i32_1 = arith.constant 0 : i32
    %c0_i32_2 = arith.constant 0 : i32
    return %c0_i32, %c0_i32_0, %c0_i32_1 : i32, i32, i32
  }
  func.func @transform_5(%arg0: i32) -> (i32, i32, i32) {
    %c0_i32 = arith.constant 0 : i32
    %c0_i32_0 = arith.constant 0 : i32
    %c0_i32_1 = arith.constant 0 : i32
    %c0_i32_2 = arith.constant 0 : i32
    return %c0_i32, %c0_i32_0, %c0_i32_1 : i32, i32, i32
  }
  func.func @transform_6(%arg0: i32) -> (i32, i32, i32) {
    %c0_i32 = arith.constant 0 : i32
    %c0_i32_0 = arith.constant 0 : i32
    %c0_i32_1 = arith.constant 0 : i32
    %c0_i32_2 = arith.constant 0 : i32
    return %c0_i32, %c0_i32_0, %c0_i32_1 : i32, i32, i32
  }
  func.func @transform_7(%arg0: i32) -> (i32, i32, i32) {
    %c0_i32 = arith.constant 0 : i32
    %c0_i32_0 = arith.constant 0 : i32
    %c0_i32_1 = arith.constant 0 : i32
    %c0_i32_2 = arith.constant 0 : i32
    return %c0_i32, %c0_i32_0, %c0_i32_1 : i32, i32, i32
  }
  func.func @transform_8(%arg0: i32) -> (i32, i32, i32) {
    %c0_i32 = arith.constant 0 : i32
    %c0_i32_0 = arith.constant 0 : i32
    %c0_i32_1 = arith.constant 0 : i32
    %c0_i32_2 = arith.constant 0 : i32
    return %c0_i32, %c0_i32_0, %c0_i32_1 : i32, i32, i32
  }
  func.func @transform_9(%arg0: i32) -> (i32, i32, i32) {
    %c0_i32 = arith.constant 0 : i32
    %c0_i32_0 = arith.constant 0 : i32
    %c0_i32_1 = arith.constant 0 : i32
    %c0_i32_2 = arith.constant 0 : i32
    return %c0_i32, %c0_i32_0, %c0_i32_1 : i32, i32, i32
  }
  func.func @transform_10(%arg0: i32) -> (i32, i32) {
    %c0_i32 = arith.constant 0 : i32
    %c0_i32_0 = arith.constant 0 : i32
    %c0_i32_1 = arith.constant 0 : i32
    return %c0_i32, %c0_i32_0 : i32, i32
  }
  func.func @transform_11(%arg0: i32) -> (i32, i32) {
    %c0_i32 = arith.constant 0 : i32
    %c0_i32_0 = arith.constant 0 : i32
    %c0_i32_1 = arith.constant 0 : i32
    return %c0_i32, %c0_i32_0 : i32, i32
  }
  func.func @transform_12(%arg0: i32) -> (i32, i32) {
    %c0_i32 = arith.constant 0 : i32
    %c0_i32_0 = arith.constant 0 : i32
    %c0_i32_1 = arith.constant 0 : i32
    return %c0_i32, %c0_i32_0 : i32, i32
  }
  func.func @transform_13(%arg0: i32) -> (i32, i32) {
    %c0_i32 = arith.constant 0 : i32
    %c0_i32_0 = arith.constant 0 : i32
    %c0_i32_1 = arith.constant 0 : i32
    return %c0_i32, %c0_i32_0 : i32, i32
  }
  func.func @transform_14(%arg0: i32) -> (i32, i32) {
    %c0_i32 = arith.constant 0 : i32
    %c0_i32_0 = arith.constant 0 : i32
    %c0_i32_1 = arith.constant 0 : i32
    return %c0_i32, %c0_i32_0 : i32, i32
  }
  func.func @transform_15(%arg0: i32) -> (i32, i32) {
    %c0_i32 = arith.constant 0 : i32
    %c0_i32_0 = arith.constant 0 : i32
    %c0_i32_1 = arith.constant 0 : i32
    return %c0_i32, %c0_i32_0 : i32, i32
  }
  func.func @transform_16(%arg0: i32) -> (i32, i32) {
    %c0_i32 = arith.constant 0 : i32
    %c0_i32_0 = arith.constant 0 : i32
    %c0_i32_1 = arith.constant 0 : i32
    return %c0_i32, %c0_i32_0 : i32, i32
  }
  func.func @transform_17(%arg0: i32) -> (i32, i32) {
    %c0_i32 = arith.constant 0 : i32
    %c0_i32_0 = arith.constant 0 : i32
    %c0_i32_1 = arith.constant 0 : i32
    return %c0_i32, %c0_i32_0 : i32, i32
  }
  func.func @transform_18(%arg0: i32) -> (i32, i32) {
    %c0_i32 = arith.constant 0 : i32
    %c0_i32_0 = arith.constant 0 : i32
    %c0_i32_1 = arith.constant 0 : i32
    return %c0_i32, %c0_i32_0 : i32, i32
  }
  func.func @transform_19(%arg0: i32) -> (i32, i32, i32) {
    %c0_i32 = arith.constant 0 : i32
    %c0_i32_0 = arith.constant 0 : i32
    %c0_i32_1 = arith.constant 0 : i32
    %c0_i32_2 = arith.constant 0 : i32
    return %c0_i32, %c0_i32_0, %c0_i32_1 : i32, i32, i32
  }
  func.func @transform_20(%arg0: i32) -> (i32, i32, i32) {
    %c0_i32 = arith.constant 0 : i32
    %c0_i32_0 = arith.constant 0 : i32
    %c0_i32_1 = arith.constant 0 : i32
    %c0_i32_2 = arith.constant 0 : i32
    return %c0_i32, %c0_i32_0, %c0_i32_1 : i32, i32, i32
  }
  func.func @transform_21(%arg0: i32) -> (i32, i32, i32) {
    %c0_i32 = arith.constant 0 : i32
    %c0_i32_0 = arith.constant 0 : i32
    %c0_i32_1 = arith.constant 0 : i32
    %c0_i32_2 = arith.constant 0 : i32
    return %c0_i32, %c0_i32_0, %c0_i32_1 : i32, i32, i32
  }
  func.func @transform_22(%arg0: i32) -> (i32, i32, i32) {
    %c0_i32 = arith.constant 0 : i32
    %c0_i32_0 = arith.constant 0 : i32
    %c0_i32_1 = arith.constant 0 : i32
    %c0_i32_2 = arith.constant 0 : i32
    return %c0_i32, %c0_i32_0, %c0_i32_1 : i32, i32, i32
  }
  func.func @transform_23(%arg0: i32) -> (i32, i32, i32) {
    %c0_i32 = arith.constant 0 : i32
    %c0_i32_0 = arith.constant 0 : i32
    %c0_i32_1 = arith.constant 0 : i32
    %c0_i32_2 = arith.constant 0 : i32
    return %c0_i32, %c0_i32_0, %c0_i32_1 : i32, i32, i32
  }
  func.func @transform_24(%arg0: i32) -> (i32, i32, i32) {
    %c0_i32 = arith.constant 0 : i32
    %c0_i32_0 = arith.constant 0 : i32
    %c0_i32_1 = arith.constant 0 : i32
    %c0_i32_2 = arith.constant 0 : i32
    return %c0_i32, %c0_i32_0, %c0_i32_1 : i32, i32, i32
  }
  func.func @transform_25(%arg0: i32) -> (i32, i32, i32) {
    %c0_i32 = arith.constant 0 : i32
    %c0_i32_0 = arith.constant 0 : i32
    %c0_i32_1 = arith.constant 0 : i32
    %c0_i32_2 = arith.constant 0 : i32
    return %c0_i32, %c0_i32_0, %c0_i32_1 : i32, i32, i32
  }
  func.func @transform_26(%arg0: i32) -> (i32, i32) {
    %c0_i32 = arith.constant 0 : i32
    %c0_i32_0 = arith.constant 0 : i32
    %c0_i32_1 = arith.constant 0 : i32
    return %c0_i32, %c0_i32_0 : i32, i32
  }
  func.func @transform_27(%arg0: i32) -> (i32, i32) {
    %c0_i32 = arith.constant 0 : i32
    %c0_i32_0 = arith.constant 0 : i32
    %c0_i32_1 = arith.constant 0 : i32
    return %c0_i32, %c0_i32_0 : i32, i32
  }
  func.func @transform_28(%arg0: i32) -> (i32, i32) {
    %c0_i32 = arith.constant 0 : i32
    %c0_i32_0 = arith.constant 0 : i32
    %c0_i32_1 = arith.constant 0 : i32
    return %c0_i32, %c0_i32_0 : i32, i32
  }
  func.func @transform_29(%arg0: i32) -> (i32, i32, i32) {
    %c0_i32 = arith.constant 0 : i32
    %c0_i32_0 = arith.constant 0 : i32
    %c0_i32_1 = arith.constant 0 : i32
    %c0_i32_2 = arith.constant 0 : i32
    return %c0_i32, %c0_i32_0, %c0_i32_1 : i32, i32, i32
  }
  func.func @transform_30(%arg0: i32) -> (i32, i32, i32) {
    %c0_i32 = arith.constant 0 : i32
    %c0_i32_0 = arith.constant 0 : i32
    %c0_i32_1 = arith.constant 0 : i32
    %c0_i32_2 = arith.constant 0 : i32
    return %c0_i32, %c0_i32_0, %c0_i32_1 : i32, i32, i32
  }
  func.func @transform_31(%arg0: i32) -> (i32, i32, i32) {
    %c0_i32 = arith.constant 0 : i32
    %c0_i32_0 = arith.constant 0 : i32
    %c0_i32_1 = arith.constant 0 : i32
    %c0_i32_2 = arith.constant 0 : i32
    return %c0_i32, %c0_i32_0, %c0_i32_1 : i32, i32, i32
  }
  func.func @transform_32(%arg0: i32) -> (i32, i32, i32) {
    %c0_i32 = arith.constant 0 : i32
    %c0_i32_0 = arith.constant 0 : i32
    %c0_i32_1 = arith.constant 0 : i32
    %c0_i32_2 = arith.constant 0 : i32
    return %c0_i32, %c0_i32_0, %c0_i32_1 : i32, i32, i32
  }
  func.func @transform_33(%arg0: i32) -> (i32, i32, i32) {
    %c0_i32 = arith.constant 0 : i32
    %c0_i32_0 = arith.constant 0 : i32
    %c0_i32_1 = arith.constant 0 : i32
    %c0_i32_2 = arith.constant 0 : i32
    return %c0_i32, %c0_i32_0, %c0_i32_1 : i32, i32, i32
  }
  func.func @transform_34(%arg0: i32) -> (i32, i32, i32) {
    %c0_i32 = arith.constant 0 : i32
    %c0_i32_0 = arith.constant 0 : i32
    %c0_i32_1 = arith.constant 0 : i32
    %c0_i32_2 = arith.constant 0 : i32
    return %c0_i32, %c0_i32_0, %c0_i32_1 : i32, i32, i32
  }
  func.func @transform_35(%arg0: i32) -> (i32, i32, i32) {
    %c0_i32 = arith.constant 0 : i32
    %c0_i32_0 = arith.constant 0 : i32
    %c0_i32_1 = arith.constant 0 : i32
    %c0_i32_2 = arith.constant 0 : i32
    return %c0_i32, %c0_i32_0, %c0_i32_1 : i32, i32, i32
  }
  func.func @transform_36(%arg0: i32) -> (i32, i32) {
    %c0_i32 = arith.constant 0 : i32
    %c0_i32_0 = arith.constant 0 : i32
    %c0_i32_1 = arith.constant 0 : i32
    return %c0_i32, %c0_i32_0 : i32, i32
  }
  func.func @transform_37(%arg0: i32) -> (i32, i32) {
    %c0_i32 = arith.constant 0 : i32
    %c0_i32_0 = arith.constant 0 : i32
    %c0_i32_1 = arith.constant 0 : i32
    return %c0_i32, %c0_i32_0 : i32, i32
  }
  func.func @transform_38(%arg0: i32) -> (i32, i32) {
    %c0_i32 = arith.constant 0 : i32
    %c0_i32_0 = arith.constant 0 : i32
    %c0_i32_1 = arith.constant 0 : i32
    return %c0_i32, %c0_i32_0 : i32, i32
  }
  func.func @transform_39(%arg0: i32) -> (i32, i32) {
    %c0_i32 = arith.constant 0 : i32
    %c0_i32_0 = arith.constant 0 : i32
    %c0_i32_1 = arith.constant 0 : i32
    return %c0_i32, %c0_i32_0 : i32, i32
  }
  func.func @transform_40(%arg0: i32) -> (i32, i32) {
    %c0_i32 = arith.constant 0 : i32
    %c0_i32_0 = arith.constant 0 : i32
    %c0_i32_1 = arith.constant 0 : i32
    return %c0_i32, %c0_i32_0 : i32, i32
  }
  func.func @transform_41(%arg0: i32) -> (i32, i32) {
    %c0_i32 = arith.constant 0 : i32
    %c0_i32_0 = arith.constant 0 : i32
    %c0_i32_1 = arith.constant 0 : i32
    return %c0_i32, %c0_i32_0 : i32, i32
  }
  func.func @transform_42(%arg0: i32) -> (i32, i32) {
    %c0_i32 = arith.constant 0 : i32
    %c0_i32_0 = arith.constant 0 : i32
    %c0_i32_1 = arith.constant 0 : i32
    return %c0_i32, %c0_i32_0 : i32, i32
  }
  func.func @transform_43(%arg0: i32) -> (i32, i32) {
    %c0_i32 = arith.constant 0 : i32
    %c0_i32_0 = arith.constant 0 : i32
    %c0_i32_1 = arith.constant 0 : i32
    return %c0_i32, %c0_i32_0 : i32, i32
  }
  func.func @transform_44(%arg0: i32) -> (i32, i32) {
    %c0_i32 = arith.constant 0 : i32
    %c0_i32_0 = arith.constant 0 : i32
    %c0_i32_1 = arith.constant 0 : i32
    return %c0_i32, %c0_i32_0 : i32, i32
  }
  func.func @transform_45(%arg0: i32) -> (i32, i32) {
    %c0_i32 = arith.constant 0 : i32
    %c0_i32_0 = arith.constant 0 : i32
    %c0_i32_1 = arith.constant 0 : i32
    return %c0_i32, %c0_i32_0 : i32, i32
  }
  func.func @transform_46(%arg0: i32) -> (i32, i32) {
    %c0_i32 = arith.constant 0 : i32
    %c0_i32_0 = arith.constant 0 : i32
    %c0_i32_1 = arith.constant 0 : i32
    return %c0_i32, %c0_i32_0 : i32, i32
  }
  func.func @transform_47(%arg0: i32) -> (i32, i32, i32) {
    %c0_i32 = arith.constant 0 : i32
    %c0_i32_0 = arith.constant 0 : i32
    %c0_i32_1 = arith.constant 0 : i32
    return %arg0, %c0_i32, %c0_i32_0 : i32, i32, i32
  }
}

</mosaic_0001>

<llo_original>
// kernel: transformer_forward.1
$region0: #{transformer_forward.1}
  #allocation0 [shape = 'u32[]', space=smem, size = 0x4, offset = 0x4, fixed_abs, tag = 'smem constant byte address 0x4 - core index']
  #allocation1 [shape = 'u32[144,128]{1,0:T(1,128)}', space=vmem, size = 0x12000, scoped, tag = 'internal scratch']
  %s0 = inlined_call_operand.smem [shape: u32[48], index: -1, kind: input, shape index: {}]
  %s1 = sld [smem:[%s0]]
  %s2 = scalar_lea.smem %s0, 1
  %s3 = sld [smem:[%s2]]
  %s4 = scalar_lea.smem %s0, 2
  %s5 = sld [smem:[%s4]]
  %s6 = scalar_lea.smem %s0, 3
  %s7 = sld [smem:[%s6]]
  %s8 = scalar_lea.smem %s0, 4
  %s9 = sld [smem:[%s8]]
  %s10 = scalar_lea.smem %s0, 5
  %s11 = sld [smem:[%s10]]
  %s12 = scalar_lea.smem %s0, 6
  %s13 = sld [smem:[%s12]]
  %s14 = scalar_lea.smem %s0, 7
  %s15 = sld [smem:[%s14]]
  %s16 = scalar_lea.smem %s0, 8
  %s17 = sld [smem:[%s16]]
  %s18 = scalar_lea.smem %s0, 9
  %s19 = sld [smem:[%s18]]
  %s20 = scalar_lea.smem %s0, 10
  %s21 = sld [smem:[%s20]]
  %s22 = scalar_lea.smem %s0, 11
  %s23 = sld [smem:[%s22]]
  %s24 = scalar_lea.smem %s0, 12
  %s25 = sld [smem:[%s24]]
  %s26 = scalar_lea.smem %s0, 13
  %s27 = sld [smem:[%s26]]
  %s28 = scalar_lea.smem %s0, 14
  %s29 = sld [smem:[%s28]]
  %s30 = scalar_lea.smem %s0, 15
  %s31 = sld [smem:[%s30]]
  %s32 = scalar_lea.smem %s0, 16
  %s33 = sld [smem:[%s32]]
  %s34 = scalar_lea.smem %s0, 17
  %s35 = sld [smem:[%s34]]
  %s36 = scalar_lea.smem %s0, 18
  %s37 = sld [smem:[%s36]]
  %s38 = scalar_lea.smem %s0, 19
  %s39 = sld [smem:[%s38]]
  %s40 = scalar_lea.smem %s0, 20
  %s41 = sld [smem:[%s40]]
  %s42 = scalar_lea.smem %s0, 21
  %s43 = sld [smem:[%s42]]
  %s44 = scalar_lea.smem %s0, 22
  %s45 = sld [smem:[%s44]]
  %s46 = scalar_lea.smem %s0, 23
  %s47 = sld [smem:[%s46]]
  %s48 = scalar_lea.smem %s0, 24
  %s49 = sld [smem:[%s48]]
  %s50 = scalar_lea.smem %s0, 25
  %s51 = sld [smem:[%s50]]
  %s52 = scalar_lea.smem %s0, 26
  %s53 = sld [smem:[%s52]]
  %s54 = scalar_lea.smem %s0, 27
  %s55 = sld [smem:[%s54]]
  %s56 = scalar_lea.smem %s0, 28
  %s57 = sld [smem:[%s56]]
  %s58 = scalar_lea.smem %s0, 29
  %s59 = sld [smem:[%s58]]
  %s60 = scalar_lea.smem %s0, 30
  %s61 = sld [smem:[%s60]]
  %s62 = scalar_lea.smem %s0, 31
  %s63 = sld [smem:[%s62]]
  %s64 = scalar_lea.smem %s0, 32
  %s65 = sld [smem:[%s64]]
  %s66 = scalar_lea.smem %s0, 33
  %s67 = sld [smem:[%s66]]
  %s68 = scalar_lea.smem %s0, 34
  %s69 = sld [smem:[%s68]]
  %s70 = scalar_lea.smem %s0, 35
  %s71 = sld [smem:[%s70]]
  %s72 = scalar_lea.smem %s0, 36
  %s73 = sld [smem:[%s72]]
  %s74 = scalar_lea.smem %s0, 37
  %s75 = sld [smem:[%s74]]
  %s76 = scalar_lea.smem %s0, 38
  %s77 = sld [smem:[%s76]]
  %s78 = scalar_lea.smem %s0, 39
  %s79 = sld [smem:[%s78]]
  %s80 = scalar_lea.smem %s0, 40
  %s81 = sld [smem:[%s80]]
  %s82 = scalar_lea.smem %s0, 41
  %s83 = sld [smem:[%s82]]
  %s84 = scalar_lea.smem %s0, 42
  %s85 = sld [smem:[%s84]]
  %s86 = scalar_lea.smem %s0, 43
  %s87 = sld [smem:[%s86]]
  %s88 = scalar_lea.smem %s0, 44
  %s89 = sld [smem:[%s88]]
  %s90 = scalar_lea.smem %s0, 45
  %s91 = sld [smem:[%s90]]
  %s92 = scalar_lea.smem %s0, 46
  %s93 = sld [smem:[%s92]]
  %s94 = scalar_lea.smem %s0, 47
  %s95 = sld [smem:[%s94]]
  %s96 = sld [smem:[#allocation0]]
  $region221: #{transformer_forward.1} parent=0
    _
  %s98 = ssub.s32 1, %s96
  %s99 = scalar_select 0, %s98, %s96
  $region1: #{transformer_forward.1} parent=0
    #allocation2 [shape = 'u8[8192]{0}', space=vmem, size = 0x2000, scoped, tag = 'output window, operand 0']
    #allocation3 [shape = 's32[2]{0}', space=sflag, size = 0x8, scoped, tag = 'scoped memory for transformer_forward.1']
    %100 = vsyncpa [#allocation3], 0
    %s101 = scalar_lea.sflag [#allocation3], 1
    %102 = vsyncpa %s101, 0
    loop: start=0, step=1, limit=4
    $region2: #{transformer_forward.1} parent=1 // loop_pre_header
      _
    $region3: #{transformer_forward.1} parent=1 // loop_header
      %s104 = sphi 0, %s108
      %p105 = scmp.ge.s32.totalorder %s104, 4
      %s114 = sphi 0, %s116
      %s117 = sphi 0, %s114
      %s118 = sphi 0, %s117
      %s134 = sphi 0, %s118
      %s140 = sphi 0, %s142
      %s143 = sphi 0, %s140
      %s144 = sphi 0, %s143
      %s160 = sphi 0, %s144
      %s164 = sphi 0, %s164
      %s166 = sphi 0, %s164
      %s167 = sphi 0, %s166
      %s181 = sphi 0, %s167
      %s185 = sphi 0, %s185
      %s187 = sphi 0, %s185
      %s188 = sphi 0, %s187
      %s202 = sphi 0, %s188
      %s206 = sphi 0, %s206
      %s208 = sphi 0, %s206
      %s209 = sphi 0, %s208
      %s223 = sphi 0, %s209
      %s227 = sphi 0, %s227
      %s229 = sphi 0, %s227
      %s230 = sphi 0, %s229
      %s244 = sphi 0, %s230
      %s248 = sphi 0, %s248
      %s250 = sphi 0, %s248
      %s251 = sphi 0, %s250
      %s265 = sphi 0, %s251
      %s269 = sphi 0, %s269
      %s271 = sphi 0, %s269
      %s272 = sphi 0, %s271
      %s286 = sphi 0, %s272
      %s290 = sphi 0, %s290
      %s292 = sphi 0, %s290
      %s293 = sphi 0, %s292
      %s307 = sphi 0, %s293
      %s311 = sphi 0, %s311
      %s313 = sphi 0, %s311
      %s314 = sphi 0, %s313
      %s328 = sphi 0, %s314
      %s332 = sphi 0, %s332
      %s334 = sphi 0, %s332
      %s335 = sphi 0, %s334
      %s349 = sphi 0, %s335
      %s353 = sphi 0, %s353
      %s355 = sphi 0, %s353
      %s356 = sphi 0, %s355
      %s370 = sphi 0, %s356
      %s374 = sphi 0, %s374
      %s376 = sphi 0, %s374
      %s377 = sphi 0, %s376
      %s391 = sphi 0, %s377
      %s395 = sphi 0, %s395
      %s397 = sphi 0, %s395
      %s398 = sphi 0, %s397
      %s412 = sphi 0, %s398
      %s416 = sphi 0, %s416
      %s418 = sphi 0, %s416
      %s419 = sphi 0, %s418
      %s433 = sphi 0, %s419
      %s437 = sphi 0, %s437
      %s439 = sphi 0, %s437
      %s440 = sphi 0, %s439
      %s454 = sphi 0, %s440
      %s458 = sphi 0, %s458
      %s460 = sphi 0, %s458
      %s461 = sphi 0, %s460
      %s475 = sphi 0, %s461
      %s479 = sphi 0, %s479
      %s481 = sphi 0, %s479
      %s482 = sphi 0, %s481
      %s496 = sphi 0, %s482
      %s500 = sphi 0, %s500
      %s502 = sphi 0, %s500
      %s503 = sphi 0, %s502
      %s517 = sphi 0, %s503
      %s521 = sphi 0, %s521
      %s523 = sphi 0, %s521
      %s524 = sphi 0, %s523
      %s538 = sphi 0, %s524
      %s542 = sphi 0, %s542
      %s544 = sphi 0, %s542
      %s545 = sphi 0, %s544
      %s559 = sphi 0, %s545
      %s563 = sphi 0, %s563
      %s565 = sphi 0, %s563
      %s566 = sphi 0, %s565
      %s580 = sphi 0, %s566
      %s584 = sphi 0, %s584
      %s586 = sphi 0, %s584
      %s587 = sphi 0, %s586
      %s601 = sphi 0, %s587
      %s605 = sphi 0, %s605
      %s607 = sphi 0, %s605
      %s608 = sphi 0, %s607
      %s622 = sphi 0, %s608
      %s626 = sphi 0, %s626
      %s628 = sphi 0, %s626
      %s629 = sphi 0, %s628
      %s643 = sphi 0, %s629
      %s647 = sphi 0, %s647
      %s649 = sphi 0, %s647
      %s650 = sphi 0, %s649
      %s664 = sphi 0, %s650
      %s668 = sphi 0, %s668
      %s670 = sphi 0, %s668
      %s671 = sphi 0, %s670
      %s685 = sphi 0, %s671
      %s689 = sphi 0, %s689
      %s691 = sphi 0, %s689
      %s692 = sphi 0, %s691
      %s706 = sphi 0, %s692
      %s710 = sphi 0, %s710
      %s712 = sphi 0, %s710
      %s713 = sphi 0, %s712
      %s727 = sphi 0, %s713
      %s731 = sphi 0, %s731
      %s733 = sphi 0, %s731
      %s734 = sphi 0, %s733
      %s748 = sphi 0, %s734
      %s752 = sphi 0, %s752
      %s754 = sphi 0, %s752
      %s755 = sphi 0, %s754
      %s769 = sphi 0, %s755
      %s773 = sphi 0, %s773
      %s775 = sphi 0, %s773
      %s776 = sphi 0, %s775
      %s790 = sphi 0, %s776
      %s794 = sphi 0, %s794
      %s796 = sphi 0, %s794
      %s797 = sphi 0, %s796
      %s811 = sphi 0, %s797
      %s815 = sphi 0, %s815
      %s817 = sphi 0, %s815
      %s818 = sphi 0, %s817
      %s832 = sphi 0, %s818
      %s836 = sphi 0, %s836
      %s838 = sphi 0, %s836
      %s839 = sphi 0, %s838
      %s853 = sphi 0, %s839
      %s857 = sphi 0, %s857
      %s859 = sphi 0, %s857
      %s860 = sphi 0, %s859
      %s874 = sphi 0, %s860
      %s878 = sphi 0, %s878
      %s880 = sphi 0, %s878
      %s881 = sphi 0, %s880
      %s895 = sphi 0, %s881
      %s899 = sphi 0, %s899
      %s901 = sphi 0, %s899
      %s902 = sphi 0, %s901
      %s916 = sphi 0, %s902
      %s920 = sphi 0, %s920
      %s922 = sphi 0, %s920
      %s923 = sphi 0, %s922
      %s937 = sphi 0, %s923
      %s941 = sphi 0, %s941
      %s943 = sphi 0, %s941
      %s944 = sphi 0, %s943
      %s958 = sphi 0, %s944
      %s962 = sphi 0, %s962
      %s964 = sphi 0, %s962
      %s965 = sphi 0, %s964
      %s979 = sphi 0, %s965
      %s983 = sphi 0, %s983
      %s985 = sphi 0, %s983
      %s986 = sphi 0, %s985
      %s1000 = sphi 0, %s986
      %s1004 = sphi 0, %s1004
      %s1006 = sphi 0, %s1004
      %s1007 = sphi 0, %s1006
      %s1021 = sphi 0, %s1007
      %s1025 = sphi 0, %s1025
      %s1027 = sphi 0, %s1025
      %s1028 = sphi 0, %s1027
      %s1042 = sphi 0, %s1028
      %s1046 = sphi 0, %s1046
      %s1048 = sphi 0, %s1046
      %s1049 = sphi 0, %s1048
      %s1063 = sphi 0, %s1049
      %s1067 = sphi 0, %s1067
      %s1069 = sphi 0, %s1067
      %s1070 = sphi 0, %s1069
      %s1084 = sphi 0, %s1070
      %s1088 = sphi 0, %s1088
      %s1090 = sphi 0, %s1088
      %s1091 = sphi 0, %s1090
      %s1105 = sphi 0, %s1091
      %s1111 = sphi 0, %s1113
      %s1114 = sphi 0, %s1111
      %s1115 = sphi 0, %s1114
      %s1131 = sphi 0, %s1115
    $region4: #{transformer_forward.1} parent=1 // loop_header_branch
      %107 = sbr.rel (%p105) target = $region8
    $region5: #{transformer_forward.1} parent=1 // loop_body
      %s109 = ssub.s32 %s104, 1
      %s110 = ssub.s32 %s104, 2
      %s111 = sadd.s32 %s104, 1
      %s112 = ssub.s32 %s104, %s111
      %p113 = scmp.eq.s32.totalorder %s112, 0
      %s115 = sadd.s32 %s114, 1
      %s116 = scalar_select %p113, %s114, %s115
      %p119 = pneg %p113
      %p120 = scmp.eq.s32.totalorder %s104, 1
      %p121 = por %p119, %p120
      %p122 = scmp.ne.s32.totalorder %s114, %s117
      %p123 = scmp.eq.s32.totalorder %s104, 0
      %p124 = por %p122, %p123
      %p125 = scmp.ne.s32.totalorder %s114, %s117
      %p126 = scmp.eq.s32.totalorder %s109, 1
      %p127 = por %p125, %p126
      %p128 = scmp.ne.s32.totalorder %s117, %s118
      %p129 = scmp.eq.s32.totalorder %s109, 0
      %p130 = por %p128, %p129
      %p131 = scmp.ne.s32.totalorder %s117, %s118
      %p132 = scmp.eq.s32.totalorder %s110, 1
      %p133 = por %p131, %p132
      %p135 = scmp.ne.s32.totalorder %s118, %s134
      %p136 = scmp.eq.s32.totalorder %s110, 0
      %p137 = por %p135, %p136
      %s138 = ssub.s32 %s104, %s111
      %p139 = scmp.eq.s32.totalorder %s138, 0
      %s141 = sadd.s32 %s140, 1
      %s142 = scalar_select %p139, %s140, %s141
      %p145 = pneg %p139
      %p146 = scmp.eq.s32.totalorder %s104, 1
      %p147 = por %p145, %p146
      %p148 = scmp.ne.s32.totalorder %s140, %s143
      %p149 = scmp.eq.s32.totalorder %s104, 0
      %p150 = por %p148, %p149
      %p151 = scmp.ne.s32.totalorder %s140, %s143
      %p152 = scmp.eq.s32.totalorder %s109, 1
      %p153 = por %p151, %p152
      %p154 = scmp.ne.s32.totalorder %s143, %s144
      %p155 = scmp.eq.s32.totalorder %s109, 0
      %p156 = por %p154, %p155
      %p157 = scmp.ne.s32.totalorder %s143, %s144
      %p158 = scmp.eq.s32.totalorder %s110, 1
      %p159 = por %p157, %p158
      %p161 = scmp.ne.s32.totalorder %s144, %s160
      %p162 = scmp.eq.s32.totalorder %s110, 0
      %p163 = por %p161, %p162
      %s165 = sadd.s32 %s164, 1
      %p168 = scmp.eq.s32.totalorder %s104, 1
      %p169 = scmp.ne.s32.totalorder %s164, %s166
      %p170 = scmp.eq.s32.totalorder %s104, 0
      %p171 = por %p169, %p170
      %p172 = scmp.ne.s32.totalorder %s164, %s166
      %p173 = scmp.eq.s32.totalorder %s109, 1
      %p174 = por %p172, %p173
      %p175 = scmp.ne.s32.totalorder %s166, %s167
      %p176 = scmp.eq.s32.totalorder %s109, 0
      %p177 = por %p175, %p176
      %p178 = scmp.ne.s32.totalorder %s166, %s167
      %p179 = scmp.eq.s32.totalorder %s110, 1
      %p180 = por %p178, %p179
      %p182 = scmp.ne.s32.totalorder %s167, %s181
      %p183 = scmp.eq.s32.totalorder %s110, 0
      %p184 = por %p182, %p183
      %s186 = sadd.s32 %s185, 1
      %p189 = scmp.eq.s32.totalorder %s104, 1
      %p190 = scmp.ne.s32.totalorder %s185, %s187
      %p191 = scmp.eq.s32.totalorder %s104, 0
      %p192 = por %p190, %p191
      %p193 = scmp.ne.s32.totalorder %s185, %s187
      %p194 = scmp.eq.s32.totalorder %s109, 1
      %p195 = por %p193, %p194
      %p196 = scmp.ne.s32.totalorder %s187, %s188
      %p197 = scmp.eq.s32.totalorder %s109, 0
      %p198 = por %p196, %p197
      %p199 = scmp.ne.s32.totalorder %s187, %s188
      %p200 = scmp.eq.s32.totalorder %s110, 1
      %p201 = por %p199, %p200
      %p203 = scmp.ne.s32.totalorder %s188, %s202
      %p204 = scmp.eq.s32.totalorder %s110, 0
      %p205 = por %p203, %p204
      %s207 = sadd.s32 %s206, 1
      %p210 = scmp.eq.s32.totalorder %s104, 1
      %p211 = scmp.ne.s32.totalorder %s206, %s208
      %p212 = scmp.eq.s32.totalorder %s104, 0
      %p213 = por %p211, %p212
      %p214 = scmp.ne.s32.totalorder %s206, %s208
      %p215 = scmp.eq.s32.totalorder %s109, 1
      %p216 = por %p214, %p215
      %p217 = scmp.ne.s32.totalorder %s208, %s209
      %p218 = scmp.eq.s32.totalorder %s109, 0
      %p219 = por %p217, %p218
      %p220 = scmp.ne.s32.totalorder %s208, %s209
      %p221 = scmp.eq.s32.totalorder %s110, 1
      %p222 = por %p220, %p221
      %p224 = scmp.ne.s32.totalorder %s209, %s223
      %p225 = scmp.eq.s32.totalorder %s110, 0
      %p226 = por %p224, %p225
      %s228 = sadd.s32 %s227, 1
      %p231 = scmp.eq.s32.totalorder %s104, 1
      %p232 = scmp.ne.s32.totalorder %s227, %s229
      %p233 = scmp.eq.s32.totalorder %s104, 0
      %p234 = por %p232, %p233
      %p235 = scmp.ne.s32.totalorder %s227, %s229
      %p236 = scmp.eq.s32.totalorder %s109, 1
      %p237 = por %p235, %p236
      %p238 = scmp.ne.s32.totalorder %s229, %s230
      %p239 = scmp.eq.s32.totalorder %s109, 0
      %p240 = por %p238, %p239
      %p241 = scmp.ne.s32.totalorder %s229, %s230
      %p242 = scmp.eq.s32.totalorder %s110, 1
      %p243 = por %p241, %p242
      %p245 = scmp.ne.s32.totalorder %s230, %s244
      %p246 = scmp.eq.s32.totalorder %s110, 0
      %p247 = por %p245, %p246
      %s249 = sadd.s32 %s248, 1
      %p252 = scmp.eq.s32.totalorder %s104, 1
      %p253 = scmp.ne.s32.totalorder %s248, %s250
      %p254 = scmp.eq.s32.totalorder %s104, 0
      %p255 = por %p253, %p254
      %p256 = scmp.ne.s32.totalorder %s248, %s250
      %p257 = scmp.eq.s32.totalorder %s109, 1
      %p258 = por %p256, %p257
      %p259 = scmp.ne.s32.totalorder %s250, %s251
      %p260 = scmp.eq.s32.totalorder %s109, 0
      %p261 = por %p259, %p260
      %p262 = scmp.ne.s32.totalorder %s250, %s251
      %p263 = scmp.eq.s32.totalorder %s110, 1
      %p264 = por %p262, %p263
      %p266 = scmp.ne.s32.totalorder %s251, %s265
      %p267 = scmp.eq.s32.totalorder %s110, 0
      %p268 = por %p266, %p267
      %s270 = sadd.s32 %s269, 1
      %p273 = scmp.eq.s32.totalorder %s104, 1
      %p274 = scmp.ne.s32.totalorder %s269, %s271
      %p275 = scmp.eq.s32.totalorder %s104, 0
      %p276 = por %p274, %p275
      %p277 = scmp.ne.s32.totalorder %s269, %s271
      %p278 = scmp.eq.s32.totalorder %s109, 1
      %p279 = por %p277, %p278
      %p280 = scmp.ne.s32.totalorder %s271, %s272
      %p281 = scmp.eq.s32.totalorder %s109, 0
      %p282 = por %p280, %p281
      %p283 = scmp.ne.s32.totalorder %s271, %s272
      %p284 = scmp.eq.s32.totalorder %s110, 1
      %p285 = por %p283, %p284
      %p287 = scmp.ne.s32.totalorder %s272, %s286
      %p288 = scmp.eq.s32.totalorder %s110, 0
      %p289 = por %p287, %p288
      %s291 = sadd.s32 %s290, 1
      %p294 = scmp.eq.s32.totalorder %s104, 1
      %p295 = scmp.ne.s32.totalorder %s290, %s292
      %p296 = scmp.eq.s32.totalorder %s104, 0
      %p297 = por %p295, %p296
      %p298 = scmp.ne.s32.totalorder %s290, %s292
      %p299 = scmp.eq.s32.totalorder %s109, 1
      %p300 = por %p298, %p299
      %p301 = scmp.ne.s32.totalorder %s292, %s293
      %p302 = scmp.eq.s32.totalorder %s109, 0
      %p303 = por %p301, %p302
      %p304 = scmp.ne.s32.totalorder %s292, %s293
      %p305 = scmp.eq.s32.totalorder %s110, 1
      %p306 = por %p304, %p305
      %p308 = scmp.ne.s32.totalorder %s293, %s307
      %p309 = scmp.eq.s32.totalorder %s110, 0
      %p310 = por %p308, %p309
      %s312 = sadd.s32 %s311, 1
      %p315 = scmp.eq.s32.totalorder %s104, 1
      %p316 = scmp.ne.s32.totalorder %s311, %s313
      %p317 = scmp.eq.s32.totalorder %s104, 0
      %p318 = por %p316, %p317
      %p319 = scmp.ne.s32.totalorder %s311, %s313
      %p320 = scmp.eq.s32.totalorder %s109, 1
      %p321 = por %p319, %p320
      %p322 = scmp.ne.s32.totalorder %s313, %s314
      %p323 = scmp.eq.s32.totalorder %s109, 0
      %p324 = por %p322, %p323
      %p325 = scmp.ne.s32.totalorder %s313, %s314
      %p326 = scmp.eq.s32.totalorder %s110, 1
      %p327 = por %p325, %p326
      %p329 = scmp.ne.s32.totalorder %s314, %s328
      %p330 = scmp.eq.s32.totalorder %s110, 0
      %p331 = por %p329, %p330
      %s333 = sadd.s32 %s332, 1
      %p336 = scmp.eq.s32.totalorder %s104, 1
      %p337 = scmp.ne.s32.totalorder %s332, %s334
      %p338 = scmp.eq.s32.totalorder %s104, 0
      %p339 = por %p337, %p338
      %p340 = scmp.ne.s32.totalorder %s332, %s334
      %p341 = scmp.eq.s32.totalorder %s109, 1
      %p342 = por %p340, %p341
      %p343 = scmp.ne.s32.totalorder %s334, %s335
      %p344 = scmp.eq.s32.totalorder %s109, 0
      %p345 = por %p343, %p344
      %p346 = scmp.ne.s32.totalorder %s334, %s335
      %p347 = scmp.eq.s32.totalorder %s110, 1
      %p348 = por %p346, %p347
      %p350 = scmp.ne.s32.totalorder %s335, %s349
      %p351 = scmp.eq.s32.totalorder %s110, 0
      %p352 = por %p350, %p351
      %s354 = sadd.s32 %s353, 1
      %p357 = scmp.eq.s32.totalorder %s104, 1
      %p358 = scmp.ne.s32.totalorder %s353, %s355
      %p359 = scmp.eq.s32.totalorder %s104, 0
      %p360 = por %p358, %p359
      %p361 = scmp.ne.s32.totalorder %s353, %s355
      %p362 = scmp.eq.s32.totalorder %s109, 1
      %p363 = por %p361, %p362
      %p364 = scmp.ne.s32.totalorder %s355, %s356
      %p365 = scmp.eq.s32.totalorder %s109, 0
      %p366 = por %p364, %p365
      %p367 = scmp.ne.s32.totalorder %s355, %s356
      %p368 = scmp.eq.s32.totalorder %s110, 1
      %p369 = por %p367, %p368
      %p371 = scmp.ne.s32.totalorder %s356, %s370
      %p372 = scmp.eq.s32.totalorder %s110, 0
      %p373 = por %p371, %p372
      %s375 = sadd.s32 %s374, 1
      %p378 = scmp.eq.s32.totalorder %s104, 1
      %p379 = scmp.ne.s32.totalorder %s374, %s376
      %p380 = scmp.eq.s32.totalorder %s104, 0
      %p381 = por %p379, %p380
      %p382 = scmp.ne.s32.totalorder %s374, %s376
      %p383 = scmp.eq.s32.totalorder %s109, 1
      %p384 = por %p382, %p383
      %p385 = scmp.ne.s32.totalorder %s376, %s377
      %p386 = scmp.eq.s32.totalorder %s109, 0
      %p387 = por %p385, %p386
      %p388 = scmp.ne.s32.totalorder %s376, %s377
      %p389 = scmp.eq.s32.totalorder %s110, 1
      %p390 = por %p388, %p389
      %p392 = scmp.ne.s32.totalorder %s377, %s391
      %p393 = scmp.eq.s32.totalorder %s110, 0
      %p394 = por %p392, %p393
      %s396 = sadd.s32 %s395, 1
      %p399 = scmp.eq.s32.totalorder %s104, 1
      %p400 = scmp.ne.s32.totalorder %s395, %s397
      %p401 = scmp.eq.s32.totalorder %s104, 0
      %p402 = por %p400, %p401
      %p403 = scmp.ne.s32.totalorder %s395, %s397
      %p404 = scmp.eq.s32.totalorder %s109, 1
      %p405 = por %p403, %p404
      %p406 = scmp.ne.s32.totalorder %s397, %s398
      %p407 = scmp.eq.s32.totalorder %s109, 0
      %p408 = por %p406, %p407
      %p409 = scmp.ne.s32.totalorder %s397, %s398
      %p410 = scmp.eq.s32.totalorder %s110, 1
      %p411 = por %p409, %p410
      %p413 = scmp.ne.s32.totalorder %s398, %s412
      %p414 = scmp.eq.s32.totalorder %s110, 0
      %p415 = por %p413, %p414
      %s417 = sadd.s32 %s416, 1
      %p420 = scmp.eq.s32.totalorder %s104, 1
      %p421 = scmp.ne.s32.totalorder %s416, %s418
      %p422 = scmp.eq.s32.totalorder %s104, 0
      %p423 = por %p421, %p422
      %p424 = scmp.ne.s32.totalorder %s416, %s418
      %p425 = scmp.eq.s32.totalorder %s109, 1
      %p426 = por %p424, %p425
      %p427 = scmp.ne.s32.totalorder %s418, %s419
      %p428 = scmp.eq.s32.totalorder %s109, 0
      %p429 = por %p427, %p428
      %p430 = scmp.ne.s32.totalorder %s418, %s419
      %p431 = scmp.eq.s32.totalorder %s110, 1
      %p432 = por %p430, %p431
      %p434 = scmp.ne.s32.totalorder %s419, %s433
      %p435 = scmp.eq.s32.totalorder %s110, 0
      %p436 = por %p434, %p435
      %s438 = sadd.s32 %s437, 1
      %p441 = scmp.eq.s32.totalorder %s104, 1
      %p442 = scmp.ne.s32.totalorder %s437, %s439
      %p443 = scmp.eq.s32.totalorder %s104, 0
      %p444 = por %p442, %p443
      %p445 = scmp.ne.s32.totalorder %s437, %s439
      %p446 = scmp.eq.s32.totalorder %s109, 1
      %p447 = por %p445, %p446
      %p448 = scmp.ne.s32.totalorder %s439, %s440
      %p449 = scmp.eq.s32.totalorder %s109, 0
      %p450 = por %p448, %p449
      %p451 = scmp.ne.s32.totalorder %s439, %s440
      %p452 = scmp.eq.s32.totalorder %s110, 1
      %p453 = por %p451, %p452
      %p455 = scmp.ne.s32.totalorder %s440, %s454
      %p456 = scmp.eq.s32.totalorder %s110, 0
      %p457 = por %p455, %p456
      %s459 = sadd.s32 %s458, 1
      %p462 = scmp.eq.s32.totalorder %s104, 1
      %p463 = scmp.ne.s32.totalorder %s458, %s460
      %p464 = scmp.eq.s32.totalorder %s104, 0
      %p465 = por %p463, %p464
      %p466 = scmp.ne.s32.totalorder %s458, %s460
      %p467 = scmp.eq.s32.totalorder %s109, 1
      %p468 = por %p466, %p467
      %p469 = scmp.ne.s32.totalorder %s460, %s461
      %p470 = scmp.eq.s32.totalorder %s109, 0
      %p471 = por %p469, %p470
      %p472 = scmp.ne.s32.totalorder %s460, %s461
      %p473 = scmp.eq.s32.totalorder %s110, 1
      %p474 = por %p472, %p473
      %p476 = scmp.ne.s32.totalorder %s461, %s475
      %p477 = scmp.eq.s32.totalorder %s110, 0
      %p478 = por %p476, %p477
      %s480 = sadd.s32 %s479, 1
      %p483 = scmp.eq.s32.totalorder %s104, 1
      %p484 = scmp.ne.s32.totalorder %s479, %s481
      %p485 = scmp.eq.s32.totalorder %s104, 0
      %p486 = por %p484, %p485
      %p487 = scmp.ne.s32.totalorder %s479, %s481
      %p488 = scmp.eq.s32.totalorder %s109, 1
      %p489 = por %p487, %p488
      %p490 = scmp.ne.s32.totalorder %s481, %s482
      %p491 = scmp.eq.s32.totalorder %s109, 0
      %p492 = por %p490, %p491
      %p493 = scmp.ne.s32.totalorder %s481, %s482
      %p494 = scmp.eq.s32.totalorder %s110, 1
      %p495 = por %p493, %p494
      %p497 = scmp.ne.s32.totalorder %s482, %s496
      %p498 = scmp.eq.s32.totalorder %s110, 0
      %p499 = por %p497, %p498
      %s501 = sadd.s32 %s500, 1
      %p504 = scmp.eq.s32.totalorder %s104, 1
      %p505 = scmp.ne.s32.totalorder %s500, %s502
      %p506 = scmp.eq.s32.totalorder %s104, 0
      %p507 = por %p505, %p506
      %p508 = scmp.ne.s32.totalorder %s500, %s502
      %p509 = scmp.eq.s32.totalorder %s109, 1
      %p510 = por %p508, %p509
      %p511 = scmp.ne.s32.totalorder %s502, %s503
      %p512 = scmp.eq.s32.totalorder %s109, 0
      %p513 = por %p511, %p512
      %p514 = scmp.ne.s32.totalorder %s502, %s503
      %p515 = scmp.eq.s32.totalorder %s110, 1
      %p516 = por %p514, %p515
      %p518 = scmp.ne.s32.totalorder %s503, %s517
      %p519 = scmp.eq.s32.totalorder %s110, 0
      %p520 = por %p518, %p519
      %s522 = sadd.s32 %s521, 1
      %p525 = scmp.eq.s32.totalorder %s104, 1
      %p526 = scmp.ne.s32.totalorder %s521, %s523
      %p527 = scmp.eq.s32.totalorder %s104, 0
      %p528 = por %p526, %p527
      %p529 = scmp.ne.s32.totalorder %s521, %s523
      %p530 = scmp.eq.s32.totalorder %s109, 1
      %p531 = por %p529, %p530
      %p532 = scmp.ne.s32.totalorder %s523, %s524
      %p533 = scmp.eq.s32.totalorder %s109, 0
      %p534 = por %p532, %p533
      %p535 = scmp.ne.s32.totalorder %s523, %s524
      %p536 = scmp.eq.s32.totalorder %s110, 1
      %p537 = por %p535, %p536
      %p539 = scmp.ne.s32.totalorder %s524, %s538
      %p540 = scmp.eq.s32.totalorder %s110, 0
      %p541 = por %p539, %p540
      %s543 = sadd.s32 %s542, 1
      %p546 = scmp.eq.s32.totalorder %s104, 1
      %p547 = scmp.ne.s32.totalorder %s542, %s544
      %p548 = scmp.eq.s32.totalorder %s104, 0
      %p549 = por %p547, %p548
      %p550 = scmp.ne.s32.totalorder %s542, %s544
      %p551 = scmp.eq.s32.totalorder %s109, 1
      %p552 = por %p550, %p551
      %p553 = scmp.ne.s32.totalorder %s544, %s545
      %p554 = scmp.eq.s32.totalorder %s109, 0
      %p555 = por %p553, %p554
      %p556 = scmp.ne.s32.totalorder %s544, %s545
      %p557 = scmp.eq.s32.totalorder %s110, 1
      %p558 = por %p556, %p557
      %p560 = scmp.ne.s32.totalorder %s545, %s559
      %p561 = scmp.eq.s32.totalorder %s110, 0
      %p562 = por %p560, %p561
      %s564 = sadd.s32 %s563, 1
      %p567 = scmp.eq.s32.totalorder %s104, 1
      %p568 = scmp.ne.s32.totalorder %s563, %s565
      %p569 = scmp.eq.s32.totalorder %s104, 0
      %p570 = por %p568, %p569
      %p571 = scmp.ne.s32.totalorder %s563, %s565
      %p572 = scmp.eq.s32.totalorder %s109, 1
      %p573 = por %p571, %p572
      %p574 = scmp.ne.s32.totalorder %s565, %s566
      %p575 = scmp.eq.s32.totalorder %s109, 0
      %p576 = por %p574, %p575
      %p577 = scmp.ne.s32.totalorder %s565, %s566
      %p578 = scmp.eq.s32.totalorder %s110, 1
      %p579 = por %p577, %p578
      %p581 = scmp.ne.s32.totalorder %s566, %s580
      %p582 = scmp.eq.s32.totalorder %s110, 0
      %p583 = por %p581, %p582
      %s585 = sadd.s32 %s584, 1
      %p588 = scmp.eq.s32.totalorder %s104, 1
      %p589 = scmp.ne.s32.totalorder %s584, %s586
      %p590 = scmp.eq.s32.totalorder %s104, 0
      %p591 = por %p589, %p590
      %p592 = scmp.ne.s32.totalorder %s584, %s586
      %p593 = scmp.eq.s32.totalorder %s109, 1
      %p594 = por %p592, %p593
      %p595 = scmp.ne.s32.totalorder %s586, %s587
      %p596 = scmp.eq.s32.totalorder %s109, 0
      %p597 = por %p595, %p596
      %p598 = scmp.ne.s32.totalorder %s586, %s587
      %p599 = scmp.eq.s32.totalorder %s110, 1
      %p600 = por %p598, %p599
      %p602 = scmp.ne.s32.totalorder %s587, %s601
      %p603 = scmp.eq.s32.totalorder %s110, 0
      %p604 = por %p602, %p603
      %s606 = sadd.s32 %s605, 1
      %p609 = scmp.eq.s32.totalorder %s104, 1
      %p610 = scmp.ne.s32.totalorder %s605, %s607
      %p611 = scmp.eq.s32.totalorder %s104, 0
      %p612 = por %p610, %p611
      %p613 = scmp.ne.s32.totalorder %s605, %s607
      %p614 = scmp.eq.s32.totalorder %s109, 1
      %p615 = por %p613, %p614
      %p616 = scmp.ne.s32.totalorder %s607, %s608
      %p617 = scmp.eq.s32.totalorder %s109, 0
      %p618 = por %p616, %p617
      %p619 = scmp.ne.s32.totalorder %s607, %s608
      %p620 = scmp.eq.s32.totalorder %s110, 1
      %p621 = por %p619, %p620
      %p623 = scmp.ne.s32.totalorder %s608, %s622
      %p624 = scmp.eq.s32.totalorder %s110, 0
      %p625 = por %p623, %p624
      %s627 = sadd.s32 %s626, 1
      %p630 = scmp.eq.s32.totalorder %s104, 1
      %p631 = scmp.ne.s32.totalorder %s626, %s628
      %p632 = scmp.eq.s32.totalorder %s104, 0
      %p633 = por %p631, %p632
      %p634 = scmp.ne.s32.totalorder %s626, %s628
      %p635 = scmp.eq.s32.totalorder %s109, 1
      %p636 = por %p634, %p635
      %p637 = scmp.ne.s32.totalorder %s628, %s629
      %p638 = scmp.eq.s32.totalorder %s109, 0
      %p639 = por %p637, %p638
      %p640 = scmp.ne.s32.totalorder %s628, %s629
      %p641 = scmp.eq.s32.totalorder %s110, 1
      %p642 = por %p640, %p641
      %p644 = scmp.ne.s32.totalorder %s629, %s643
      %p645 = scmp.eq.s32.totalorder %s110, 0
      %p646 = por %p644, %p645
      %s648 = sadd.s32 %s647, 1
      %p651 = scmp.eq.s32.totalorder %s104, 1
      %p652 = scmp.ne.s32.totalorder %s647, %s649
      %p653 = scmp.eq.s32.totalorder %s104, 0
      %p654 = por %p652, %p653
      %p655 = scmp.ne.s32.totalorder %s647, %s649
      %p656 = scmp.eq.s32.totalorder %s109, 1
      %p657 = por %p655, %p656
      %p658 = scmp.ne.s32.totalorder %s649, %s650
      %p659 = scmp.eq.s32.totalorder %s109, 0
      %p660 = por %p658, %p659
      %p661 = scmp.ne.s32.totalorder %s649, %s650
      %p662 = scmp.eq.s32.totalorder %s110, 1
      %p663 = por %p661, %p662
      %p665 = scmp.ne.s32.totalorder %s650, %s664
      %p666 = scmp.eq.s32.totalorder %s110, 0
      %p667 = por %p665, %p666
      %s669 = sadd.s32 %s668, 1
      %p672 = scmp.eq.s32.totalorder %s104, 1
      %p673 = scmp.ne.s32.totalorder %s668, %s670
      %p674 = scmp.eq.s32.totalorder %s104, 0
      %p675 = por %p673, %p674
      %p676 = scmp.ne.s32.totalorder %s668, %s670
      %p677 = scmp.eq.s32.totalorder %s109, 1
      %p678 = por %p676, %p677
      %p679 = scmp.ne.s32.totalorder %s670, %s671
      %p680 = scmp.eq.s32.totalorder %s109, 0
      %p681 = por %p679, %p680
      %p682 = scmp.ne.s32.totalorder %s670, %s671
      %p683 = scmp.eq.s32.totalorder %s110, 1
      %p684 = por %p682, %p683
      %p686 = scmp.ne.s32.totalorder %s671, %s685
      %p687 = scmp.eq.s32.totalorder %s110, 0
      %p688 = por %p686, %p687
      %s690 = sadd.s32 %s689, 1
      %p693 = scmp.eq.s32.totalorder %s104, 1
      %p694 = scmp.ne.s32.totalorder %s689, %s691
      %p695 = scmp.eq.s32.totalorder %s104, 0
      %p696 = por %p694, %p695
      %p697 = scmp.ne.s32.totalorder %s689, %s691
      %p698 = scmp.eq.s32.totalorder %s109, 1
      %p699 = por %p697, %p698
      %p700 = scmp.ne.s32.totalorder %s691, %s692
      %p701 = scmp.eq.s32.totalorder %s109, 0
      %p702 = por %p700, %p701
      %p703 = scmp.ne.s32.totalorder %s691, %s692
      %p704 = scmp.eq.s32.totalorder %s110, 1
      %p705 = por %p703, %p704
      %p707 = scmp.ne.s32.totalorder %s692, %s706
      %p708 = scmp.eq.s32.totalorder %s110, 0
      %p709 = por %p707, %p708
      %s711 = sadd.s32 %s710, 1
      %p714 = scmp.eq.s32.totalorder %s104, 1
      %p715 = scmp.ne.s32.totalorder %s710, %s712
      %p716 = scmp.eq.s32.totalorder %s104, 0
      %p717 = por %p715, %p716
      %p718 = scmp.ne.s32.totalorder %s710, %s712
      %p719 = scmp.eq.s32.totalorder %s109, 1
      %p720 = por %p718, %p719
      %p721 = scmp.ne.s32.totalorder %s712, %s713
      %p722 = scmp.eq.s32.totalorder %s109, 0
      %p723 = por %p721, %p722
      %p724 = scmp.ne.s32.totalorder %s712, %s713
      %p725 = scmp.eq.s32.totalorder %s110, 1
      %p726 = por %p724, %p725
      %p728 = scmp.ne.s32.totalorder %s713, %s727
      %p729 = scmp.eq.s32.totalorder %s110, 0
      %p730 = por %p728, %p729
      %s732 = sadd.s32 %s731, 1
      %p735 = scmp.eq.s32.totalorder %s104, 1
      %p736 = scmp.ne.s32.totalorder %s731, %s733
      %p737 = scmp.eq.s32.totalorder %s104, 0
      %p738 = por %p736, %p737
      %p739 = scmp.ne.s32.totalorder %s731, %s733
      %p740 = scmp.eq.s32.totalorder %s109, 1
      %p741 = por %p739, %p740
      %p742 = scmp.ne.s32.totalorder %s733, %s734
      %p743 = scmp.eq.s32.totalorder %s109, 0
      %p744 = por %p742, %p743
      %p745 = scmp.ne.s32.totalorder %s733, %s734
      %p746 = scmp.eq.s32.totalorder %s110, 1
      %p747 = por %p745, %p746
      %p749 = scmp.ne.s32.totalorder %s734, %s748
      %p750 = scmp.eq.s32.totalorder %s110, 0
      %p751 = por %p749, %p750
      %s753 = sadd.s32 %s752, 1
      %p756 = scmp.eq.s32.totalorder %s104, 1
      %p757 = scmp.ne.s32.totalorder %s752, %s754
      %p758 = scmp.eq.s32.totalorder %s104, 0
      %p759 = por %p757, %p758
      %p760 = scmp.ne.s32.totalorder %s752, %s754
      %p761 = scmp.eq.s32.totalorder %s109, 1
      %p762 = por %p760, %p761
      %p763 = scmp.ne.s32.totalorder %s754, %s755
      %p764 = scmp.eq.s32.totalorder %s109, 0
      %p765 = por %p763, %p764
      %p766 = scmp.ne.s32.totalorder %s754, %s755
      %p767 = scmp.eq.s32.totalorder %s110, 1
      %p768 = por %p766, %p767
      %p770 = scmp.ne.s32.totalorder %s755, %s769
      %p771 = scmp.eq.s32.totalorder %s110, 0
      %p772 = por %p770, %p771
      %s774 = sadd.s32 %s773, 1
      %p777 = scmp.eq.s32.totalorder %s104, 1
      %p778 = scmp.ne.s32.totalorder %s773, %s775
      %p779 = scmp.eq.s32.totalorder %s104, 0
      %p780 = por %p778, %p779
      %p781 = scmp.ne.s32.totalorder %s773, %s775
      %p782 = scmp.eq.s32.totalorder %s109, 1
      %p783 = por %p781, %p782
      %p784 = scmp.ne.s32.totalorder %s775, %s776
      %p785 = scmp.eq.s32.totalorder %s109, 0
      %p786 = por %p784, %p785
      %p787 = scmp.ne.s32.totalorder %s775, %s776
      %p788 = scmp.eq.s32.totalorder %s110, 1
      %p789 = por %p787, %p788
      %p791 = scmp.ne.s32.totalorder %s776, %s790
      %p792 = scmp.eq.s32.totalorder %s110, 0
      %p793 = por %p791, %p792
      %s795 = sadd.s32 %s794, 1
      %p798 = scmp.eq.s32.totalorder %s104, 1
      %p799 = scmp.ne.s32.totalorder %s794, %s796
      %p800 = scmp.eq.s32.totalorder %s104, 0
      %p801 = por %p799, %p800
      %p802 = scmp.ne.s32.totalorder %s794, %s796
      %p803 = scmp.eq.s32.totalorder %s109, 1
      %p804 = por %p802, %p803
      %p805 = scmp.ne.s32.totalorder %s796, %s797
      %p806 = scmp.eq.s32.totalorder %s109, 0
      %p807 = por %p805, %p806
      %p808 = scmp.ne.s32.totalorder %s796, %s797
      %p809 = scmp.eq.s32.totalorder %s110, 1
      %p810 = por %p808, %p809
      %p812 = scmp.ne.s32.totalorder %s797, %s811
      %p813 = scmp.eq.s32.totalorder %s110, 0
      %p814 = por %p812, %p813
      %s816 = sadd.s32 %s815, 1
      %p819 = scmp.eq.s32.totalorder %s104, 1
      %p820 = scmp.ne.s32.totalorder %s815, %s817
      %p821 = scmp.eq.s32.totalorder %s104, 0
      %p822 = por %p820, %p821
      %p823 = scmp.ne.s32.totalorder %s815, %s817
      %p824 = scmp.eq.s32.totalorder %s109, 1
      %p825 = por %p823, %p824
      %p826 = scmp.ne.s32.totalorder %s817, %s818
      %p827 = scmp.eq.s32.totalorder %s109, 0
      %p828 = por %p826, %p827
      %p829 = scmp.ne.s32.totalorder %s817, %s818
      %p830 = scmp.eq.s32.totalorder %s110, 1
      %p831 = por %p829, %p830
      %p833 = scmp.ne.s32.totalorder %s818, %s832
      %p834 = scmp.eq.s32.totalorder %s110, 0
      %p835 = por %p833, %p834
      %s837 = sadd.s32 %s836, 1
      %p840 = scmp.eq.s32.totalorder %s104, 1
      %p841 = scmp.ne.s32.totalorder %s836, %s838
      %p842 = scmp.eq.s32.totalorder %s104, 0
      %p843 = por %p841, %p842
      %p844 = scmp.ne.s32.totalorder %s836, %s838
      %p845 = scmp.eq.s32.totalorder %s109, 1
      %p846 = por %p844, %p845
      %p847 = scmp.ne.s32.totalorder %s838, %s839
      %p848 = scmp.eq.s32.totalorder %s109, 0
      %p849 = por %p847, %p848
      %p850 = scmp.ne.s32.totalorder %s838, %s839
      %p851 = scmp.eq.s32.totalorder %s110, 1
      %p852 = por %p850, %p851
      %p854 = scmp.ne.s32.totalorder %s839, %s853
      %p855 = scmp.eq.s32.totalorder %s110, 0
      %p856 = por %p854, %p855
      %s858 = sadd.s32 %s857, 1
      %p861 = scmp.eq.s32.totalorder %s104, 1
      %p862 = scmp.ne.s32.totalorder %s857, %s859
      %p863 = scmp.eq.s32.totalorder %s104, 0
      %p864 = por %p862, %p863
      %p865 = scmp.ne.s32.totalorder %s857, %s859
      %p866 = scmp.eq.s32.totalorder %s109, 1
      %p867 = por %p865, %p866
      %p868 = scmp.ne.s32.totalorder %s859, %s860
      %p869 = scmp.eq.s32.totalorder %s109, 0
      %p870 = por %p868, %p869
      %p871 = scmp.ne.s32.totalorder %s859, %s860
      %p872 = scmp.eq.s32.totalorder %s110, 1
      %p873 = por %p871, %p872
      %p875 = scmp.ne.s32.totalorder %s860, %s874
      %p876 = scmp.eq.s32.totalorder %s110, 0
      %p877 = por %p875, %p876
      %s879 = sadd.s32 %s878, 1
      %p882 = scmp.eq.s32.totalorder %s104, 1
      %p883 = scmp.ne.s32.totalorder %s878, %s880
      %p884 = scmp.eq.s32.totalorder %s104, 0
      %p885 = por %p883, %p884
      %p886 = scmp.ne.s32.totalorder %s878, %s880
      %p887 = scmp.eq.s32.totalorder %s109, 1
      %p888 = por %p886, %p887
      %p889 = scmp.ne.s32.totalorder %s880, %s881
      %p890 = scmp.eq.s32.totalorder %s109, 0
      %p891 = por %p889, %p890
      %p892 = scmp.ne.s32.totalorder %s880, %s881
      %p893 = scmp.eq.s32.totalorder %s110, 1
      %p894 = por %p892, %p893
      %p896 = scmp.ne.s32.totalorder %s881, %s895
      %p897 = scmp.eq.s32.totalorder %s110, 0
      %p898 = por %p896, %p897
      %s900 = sadd.s32 %s899, 1
      %p903 = scmp.eq.s32.totalorder %s104, 1
      %p904 = scmp.ne.s32.totalorder %s899, %s901
      %p905 = scmp.eq.s32.totalorder %s104, 0
      %p906 = por %p904, %p905
      %p907 = scmp.ne.s32.totalorder %s899, %s901
      %p908 = scmp.eq.s32.totalorder %s109, 1
      %p909 = por %p907, %p908
      %p910 = scmp.ne.s32.totalorder %s901, %s902
      %p911 = scmp.eq.s32.totalorder %s109, 0
      %p912 = por %p910, %p911
      %p913 = scmp.ne.s32.totalorder %s901, %s902
      %p914 = scmp.eq.s32.totalorder %s110, 1
      %p915 = por %p913, %p914
      %p917 = scmp.ne.s32.totalorder %s902, %s916
      %p918 = scmp.eq.s32.totalorder %s110, 0
      %p919 = por %p917, %p918
      %s921 = sadd.s32 %s920, 1
      %p924 = scmp.eq.s32.totalorder %s104, 1
      %p925 = scmp.ne.s32.totalorder %s920, %s922
      %p926 = scmp.eq.s32.totalorder %s104, 0
      %p927 = por %p925, %p926
      %p928 = scmp.ne.s32.totalorder %s920, %s922
      %p929 = scmp.eq.s32.totalorder %s109, 1
      %p930 = por %p928, %p929
      %p931 = scmp.ne.s32.totalorder %s922, %s923
      %p932 = scmp.eq.s32.totalorder %s109, 0
      %p933 = por %p931, %p932
      %p934 = scmp.ne.s32.totalorder %s922, %s923
      %p935 = scmp.eq.s32.totalorder %s110, 1
      %p936 = por %p934, %p935
      %p938 = scmp.ne.s32.totalorder %s923, %s937
      %p939 = scmp.eq.s32.totalorder %s110, 0
      %p940 = por %p938, %p939
      %s942 = sadd.s32 %s941, 1
      %p945 = scmp.eq.s32.totalorder %s104, 1
      %p946 = scmp.ne.s32.totalorder %s941, %s943
      %p947 = scmp.eq.s32.totalorder %s104, 0
      %p948 = por %p946, %p947
      %p949 = scmp.ne.s32.totalorder %s941, %s943
      %p950 = scmp.eq.s32.totalorder %s109, 1
      %p951 = por %p949, %p950
      %p952 = scmp.ne.s32.totalorder %s943, %s944
      %p953 = scmp.eq.s32.totalorder %s109, 0
      %p954 = por %p952, %p953
      %p955 = scmp.ne.s32.totalorder %s943, %s944
      %p956 = scmp.eq.s32.totalorder %s110, 1
      %p957 = por %p955, %p956
      %p959 = scmp.ne.s32.totalorder %s944, %s958
      %p960 = scmp.eq.s32.totalorder %s110, 0
      %p961 = por %p959, %p960
      %s963 = sadd.s32 %s962, 1
      %p966 = scmp.eq.s32.totalorder %s104, 1
      %p967 = scmp.ne.s32.totalorder %s962, %s964
      %p968 = scmp.eq.s32.totalorder %s104, 0
      %p969 = por %p967, %p968
      %p970 = scmp.ne.s32.totalorder %s962, %s964
      %p971 = scmp.eq.s32.totalorder %s109, 1
      %p972 = por %p970, %p971
      %p973 = scmp.ne.s32.totalorder %s964, %s965
      %p974 = scmp.eq.s32.totalorder %s109, 0
      %p975 = por %p973, %p974
      %p976 = scmp.ne.s32.totalorder %s964, %s965
      %p977 = scmp.eq.s32.totalorder %s110, 1
      %p978 = por %p976, %p977
      %p980 = scmp.ne.s32.totalorder %s965, %s979
      %p981 = scmp.eq.s32.totalorder %s110, 0
      %p982 = por %p980, %p981
      %s984 = sadd.s32 %s983, 1
      %p987 = scmp.eq.s32.totalorder %s104, 1
      %p988 = scmp.ne.s32.totalorder %s983, %s985
      %p989 = scmp.eq.s32.totalorder %s104, 0
      %p990 = por %p988, %p989
      %p991 = scmp.ne.s32.totalorder %s983, %s985
      %p992 = scmp.eq.s32.totalorder %s109, 1
      %p993 = por %p991, %p992
      %p994 = scmp.ne.s32.totalorder %s985, %s986
      %p995 = scmp.eq.s32.totalorder %s109, 0
      %p996 = por %p994, %p995
      %p997 = scmp.ne.s32.totalorder %s985, %s986
      %p998 = scmp.eq.s32.totalorder %s110, 1
      %p999 = por %p997, %p998
      %p1001 = scmp.ne.s32.totalorder %s986, %s1000
      %p1002 = scmp.eq.s32.totalorder %s110, 0
      %p1003 = por %p1001, %p1002
      %s1005 = sadd.s32 %s1004, 1
      %p1008 = scmp.eq.s32.totalorder %s104, 1
      %p1009 = scmp.ne.s32.totalorder %s1004, %s1006
      %p1010 = scmp.eq.s32.totalorder %s104, 0
      %p1011 = por %p1009, %p1010
      %p1012 = scmp.ne.s32.totalorder %s1004, %s1006
      %p1013 = scmp.eq.s32.totalorder %s109, 1
      %p1014 = por %p1012, %p1013
      %p1015 = scmp.ne.s32.totalorder %s1006, %s1007
      %p1016 = scmp.eq.s32.totalorder %s109, 0
      %p1017 = por %p1015, %p1016
      %p1018 = scmp.ne.s32.totalorder %s1006, %s1007
      %p1019 = scmp.eq.s32.totalorder %s110, 1
      %p1020 = por %p1018, %p1019
      %p1022 = scmp.ne.s32.totalorder %s1007, %s1021
      %p1023 = scmp.eq.s32.totalorder %s110, 0
      %p1024 = por %p1022, %p1023
      %s1026 = sadd.s32 %s1025, 1
      %p1029 = scmp.eq.s32.totalorder %s104, 1
      %p1030 = scmp.ne.s32.totalorder %s1025, %s1027
      %p1031 = scmp.eq.s32.totalorder %s104, 0
      %p1032 = por %p1030, %p1031
      %p1033 = scmp.ne.s32.totalorder %s1025, %s1027
      %p1034 = scmp.eq.s32.totalorder %s109, 1
      %p1035 = por %p1033, %p1034
      %p1036 = scmp.ne.s32.totalorder %s1027, %s1028
      %p1037 = scmp.eq.s32.totalorder %s109, 0
      %p1038 = por %p1036, %p1037
      %p1039 = scmp.ne.s32.totalorder %s1027, %s1028
      %p1040 = scmp.eq.s32.totalorder %s110, 1
      %p1041 = por %p1039, %p1040
      %p1043 = scmp.ne.s32.totalorder %s1028, %s1042
      %p1044 = scmp.eq.s32.totalorder %s110, 0
      %p1045 = por %p1043, %p1044
      %s1047 = sadd.s32 %s1046, 1
      %p1050 = scmp.eq.s32.totalorder %s104, 1
      %p1051 = scmp.ne.s32.totalorder %s1046, %s1048
      %p1052 = scmp.eq.s32.totalorder %s104, 0
      %p1053 = por %p1051, %p1052
      %p1054 = scmp.ne.s32.totalorder %s1046, %s1048
      %p1055 = scmp.eq.s32.totalorder %s109, 1
      %p1056 = por %p1054, %p1055
      %p1057 = scmp.ne.s32.totalorder %s1048, %s1049
      %p1058 = scmp.eq.s32.totalorder %s109, 0
      %p1059 = por %p1057, %p1058
      %p1060 = scmp.ne.s32.totalorder %s1048, %s1049
      %p1061 = scmp.eq.s32.totalorder %s110, 1
      %p1062 = por %p1060, %p1061
      %p1064 = scmp.ne.s32.totalorder %s1049, %s1063
      %p1065 = scmp.eq.s32.totalorder %s110, 0
      %p1066 = por %p1064, %p1065
      %s1068 = sadd.s32 %s1067, 1
      %p1071 = scmp.eq.s32.totalorder %s104, 1
      %p1072 = scmp.ne.s32.totalorder %s1067, %s1069
      %p1073 = scmp.eq.s32.totalorder %s104, 0
      %p1074 = por %p1072, %p1073
      %p1075 = scmp.ne.s32.totalorder %s1067, %s1069
      %p1076 = scmp.eq.s32.totalorder %s109, 1
      %p1077 = por %p1075, %p1076
      %p1078 = scmp.ne.s32.totalorder %s1069, %s1070
      %p1079 = scmp.eq.s32.totalorder %s109, 0
      %p1080 = por %p1078, %p1079
      %p1081 = scmp.ne.s32.totalorder %s1069, %s1070
      %p1082 = scmp.eq.s32.totalorder %s110, 1
      %p1083 = por %p1081, %p1082
      %p1085 = scmp.ne.s32.totalorder %s1070, %s1084
      %p1086 = scmp.eq.s32.totalorder %s110, 0
      %p1087 = por %p1085, %p1086
      %s1089 = sadd.s32 %s1088, 1
      %p1092 = scmp.eq.s32.totalorder %s104, 1
      %p1093 = scmp.ne.s32.totalorder %s1088, %s1090
      %p1094 = scmp.eq.s32.totalorder %s104, 0
      %p1095 = por %p1093, %p1094
      %p1096 = scmp.ne.s32.totalorder %s1088, %s1090
      %p1097 = scmp.eq.s32.totalorder %s109, 1
      %p1098 = por %p1096, %p1097
      %p1099 = scmp.ne.s32.totalorder %s1090, %s1091
      %p1100 = scmp.eq.s32.totalorder %s109, 0
      %p1101 = por %p1099, %p1100
      %p1102 = scmp.ne.s32.totalorder %s1090, %s1091
      %p1103 = scmp.eq.s32.totalorder %s110, 1
      %p1104 = por %p1102, %p1103
      %p1106 = scmp.ne.s32.totalorder %s1091, %s1105
      %p1107 = scmp.eq.s32.totalorder %s110, 0
      %p1108 = por %p1106, %p1107
      %s1109 = ssub.s32 %s104, %s111
      %p1110 = scmp.eq.s32.totalorder %s1109, 0
      %s1112 = sadd.s32 %s1111, 1
      %s1113 = scalar_select %p1110, %s1111, %s1112
      %p1116 = pneg %p1110
      %p1117 = scmp.eq.s32.totalorder %s104, 1
      %p1118 = por %p1116, %p1117
      %p1119 = scmp.ne.s32.totalorder %s1111, %s1114
      %p1120 = scmp.eq.s32.totalorder %s104, 0
      %p1121 = por %p1119, %p1120
      %p1122 = scmp.ne.s32.totalorder %s1111, %s1114
      %p1123 = scmp.eq.s32.totalorder %s109, 1
      %p1124 = por %p1122, %p1123
      %p1125 = scmp.ne.s32.totalorder %s1114, %s1115
      %p1126 = scmp.eq.s32.totalorder %s109, 0
      %p1127 = por %p1125, %p1126
      %p1128 = scmp.ne.s32.totalorder %s1114, %s1115
      %p1129 = scmp.eq.s32.totalorder %s110, 1
      %p1130 = por %p1128, %p1129
      %p1132 = scmp.ne.s32.totalorder %s1115, %s1131
      %p1133 = scmp.eq.s32.totalorder %s110, 0
      %p1134 = por %p1132, %p1133
      %p1135 = scmp.le.s32.totalorder 1, %s104
      %p1136 = scmp.lt.s32.totalorder %s104, 3
      %p1137 = pnand %p1135, %p1136
      %p1138 = pneg %p1137
      // Predicated region
      $region9: #{transformer_forward.1} parent=5 // pred_check
        _
      $region10: #{transformer_forward.1} parent=5 // pred_check_branch
        %1140 = sbr.rel (%p1137) target = $region12
      $region11: #{transformer_forward.1} parent=5 // pred_region
        %s1141 = ssub.s32 %s104, 1
        // Predicated region
        $region13: #{transformer_forward.1} parent=11 // pred_check
          %p1142 = pneg %p177
        $region14: #{transformer_forward.1} parent=11 // pred_check_branch
          %1144 = sbr.rel (%p1142) target = $region16
        $region15: #{transformer_forward.1} parent=11 // pred_region
          _
        $region16: #{transformer_forward.1} parent=11 // pred_fallthru
          _
        // Predicated region
        $region17: #{transformer_forward.1} parent=11 // pred_check
          %p1145 = pneg %p198
        $region18: #{transformer_forward.1} parent=11 // pred_check_branch
          %1147 = sbr.rel (%p1145) target = $region20
        $region19: #{transformer_forward.1} parent=11 // pred_region
          _
        $region20: #{transformer_forward.1} parent=11 // pred_fallthru
          _
        // Predicated region
        $region21: #{transformer_forward.1} parent=11 // pred_check
          %p1148 = pneg %p219
        $region22: #{transformer_forward.1} parent=11 // pred_check_branch
          %1150 = sbr.rel (%p1148) target = $region24
        $region23: #{transformer_forward.1} parent=11 // pred_region
          _
        $region24: #{transformer_forward.1} parent=11 // pred_fallthru
          _
        // Predicated region
        $region25: #{transformer_forward.1} parent=11 // pred_check
          %p1151 = pneg %p240
        $region26: #{transformer_forward.1} parent=11 // pred_check_branch
          %1153 = sbr.rel (%p1151) target = $region28
        $region27: #{transformer_forward.1} parent=11 // pred_region
          _
        $region28: #{transformer_forward.1} parent=11 // pred_fallthru
          _
        // Predicated region
        $region29: #{transformer_forward.1} parent=11 // pred_check
          %p1154 = pneg %p261
        $region30: #{transformer_forward.1} parent=11 // pred_check_branch
          %1156 = sbr.rel (%p1154) target = $region32
        $region31: #{transformer_forward.1} parent=11 // pred_region
          _
        $region32: #{transformer_forward.1} parent=11 // pred_fallthru
          _
        // Predicated region
        $region33: #{transformer_forward.1} parent=11 // pred_check
          %p1157 = pneg %p282
        $region34: #{transformer_forward.1} parent=11 // pred_check_branch
          %1159 = sbr.rel (%p1157) target = $region36
        $region35: #{transformer_forward.1} parent=11 // pred_region
          _
        $region36: #{transformer_forward.1} parent=11 // pred_fallthru
          _
        // Predicated region
        $region37: #{transformer_forward.1} parent=11 // pred_check
          %p1160 = pneg %p303
        $region38: #{transformer_forward.1} parent=11 // pred_check_branch
          %1162 = sbr.rel (%p1160) target = $region40
        $region39: #{transformer_forward.1} parent=11 // pred_region
          _
        $region40: #{transformer_forward.1} parent=11 // pred_fallthru
          _
        // Predicated region
        $region41: #{transformer_forward.1} parent=11 // pred_check
          %p1163 = pneg %p324
        $region42: #{transformer_forward.1} parent=11 // pred_check_branch
          %1165 = sbr.rel (%p1163) target = $region44
        $region43: #{transformer_forward.1} parent=11 // pred_region
          _
        $region44: #{transformer_forward.1} parent=11 // pred_fallthru
          _
        // Predicated region
        $region45: #{transformer_forward.1} parent=11 // pred_check
          %p1166 = pneg %p345
        $region46: #{transformer_forward.1} parent=11 // pred_check_branch
          %1168 = sbr.rel (%p1166) target = $region48
        $region47: #{transformer_forward.1} parent=11 // pred_region
          _
        $region48: #{transformer_forward.1} parent=11 // pred_fallthru
          _
        // Predicated region
        $region49: #{transformer_forward.1} parent=11 // pred_check
          %p1169 = pneg %p366
        $region50: #{transformer_forward.1} parent=11 // pred_check_branch
          %1171 = sbr.rel (%p1169) target = $region52
        $region51: #{transformer_forward.1} parent=11 // pred_region
          _
        $region52: #{transformer_forward.1} parent=11 // pred_fallthru
          _
        // Predicated region
        $region53: #{transformer_forward.1} parent=11 // pred_check
          %p1172 = pneg %p387
        $region54: #{transformer_forward.1} parent=11 // pred_check_branch
          %1174 = sbr.rel (%p1172) target = $region56
        $region55: #{transformer_forward.1} parent=11 // pred_region
          _
        $region56: #{transformer_forward.1} parent=11 // pred_fallthru
          _
        // Predicated region
        $region57: #{transformer_forward.1} parent=11 // pred_check
          %p1175 = pneg %p408
        $region58: #{transformer_forward.1} parent=11 // pred_check_branch
          %1177 = sbr.rel (%p1175) target = $region60
        $region59: #{transformer_forward.1} parent=11 // pred_region
          _
        $region60: #{transformer_forward.1} parent=11 // pred_fallthru
          _
        // Predicated region
        $region61: #{transformer_forward.1} parent=11 // pred_check
          %p1178 = pneg %p429
        $region62: #{transformer_forward.1} parent=11 // pred_check_branch
          %1180 = sbr.rel (%p1178) target = $region64
        $region63: #{transformer_forward.1} parent=11 // pred_region
          _
        $region64: #{transformer_forward.1} parent=11 // pred_fallthru
          _
        // Predicated region
        $region65: #{transformer_forward.1} parent=11 // pred_check
          %p1181 = pneg %p450
        $region66: #{transformer_forward.1} parent=11 // pred_check_branch
          %1183 = sbr.rel (%p1181) target = $region68
        $region67: #{transformer_forward.1} parent=11 // pred_region
          _
        $region68: #{transformer_forward.1} parent=11 // pred_fallthru
          _
        // Predicated region
        $region69: #{transformer_forward.1} parent=11 // pred_check
          %p1184 = pneg %p471
        $region70: #{transformer_forward.1} parent=11 // pred_check_branch
          %1186 = sbr.rel (%p1184) target = $region72
        $region71: #{transformer_forward.1} parent=11 // pred_region
          _
        $region72: #{transformer_forward.1} parent=11 // pred_fallthru
          _
        // Predicated region
        $region73: #{transformer_forward.1} parent=11 // pred_check
          %p1187 = pneg %p492
        $region74: #{transformer_forward.1} parent=11 // pred_check_branch
          %1189 = sbr.rel (%p1187) target = $region76
        $region75: #{transformer_forward.1} parent=11 // pred_region
          _
        $region76: #{transformer_forward.1} parent=11 // pred_fallthru
          _
        // Predicated region
        $region77: #{transformer_forward.1} parent=11 // pred_check
          %p1190 = pneg %p513
        $region78: #{transformer_forward.1} parent=11 // pred_check_branch
          %1192 = sbr.rel (%p1190) target = $region80
        $region79: #{transformer_forward.1} parent=11 // pred_region
          _
        $region80: #{transformer_forward.1} parent=11 // pred_fallthru
          _
        // Predicated region
        $region81: #{transformer_forward.1} parent=11 // pred_check
          %p1193 = pneg %p534
        $region82: #{transformer_forward.1} parent=11 // pred_check_branch
          %1195 = sbr.rel (%p1193) target = $region84
        $region83: #{transformer_forward.1} parent=11 // pred_region
          _
        $region84: #{transformer_forward.1} parent=11 // pred_fallthru
          _
        // Predicated region
        $region85: #{transformer_forward.1} parent=11 // pred_check
          %p1196 = pneg %p555
        $region86: #{transformer_forward.1} parent=11 // pred_check_branch
          %1198 = sbr.rel (%p1196) target = $region88
        $region87: #{transformer_forward.1} parent=11 // pred_region
          _
        $region88: #{transformer_forward.1} parent=11 // pred_fallthru
          _
        // Predicated region
        $region89: #{transformer_forward.1} parent=11 // pred_check
          %p1199 = pneg %p576
        $region90: #{transformer_forward.1} parent=11 // pred_check_branch
          %1201 = sbr.rel (%p1199) target = $region92
        $region91: #{transformer_forward.1} parent=11 // pred_region
          _
        $region92: #{transformer_forward.1} parent=11 // pred_fallthru
          _
        // Predicated region
        $region93: #{transformer_forward.1} parent=11 // pred_check
          %p1202 = pneg %p597
        $region94: #{transformer_forward.1} parent=11 // pred_check_branch
          %1204 = sbr.rel (%p1202) target = $region96
        $region95: #{transformer_forward.1} parent=11 // pred_region
          _
        $region96: #{transformer_forward.1} parent=11 // pred_fallthru
          _
        // Predicated region
        $region97: #{transformer_forward.1} parent=11 // pred_check
          %p1205 = pneg %p618
        $region98: #{transformer_forward.1} parent=11 // pred_check_branch
          %1207 = sbr.rel (%p1205) target = $region100
        $region99: #{transformer_forward.1} parent=11 // pred_region
          _
        $region100: #{transformer_forward.1} parent=11 // pred_fallthru
          _
        // Predicated region
        $region101: #{transformer_forward.1} parent=11 // pred_check
          %p1208 = pneg %p639
        $region102: #{transformer_forward.1} parent=11 // pred_check_branch
          %1210 = sbr.rel (%p1208) target = $region104
        $region103: #{transformer_forward.1} parent=11 // pred_region
          _
        $region104: #{transformer_forward.1} parent=11 // pred_fallthru
          _
        // Predicated region
        $region105: #{transformer_forward.1} parent=11 // pred_check
          %p1211 = pneg %p660
        $region106: #{transformer_forward.1} parent=11 // pred_check_branch
          %1213 = sbr.rel (%p1211) target = $region108
        $region107: #{transformer_forward.1} parent=11 // pred_region
          _
        $region108: #{transformer_forward.1} parent=11 // pred_fallthru
          _
        // Predicated region
        $region109: #{transformer_forward.1} parent=11 // pred_check
          %p1214 = pneg %p681
        $region110: #{transformer_forward.1} parent=11 // pred_check_branch
          %1216 = sbr.rel (%p1214) target = $region112
        $region111: #{transformer_forward.1} parent=11 // pred_region
          _
        $region112: #{transformer_forward.1} parent=11 // pred_fallthru
          _
        // Predicated region
        $region113: #{transformer_forward.1} parent=11 // pred_check
          %p1217 = pneg %p702
        $region114: #{transformer_forward.1} parent=11 // pred_check_branch
          %1219 = sbr.rel (%p1217) target = $region116
        $region115: #{transformer_forward.1} parent=11 // pred_region
          _
        $region116: #{transformer_forward.1} parent=11 // pred_fallthru
          _
        // Predicated region
        $region117: #{transformer_forward.1} parent=11 // pred_check
          %p1220 = pneg %p723
        $region118: #{transformer_forward.1} parent=11 // pred_check_branch
          %1222 = sbr.rel (%p1220) target = $region120
        $region119: #{transformer_forward.1} parent=11 // pred_region
          _
        $region120: #{transformer_forward.1} parent=11 // pred_fallthru
          _
        // Predicated region
        $region121: #{transformer_forward.1} parent=11 // pred_check
          %p1223 = pneg %p744
        $region122: #{transformer_forward.1} parent=11 // pred_check_branch
          %1225 = sbr.rel (%p1223) target = $region124
        $region123: #{transformer_forward.1} parent=11 // pred_region
          _
        $region124: #{transformer_forward.1} parent=11 // pred_fallthru
          _
        // Predicated region
        $region125: #{transformer_forward.1} parent=11 // pred_check
          %p1226 = pneg %p765
        $region126: #{transformer_forward.1} parent=11 // pred_check_branch
          %1228 = sbr.rel (%p1226) target = $region128
        $region127: #{transformer_forward.1} parent=11 // pred_region
          _
        $region128: #{transformer_forward.1} parent=11 // pred_fallthru
          _
        // Predicated region
        $region129: #{transformer_forward.1} parent=11 // pred_check
          %p1229 = pneg %p786
        $region130: #{transformer_forward.1} parent=11 // pred_check_branch
          %1231 = sbr.rel (%p1229) target = $region132
        $region131: #{transformer_forward.1} parent=11 // pred_region
          _
        $region132: #{transformer_forward.1} parent=11 // pred_fallthru
          _
        // Predicated region
        $region133: #{transformer_forward.1} parent=11 // pred_check
          %p1232 = pneg %p807
        $region134: #{transformer_forward.1} parent=11 // pred_check_branch
          %1234 = sbr.rel (%p1232) target = $region136
        $region135: #{transformer_forward.1} parent=11 // pred_region
          _
        $region136: #{transformer_forward.1} parent=11 // pred_fallthru
          _
        // Predicated region
        $region137: #{transformer_forward.1} parent=11 // pred_check
          %p1235 = pneg %p828
        $region138: #{transformer_forward.1} parent=11 // pred_check_branch
          %1237 = sbr.rel (%p1235) target = $region140
        $region139: #{transformer_forward.1} parent=11 // pred_region
          _
        $region140: #{transformer_forward.1} parent=11 // pred_fallthru
          _
        // Predicated region
        $region141: #{transformer_forward.1} parent=11 // pred_check
          %p1238 = pneg %p849
        $region142: #{transformer_forward.1} parent=11 // pred_check_branch
          %1240 = sbr.rel (%p1238) target = $region144
        $region143: #{transformer_forward.1} parent=11 // pred_region
          _
        $region144: #{transformer_forward.1} parent=11 // pred_fallthru
          _
        // Predicated region
        $region145: #{transformer_forward.1} parent=11 // pred_check
          %p1241 = pneg %p870
        $region146: #{transformer_forward.1} parent=11 // pred_check_branch
          %1243 = sbr.rel (%p1241) target = $region148
        $region147: #{transformer_forward.1} parent=11 // pred_region
          _
        $region148: #{transformer_forward.1} parent=11 // pred_fallthru
          _
        // Predicated region
        $region149: #{transformer_forward.1} parent=11 // pred_check
          %p1244 = pneg %p891
        $region150: #{transformer_forward.1} parent=11 // pred_check_branch
          %1246 = sbr.rel (%p1244) target = $region152
        $region151: #{transformer_forward.1} parent=11 // pred_region
          _
        $region152: #{transformer_forward.1} parent=11 // pred_fallthru
          _
        // Predicated region
        $region153: #{transformer_forward.1} parent=11 // pred_check
          %p1247 = pneg %p912
        $region154: #{transformer_forward.1} parent=11 // pred_check_branch
          %1249 = sbr.rel (%p1247) target = $region156
        $region155: #{transformer_forward.1} parent=11 // pred_region
          _
        $region156: #{transformer_forward.1} parent=11 // pred_fallthru
          _
        // Predicated region
        $region157: #{transformer_forward.1} parent=11 // pred_check
          %p1250 = pneg %p933
        $region158: #{transformer_forward.1} parent=11 // pred_check_branch
          %1252 = sbr.rel (%p1250) target = $region160
        $region159: #{transformer_forward.1} parent=11 // pred_region
          _
        $region160: #{transformer_forward.1} parent=11 // pred_fallthru
          _
        // Predicated region
        $region161: #{transformer_forward.1} parent=11 // pred_check
          %p1253 = pneg %p954
        $region162: #{transformer_forward.1} parent=11 // pred_check_branch
          %1255 = sbr.rel (%p1253) target = $region164
        $region163: #{transformer_forward.1} parent=11 // pred_region
          _
        $region164: #{transformer_forward.1} parent=11 // pred_fallthru
          _
        // Predicated region
        $region165: #{transformer_forward.1} parent=11 // pred_check
          %p1256 = pneg %p975
        $region166: #{transformer_forward.1} parent=11 // pred_check_branch
          %1258 = sbr.rel (%p1256) target = $region168
        $region167: #{transformer_forward.1} parent=11 // pred_region
          _
        $region168: #{transformer_forward.1} parent=11 // pred_fallthru
          _
        // Predicated region
        $region169: #{transformer_forward.1} parent=11 // pred_check
          %p1259 = pneg %p996
        $region170: #{transformer_forward.1} parent=11 // pred_check_branch
          %1261 = sbr.rel (%p1259) target = $region172
        $region171: #{transformer_forward.1} parent=11 // pred_region
          _
        $region172: #{transformer_forward.1} parent=11 // pred_fallthru
          _
        // Predicated region
        $region173: #{transformer_forward.1} parent=11 // pred_check
          %p1262 = pneg %p1017
        $region174: #{transformer_forward.1} parent=11 // pred_check_branch
          %1264 = sbr.rel (%p1262) target = $region176
        $region175: #{transformer_forward.1} parent=11 // pred_region
          _
        $region176: #{transformer_forward.1} parent=11 // pred_fallthru
          _
        // Predicated region
        $region177: #{transformer_forward.1} parent=11 // pred_check
          %p1265 = pneg %p1038
        $region178: #{transformer_forward.1} parent=11 // pred_check_branch
          %1267 = sbr.rel (%p1265) target = $region180
        $region179: #{transformer_forward.1} parent=11 // pred_region
          _
        $region180: #{transformer_forward.1} parent=11 // pred_fallthru
          _
        // Predicated region
        $region181: #{transformer_forward.1} parent=11 // pred_check
          %p1268 = pneg %p1059
        $region182: #{transformer_forward.1} parent=11 // pred_check_branch
          %1270 = sbr.rel (%p1268) target = $region184
        $region183: #{transformer_forward.1} parent=11 // pred_region
          _
        $region184: #{transformer_forward.1} parent=11 // pred_fallthru
          _
        // Predicated region
        $region185: #{transformer_forward.1} parent=11 // pred_check
          %p1271 = pneg %p1080
        $region186: #{transformer_forward.1} parent=11 // pred_check_branch
          %1273 = sbr.rel (%p1271) target = $region188
        $region187: #{transformer_forward.1} parent=11 // pred_region
          _
        $region188: #{transformer_forward.1} parent=11 // pred_fallthru
          _
        // Predicated region
        $region189: #{transformer_forward.1} parent=11 // pred_check
          %p1274 = pneg %p1101
        $region190: #{transformer_forward.1} parent=11 // pred_check_branch
          %1276 = sbr.rel (%p1274) target = $region192
        $region191: #{transformer_forward.1} parent=11 // pred_region
          _
        $region192: #{transformer_forward.1} parent=11 // pred_fallthru
          _
      $region12: #{transformer_forward.1} parent=5 // pred_fallthru
        _
      %p1277 = scmp.lt.s32.totalorder %s104, 2
      // Predicated region
      $region193: #{transformer_forward.1} parent=5 // pred_check
        %p1278 = pneg %p1277
      $region194: #{transformer_forward.1} parent=5 // pred_check_branch
        %1280 = sbr.rel (%p1278) target = $region196
      $region195: #{transformer_forward.1} parent=5 // pred_region
        // Predicated region
        $region197: #{transformer_forward.1} parent=195 // pred_check
          %p1281 = pneg %p124
        $region198: #{transformer_forward.1} parent=195 // pred_check_branch
          %1283 = sbr.rel (%p1281) target = $region200
        $region199: #{transformer_forward.1} parent=195 // pred_region
          %p1284 = scmp.lt.s32.totalorder %s104, 1
          %s1285 = scalar_select %p1284, %s104, 1
          %s1286 = smul.addr %s1285, 8
          %s1287 = scalar_lea.vmem %s1, %s1286
        $region200: #{transformer_forward.1} parent=195 // pred_fallthru
          _
        // Predicated region
        $region201: #{transformer_forward.1} parent=195 // pred_check
          %p1288 = pneg %p150
        $region202: #{transformer_forward.1} parent=195 // pred_check_branch
          %1290 = sbr.rel (%p1288) target = $region204
        $region203: #{transformer_forward.1} parent=195 // pred_region
          %p1291 = scmp.lt.s32.totalorder %s104, 1
          %s1292 = scalar_select %p1291, %s104, 1
          %s1293 = smul.addr %s1292, 8
          %s1294 = scalar_lea.vmem %s3, %s1293
        $region204: #{transformer_forward.1} parent=195 // pred_fallthru
          _
      $region196: #{transformer_forward.1} parent=5 // pred_fallthru
        _
      %p1295 = scmp.le.s32.totalorder 1, %s104
      %p1296 = scmp.lt.s32.totalorder %s104, 3
      %p1297 = pnand %p1295, %p1296
      %p1298 = pneg %p1297
      // Predicated region
      $region205: #{transformer_forward.1} parent=5 // pred_check
        _
      $region206: #{transformer_forward.1} parent=5 // pred_check_branch
        %1300 = sbr.rel (%p1297) target = $region208
      $region207: #{transformer_forward.1} parent=5 // pred_region
        %s1301 = ssub.s32 %s104, 1
        %p1302 = scmp.lt.s32.totalorder %s109, 1
        %s1303 = scalar_select %p1302, %s109, 1
        %s1304 = smul.addr %s1303, 8
        %s1305 = scalar_lea.vmem %s1, %s1304
        %p1306 = pneg %p130
        %p1307 = pneg %p127
        %p1308 = scmp.lt.s32.totalorder %s109, 1
        %s1309 = scalar_select %p1308, %s109, 1
        %s1310 = smul.addr %s1309, 8
        %s1311 = scalar_lea.vmem %s3, %s1310
        %p1312 = pneg %p156
        %p1313 = pneg %p153
        %p1314 = pneg %p177
        %p1315 = pneg %p174
        %p1316 = pneg %p198
        %p1317 = pneg %p195
        %p1318 = pneg %p219
        %p1319 = pneg %p216
        %p1320 = pneg %p240
        %p1321 = pneg %p237
        %p1322 = pneg %p261
        %p1323 = pneg %p258
        %p1324 = pneg %p282
        %p1325 = pneg %p279
        %p1326 = pneg %p303
        %p1327 = pneg %p300
        %p1328 = pneg %p324
        %p1329 = pneg %p321
        %p1330 = pneg %p345
        %p1331 = pneg %p342
        %p1332 = pneg %p366
        %p1333 = pneg %p363
        %p1334 = pneg %p387
        %p1335 = pneg %p384
        %p1336 = pneg %p408
        %p1337 = pneg %p405
        %p1338 = pneg %p429
        %p1339 = pneg %p426
        %p1340 = pneg %p450
        %p1341 = pneg %p447
        %p1342 = pneg %p471
        %p1343 = pneg %p468
        %p1344 = pneg %p492
        %p1345 = pneg %p489
        %p1346 = pneg %p513
        %p1347 = pneg %p510
        %p1348 = pneg %p534
        %p1349 = pneg %p531
        %p1350 = pneg %p555
        %p1351 = pneg %p552
        %p1352 = pneg %p576
        %p1353 = pneg %p573
        %p1354 = pneg %p597
        %p1355 = pneg %p594
        %p1356 = pneg %p618
        %p1357 = pneg %p615
        %p1358 = pneg %p639
        %p1359 = pneg %p636
        %p1360 = pneg %p660
        %p1361 = pneg %p657
        %p1362 = pneg %p681
        %p1363 = pneg %p678
        %p1364 = pneg %p702
        %p1365 = pneg %p699
        %p1366 = pneg %p723
        %p1367 = pneg %p720
        %p1368 = pneg %p744
        %p1369 = pneg %p741
        %p1370 = pneg %p765
        %p1371 = pneg %p762
        %p1372 = pneg %p786
        %p1373 = pneg %p783
        %p1374 = pneg %p807
        %p1375 = pneg %p804
        %p1376 = pneg %p828
        %p1377 = pneg %p825
        %p1378 = pneg %p849
        %p1379 = pneg %p846
        %p1380 = pneg %p870
        %p1381 = pneg %p867
        %p1382 = pneg %p891
        %p1383 = pneg %p888
        %p1384 = pneg %p912
        %p1385 = pneg %p909
        %p1386 = pneg %p933
        %p1387 = pneg %p930
        %p1388 = pneg %p954
        %p1389 = pneg %p951
        %p1390 = pneg %p975
        %p1391 = pneg %p972
        %p1392 = pneg %p996
        %p1393 = pneg %p993
        %p1394 = pneg %p1017
        %p1395 = pneg %p1014
        %p1396 = pneg %p1038
        %p1397 = pneg %p1035
        %p1398 = pneg %p1059
        %p1399 = pneg %p1056
        %p1400 = pneg %p1080
        %p1401 = pneg %p1077
        %p1402 = pneg %p1101
        %p1403 = pneg %p1098
        %p1404 = pneg %p1127
        %p1405 = pneg %p1124
        %s1406 = sand.u32 %s1114, 1
        %s1407 = scalar_lea.sflag [#allocation3], %s1406
        %s1408 = sand.u32 %s1114, 1
        %s1409 = smul.addr %s1408, 8
        %s1410 = scalar_lea.vmem [#allocation2], %s1409
        %p1411 = scmp.lt.s32.totalorder %s109, 1
        %s1412 = scalar_select %p1411, %s109, 1
        %s1413 = smul.addr %s1412, 8
        %s1414 = scalar_lea.vmem %s1, %s1413
        %p1415 = scmp.lt.s32.totalorder %s109, 1
        %s1416 = scalar_select %p1415, %s109, 1
        %s1417 = smul.addr %s1416, 8
        %s1418 = scalar_lea.vmem %s3, %s1417
        %v1419 = vld [vmem:[%s5] sm:$0xff]
        %v1420 = vlaneseq
        %v1421 = vshrl.u32 %v1420, 7
        %v1422 = vlaneseq
        %v1423 = vand.u32 %v1422, 127
        %vm1424 = vcmp.le.s32.totalorder %v1423, %v1421
        %v1425 = vld [vmem:[%s1414] sm:$0xff]
        %v1426 = vadd.f32 %v1425, %v1419
        %v1427 = vld [vmem:[%s7] sm:$0xff]
        %v1428 = vld [vmem:[%s7 + $0x8] sm:$0xff]
        %v1429 = vld [vmem:[%s7 + $0x10] sm:$0xff]
        %v1430 = vld [vmem:[%s7 + $0x18] sm:$0xff]
        %v1431 = vld [vmem:[%s7 + $0x20] sm:$0xff]
        %v1432 = vld [vmem:[%s7 + $0x28] sm:$0xff]
        %v1433 = vld [vmem:[%s7 + $0x30] sm:$0xff]
        %v1434 = vld [vmem:[%s7 + $0x38] sm:$0xff]
        %v1435 = vld [vmem:[%s9] sm:$0x1]
        %v1436 = vld [vmem:[%s9 + $0x1] sm:$0x1]
        %v1437 = vld [vmem:[%s11] sm:$0xff]
        %v1438 = vld [vmem:[%s11 + $0x8] sm:$0xff]
        %v1439 = vld [vmem:[%s11 + $0x10] sm:$0xff]
        %v1440 = vld [vmem:[%s11 + $0x18] sm:$0xff]
        %v1441 = vld [vmem:[%s11 + $0x20] sm:$0xff]
        %v1442 = vld [vmem:[%s11 + $0x28] sm:$0xff]
        %v1443 = vld [vmem:[%s11 + $0x30] sm:$0xff]
        %v1444 = vld [vmem:[%s11 + $0x38] sm:$0xff]
        %v1445 = vld [vmem:[%s13] sm:$0x1]
        %v1446 = vld [vmem:[%s13 + $0x1] sm:$0x1]
        %v1447 = vld [vmem:[%s15] sm:$0xff]
        %v1448 = vld [vmem:[%s15 + $0x8] sm:$0xff]
        %v1449 = vld [vmem:[%s15 + $0x10] sm:$0xff]
        %v1450 = vld [vmem:[%s15 + $0x18] sm:$0xff]
        %v1451 = vld [vmem:[%s15 + $0x20] sm:$0xff]
        %v1452 = vld [vmem:[%s15 + $0x28] sm:$0xff]
        %v1453 = vld [vmem:[%s15 + $0x30] sm:$0xff]
        %v1454 = vld [vmem:[%s15 + $0x38] sm:$0xff]
        %v1455 = vld [vmem:[%s17] sm:$0x1]
        %v1456 = vld [vmem:[%s17 + $0x1] sm:$0x1]
        %v1457 = vld [vmem:[%s19] sm:$0xff]
        %v1458 = vld [vmem:[%s19 + $0x8] sm:$0xff]
        %v1459 = vld [vmem:[%s19 + $0x10] sm:$0xff]
        %v1460 = vld [vmem:[%s19 + $0x18] sm:$0xff]
        %v1461 = vld [vmem:[%s21] sm:$0x1]
        %v1464 = vlaneseq
        %v1465 = vshrl.u32 %v1464, 7
        %v1466 = vsub.s32 0, %v1465
        %v1467 = vrot.slane %v1435, %v1466
        %v1468 = vlaneseq
        %v1469 = vshrl.u32 %v1468, 7
        %v1470 = vsub.s32 0, %v1469
        %v1471 = vrot.slane %v1436, %v1470
        %vm1474 = vcmask 261120
        %v1476 = vsel %vm1474, %v1426, 0
        %1478 = vmatprep.subr.mxu0 0.0
        %1479 = vmatpush1.msra.mxu0 0.0
        %1480 = vmatprep.subr.mxu0 0.0
        %1481 = vmatpush1.msra.mxu0 0.0
        %1482 = vmatprep.subr.mxu0 0.0
        %1483 = vmatpush1.msra.mxu0 0.0
        %1484 = vmatprep.subr.mxu0 0.0
        %1485 = vmatpush1.msra.mxu0 0.0
        %1486 = vmatprep.subr.mxu0 0.0
        %1487 = vmatpush1.msra.mxu0 0.0
        %1488 = vmatprep.subr.mxu0 0.0
        %1489 = vmatpush1.msra.mxu0 0.0
        %1490 = vmatprep.subr.mxu0 0.0
        %1491 = vmatpush1.msra.mxu0 0.0
        %1492 = vmatprep.subr.mxu0 0.0
        %1493 = vmatpush1.msra.mxu0 0.0
        %1494 = vmatprep.subr.mxu0 0.0
        %1495 = vmatpush1.msra.mxu0 0.0
        %1496 = vmatprep.subr.mxu0 0.0
        %1497 = vmatpush1.msra.mxu0 0.0
        %1498 = vmatprep.subr.mxu0 0.0
        %1499 = vmatpush1.msra.mxu0 0.0
        %1500 = vmatprep.subr.mxu0 0.0
        %1501 = vmatpush1.msra.mxu0 0.0
        %1502 = vmatprep.subr.mxu0 0.0
        %1503 = vmatpush1.msra.mxu0 %v1430
        %1504 = vmatprep.subr.mxu0 0.0
        %1505 = vmatpush1.msra.mxu0 %v1429
        %1506 = vmatprep.subr.mxu0 0.0
        %1507 = vmatpush1.msra.mxu0 %v1428
        %1508 = vmatprep.subr.mxu0 0.0
        %1509 = vmatpush1.msra.mxu0 %v1427
        %1510 = vmatprep.subr.mxu0 0.0
        %1511 = vmatpush2.msra.mxu0 0.0
        %1512 = vmatprep.subr.mxu0 0.0
        %1513 = vmatpush2.msra.mxu0 0.0
        %1514 = vmatprep.subr.mxu0 0.0
        %1515 = vmatpush2.msra.mxu0 0.0
        %1516 = vmatprep.subr.mxu0 0.0
        %1517 = vmatpush2.msra.mxu0 0.0
        %1518 = vmatprep.subr.mxu0 0.0
        %1519 = vmatpush2.msra.mxu0 0.0
        %1520 = vmatprep.subr.mxu0 0.0
        %1521 = vmatpush2.msra.mxu0 0.0
        %1522 = vmatprep.subr.mxu0 0.0
        %1523 = vmatpush2.msra.mxu0 0.0
        %1524 = vmatprep.subr.mxu0 0.0
        %1525 = vmatpush2.msra.mxu0 0.0
        %1526 = vmatprep.subr.mxu0 0.0
        %1527 = vmatpush2.msra.mxu0 0.0
        %1528 = vmatprep.subr.mxu0 0.0
        %1529 = vmatpush2.msra.mxu0 0.0
        %1530 = vmatprep.subr.mxu0 0.0
        %1531 = vmatpush2.msra.mxu0 0.0
        %1532 = vmatprep.subr.mxu0 0.0
        %1533 = vmatpush2.msra.mxu0 0.0
        %1534 = vmatprep.subr.mxu0 0.0
        %1535 = vmatpush2.msra.mxu0 0.0
        %1536 = vmatprep.subr.mxu0 0.0
        %1537 = vmatpush2.msra.mxu0 0.0
        %1538 = vmatprep.subr.mxu0 0.0
        %1539 = vmatpush2.msra.mxu0 0.0
        %1540 = vmatprep.subr.mxu0 0.0
        %1541 = vmatpush2.msra.mxu0 0.0
        %1542 = vmatprep.mubr.f32.mxu0 0.0
        %1543 = vmatmul.mubr.f32.gmra.mxu0 %v1476
        %v1544 = vpop.f32.mrf.mxu0
        %v1545 = vadd.f32 %v1467, %v1544
        %v1546 = vpop.f32.mrf.mxu0
        %1547 = vdwg.mxu0
        %1548 = vmatprep.subr.mxu0 0.0
        %1549 = vmatpush1.msra.mxu0 0.0
        %1550 = vmatprep.subr.mxu0 0.0
        %1551 = vmatpush1.msra.mxu0 0.0
        %1552 = vmatprep.subr.mxu0 0.0
        %1553 = vmatpush1.msra.mxu0 0.0
        %1554 = vmatprep.subr.mxu0 0.0
        %1555 = vmatpush1.msra.mxu0 0.0
        %1556 = vmatprep.subr.mxu0 0.0
        %1557 = vmatpush1.msra.mxu0 0.0
        %1558 = vmatprep.subr.mxu0 0.0
        %1559 = vmatpush1.msra.mxu0 0.0
        %1560 = vmatprep.subr.mxu0 0.0
        %1561 = vmatpush1.msra.mxu0 0.0
        %1562 = vmatprep.subr.mxu0 0.0
        %1563 = vmatpush1.msra.mxu0 0.0
        %1564 = vmatprep.subr.mxu0 0.0
        %1565 = vmatpush1.msra.mxu0 0.0
        %1566 = vmatprep.subr.mxu0 0.0
        %1567 = vmatpush1.msra.mxu0 0.0
        %1568 = vmatprep.subr.mxu0 0.0
        %1569 = vmatpush1.msra.mxu0 0.0
        %1570 = vmatprep.subr.mxu0 0.0
        %1571 = vmatpush1.msra.mxu0 0.0
        %1572 = vmatprep.subr.mxu0 0.0
        %1573 = vmatpush1.msra.mxu0 %v1434
        %1574 = vmatprep.subr.mxu0 0.0
        %1575 = vmatpush1.msra.mxu0 %v1433
        %1576 = vmatprep.subr.mxu0 0.0
        %1577 = vmatpush1.msra.mxu0 %v1432
        %1578 = vmatprep.subr.mxu0 0.0
        %1579 = vmatpush1.msra.mxu0 %v1431
        %1580 = vmatprep.subr.mxu0 0.0
        %1581 = vmatpush2.msra.mxu0 0.0
        %1582 = vmatprep.subr.mxu0 0.0
        %1583 = vmatpush2.msra.mxu0 0.0
        %1584 = vmatprep.subr.mxu0 0.0
        %1585 = vmatpush2.msra.mxu0 0.0
        %1586 = vmatprep.subr.mxu0 0.0
        %1587 = vmatpush2.msra.mxu0 0.0
        %1588 = vmatprep.subr.mxu0 0.0
        %1589 = vmatpush2.msra.mxu0 0.0
        %1590 = vmatprep.subr.mxu0 0.0
        %1591 = vmatpush2.msra.mxu0 0.0
        %1592 = vmatprep.subr.mxu0 0.0
        %1593 = vmatpush2.msra.mxu0 0.0
        %1594 = vmatprep.subr.mxu0 0.0
        %1595 = vmatpush2.msra.mxu0 0.0
        %1596 = vmatprep.subr.mxu0 0.0
        %1597 = vmatpush2.msra.mxu0 0.0
        %1598 = vmatprep.subr.mxu0 0.0
        %1599 = vmatpush2.msra.mxu0 0.0
        %1600 = vmatprep.subr.mxu0 0.0
        %1601 = vmatpush2.msra.mxu0 0.0
        %1602 = vmatprep.subr.mxu0 0.0
        %1603 = vmatpush2.msra.mxu0 0.0
        %1604 = vmatprep.subr.mxu0 0.0
        %1605 = vmatpush2.msra.mxu0 0.0
        %1606 = vmatprep.subr.mxu0 0.0
        %1607 = vmatpush2.msra.mxu0 0.0
        %1608 = vmatprep.subr.mxu0 0.0
        %1609 = vmatpush2.msra.mxu0 0.0
        %1610 = vmatprep.subr.mxu0 0.0
        %1611 = vmatpush2.msra.mxu0 0.0
        %1612 = vmatprep.mubr.f32.mxu0 0.0
        %1613 = vmatmul.mubr.f32.gmra.mxu0 %v1476
        %v1614 = vpop.f32.mrf.mxu0
        %v1615 = vadd.f32 %v1471, %v1614
        %v1616 = vpop.f32.mrf.mxu0
        %1617 = vdwg.mxu0
        %v1620 = vlaneseq
        %v1621 = vshrl.u32 %v1620, 7
        %v1622 = vsub.s32 0, %v1621
        %v1623 = vrot.slane %v1445, %v1622
        %v1624 = vlaneseq
        %v1625 = vshrl.u32 %v1624, 7
        %v1626 = vsub.s32 0, %v1625
        %v1627 = vrot.slane %v1446, %v1626
        %1630 = vmatprep.subr.mxu0 0.0
        %1631 = vmatpush1.msra.mxu0 0.0
        %1632 = vmatprep.subr.mxu0 0.0
        %1633 = vmatpush1.msra.mxu0 0.0
        %1634 = vmatprep.subr.mxu0 0.0
        %1635 = vmatpush1.msra.mxu0 0.0
        %1636 = vmatprep.subr.mxu0 0.0
        %1637 = vmatpush1.msra.mxu0 0.0
        %1638 = vmatprep.subr.mxu0 0.0
        %1639 = vmatpush1.msra.mxu0 0.0
        %1640 = vmatprep.subr.mxu0 0.0
        %1641 = vmatpush1.msra.mxu0 0.0
        %1642 = vmatprep.subr.mxu0 0.0
        %1643 = vmatpush1.msra.mxu0 0.0
        %1644 = vmatprep.subr.mxu0 0.0
        %1645 = vmatpush1.msra.mxu0 0.0
        %1646 = vmatprep.subr.mxu0 0.0
        %1647 = vmatpush1.msra.mxu0 0.0
        %1648 = vmatprep.subr.mxu0 0.0
        %1649 = vmatpush1.msra.mxu0 0.0
        %1650 = vmatprep.subr.mxu0 0.0
        %1651 = vmatpush1.msra.mxu0 0.0
        %1652 = vmatprep.subr.mxu0 0.0
        %1653 = vmatpush1.msra.mxu0 0.0
        %1654 = vmatprep.subr.mxu0 0.0
        %1655 = vmatpush1.msra.mxu0 %v1440
        %1656 = vmatprep.subr.mxu0 0.0
        %1657 = vmatpush1.msra.mxu0 %v1439
        %1658 = vmatprep.subr.mxu0 0.0
        %1659 = vmatpush1.msra.mxu0 %v1438
        %1660 = vmatprep.subr.mxu0 0.0
        %1661 = vmatpush1.msra.mxu0 %v1437
        %1662 = vmatprep.subr.mxu0 0.0
        %1663 = vmatpush2.msra.mxu0 0.0
        %1664 = vmatprep.subr.mxu0 0.0
        %1665 = vmatpush2.msra.mxu0 0.0
        %1666 = vmatprep.subr.mxu0 0.0
        %1667 = vmatpush2.msra.mxu0 0.0
        %1668 = vmatprep.subr.mxu0 0.0
        %1669 = vmatpush2.msra.mxu0 0.0
        %1670 = vmatprep.subr.mxu0 0.0
        %1671 = vmatpush2.msra.mxu0 0.0
        %1672 = vmatprep.subr.mxu0 0.0
        %1673 = vmatpush2.msra.mxu0 0.0
        %1674 = vmatprep.subr.mxu0 0.0
        %1675 = vmatpush2.msra.mxu0 0.0
        %1676 = vmatprep.subr.mxu0 0.0
        %1677 = vmatpush2.msra.mxu0 0.0
        %1678 = vmatprep.subr.mxu0 0.0
        %1679 = vmatpush2.msra.mxu0 0.0
        %1680 = vmatprep.subr.mxu0 0.0
        %1681 = vmatpush2.msra.mxu0 0.0
        %1682 = vmatprep.subr.mxu0 0.0
        %1683 = vmatpush2.msra.mxu0 0.0
        %1684 = vmatprep.subr.mxu0 0.0
        %1685 = vmatpush2.msra.mxu0 0.0
        %1686 = vmatprep.subr.mxu0 0.0
        %1687 = vmatpush2.msra.mxu0 0.0
        %1688 = vmatprep.subr.mxu0 0.0
        %1689 = vmatpush2.msra.mxu0 0.0
        %1690 = vmatprep.subr.mxu0 0.0
        %1691 = vmatpush2.msra.mxu0 0.0
        %1692 = vmatprep.subr.mxu0 0.0
        %1693 = vmatpush2.msra.mxu0 0.0
        %1694 = vmatprep.mubr.f32.mxu0 0.0
        %1695 = vmatmul.mubr.f32.gmra.mxu0 %v1476
        %v1696 = vpop.f32.mrf.mxu0
        %v1697 = vadd.f32 %v1623, %v1696
        %v1698 = vpop.f32.mrf.mxu0
        %1699 = vdwg.mxu0
        %1700 = vmatprep.subr.mxu0 0.0
        %1701 = vmatpush1.msra.mxu0 0.0
        %1702 = vmatprep.subr.mxu0 0.0
        %1703 = vmatpush1.msra.mxu0 0.0
        %1704 = vmatprep.subr.mxu0 0.0
        %1705 = vmatpush1.msra.mxu0 0.0
        %1706 = vmatprep.subr.mxu0 0.0
        %1707 = vmatpush1.msra.mxu0 0.0
        %1708 = vmatprep.subr.mxu0 0.0
        %1709 = vmatpush1.msra.mxu0 0.0
        %1710 = vmatprep.subr.mxu0 0.0
        %1711 = vmatpush1.msra.mxu0 0.0
        %1712 = vmatprep.subr.mxu0 0.0
        %1713 = vmatpush1.msra.mxu0 0.0
        %1714 = vmatprep.subr.mxu0 0.0
        %1715 = vmatpush1.msra.mxu0 0.0
        %1716 = vmatprep.subr.mxu0 0.0
        %1717 = vmatpush1.msra.mxu0 0.0
        %1718 = vmatprep.subr.mxu0 0.0
        %1719 = vmatpush1.msra.mxu0 0.0
        %1720 = vmatprep.subr.mxu0 0.0
        %1721 = vmatpush1.msra.mxu0 0.0
        %1722 = vmatprep.subr.mxu0 0.0
        %1723 = vmatpush1.msra.mxu0 0.0
        %1724 = vmatprep.subr.mxu0 0.0
        %1725 = vmatpush1.msra.mxu0 %v1444
        %1726 = vmatprep.subr.mxu0 0.0
        %1727 = vmatpush1.msra.mxu0 %v1443
        %1728 = vmatprep.subr.mxu0 0.0
        %1729 = vmatpush1.msra.mxu0 %v1442
        %1730 = vmatprep.subr.mxu0 0.0
        %1731 = vmatpush1.msra.mxu0 %v1441
        %1732 = vmatprep.subr.mxu0 0.0
        %1733 = vmatpush2.msra.mxu0 0.0
        %1734 = vmatprep.subr.mxu0 0.0
        %1735 = vmatpush2.msra.mxu0 0.0
        %1736 = vmatprep.subr.mxu0 0.0
        %1737 = vmatpush2.msra.mxu0 0.0
        %1738 = vmatprep.subr.mxu0 0.0
        %1739 = vmatpush2.msra.mxu0 0.0
        %1740 = vmatprep.subr.mxu0 0.0
        %1741 = vmatpush2.msra.mxu0 0.0
        %1742 = vmatprep.subr.mxu0 0.0
        %1743 = vmatpush2.msra.mxu0 0.0
        %1744 = vmatprep.subr.mxu0 0.0
        %1745 = vmatpush2.msra.mxu0 0.0
        %1746 = vmatprep.subr.mxu0 0.0
        %1747 = vmatpush2.msra.mxu0 0.0
        %1748 = vmatprep.subr.mxu0 0.0
        %1749 = vmatpush2.msra.mxu0 0.0
        %1750 = vmatprep.subr.mxu0 0.0
        %1751 = vmatpush2.msra.mxu0 0.0
        %1752 = vmatprep.subr.mxu0 0.0
        %1753 = vmatpush2.msra.mxu0 0.0
        %1754 = vmatprep.subr.mxu0 0.0
        %1755 = vmatpush2.msra.mxu0 0.0
        %1756 = vmatprep.subr.mxu0 0.0
        %1757 = vmatpush2.msra.mxu0 0.0
        %1758 = vmatprep.subr.mxu0 0.0
        %1759 = vmatpush2.msra.mxu0 0.0
        %1760 = vmatprep.subr.mxu0 0.0
        %1761 = vmatpush2.msra.mxu0 0.0
        %1762 = vmatprep.subr.mxu0 0.0
        %1763 = vmatpush2.msra.mxu0 0.0
        %1764 = vmatprep.mubr.f32.mxu0 0.0
        %1765 = vmatmul.mubr.f32.gmra.mxu0 %v1476
        %v1766 = vpop.f32.mrf.mxu0
        %v1767 = vadd.f32 %v1627, %v1766
        %v1768 = vpop.f32.mrf.mxu0
        %1769 = vdwg.mxu0
        %v1772 = vlaneseq
        %v1773 = vshrl.u32 %v1772, 7
        %v1774 = vsub.s32 0, %v1773
        %v1775 = vrot.slane %v1455, %v1774
        %v1776 = vlaneseq
        %v1777 = vshrl.u32 %v1776, 7
        %v1778 = vsub.s32 0, %v1777
        %v1779 = vrot.slane %v1456, %v1778
        %1782 = vmatprep.subr.mxu0 0.0
        %1783 = vmatpush1.msra.mxu0 0.0
        %1784 = vmatprep.subr.mxu0 0.0
        %1785 = vmatpush1.msra.mxu0 0.0
        %1786 = vmatprep.subr.mxu0 0.0
        %1787 = vmatpush1.msra.mxu0 0.0
        %1788 = vmatprep.subr.mxu0 0.0
        %1789 = vmatpush1.msra.mxu0 0.0
        %1790 = vmatprep.subr.mxu0 0.0
        %1791 = vmatpush1.msra.mxu0 0.0
        %1792 = vmatprep.subr.mxu0 0.0
        %1793 = vmatpush1.msra.mxu0 0.0
        %1794 = vmatprep.subr.mxu0 0.0
        %1795 = vmatpush1.msra.mxu0 0.0
        %1796 = vmatprep.subr.mxu0 0.0
        %1797 = vmatpush1.msra.mxu0 0.0
        %1798 = vmatprep.subr.mxu0 0.0
        %1799 = vmatpush1.msra.mxu0 0.0
        %1800 = vmatprep.subr.mxu0 0.0
        %1801 = vmatpush1.msra.mxu0 0.0
        %1802 = vmatprep.subr.mxu0 0.0
        %1803 = vmatpush1.msra.mxu0 0.0
        %1804 = vmatprep.subr.mxu0 0.0
        %1805 = vmatpush1.msra.mxu0 0.0
        %1806 = vmatprep.subr.mxu0 0.0
        %1807 = vmatpush1.msra.mxu0 %v1450
        %1808 = vmatprep.subr.mxu0 0.0
        %1809 = vmatpush1.msra.mxu0 %v1449
        %1810 = vmatprep.subr.mxu0 0.0
        %1811 = vmatpush1.msra.mxu0 %v1448
        %1812 = vmatprep.subr.mxu0 0.0
        %1813 = vmatpush1.msra.mxu0 %v1447
        %1814 = vmatprep.subr.mxu0 0.0
        %1815 = vmatpush2.msra.mxu0 0.0
        %1816 = vmatprep.subr.mxu0 0.0
        %1817 = vmatpush2.msra.mxu0 0.0
        %1818 = vmatprep.subr.mxu0 0.0
        %1819 = vmatpush2.msra.mxu0 0.0
        %1820 = vmatprep.subr.mxu0 0.0
        %1821 = vmatpush2.msra.mxu0 0.0
        %1822 = vmatprep.subr.mxu0 0.0
        %1823 = vmatpush2.msra.mxu0 0.0
        %1824 = vmatprep.subr.mxu0 0.0
        %1825 = vmatpush2.msra.mxu0 0.0
        %1826 = vmatprep.subr.mxu0 0.0
        %1827 = vmatpush2.msra.mxu0 0.0
        %1828 = vmatprep.subr.mxu0 0.0
        %1829 = vmatpush2.msra.mxu0 0.0
        %1830 = vmatprep.subr.mxu0 0.0
        %1831 = vmatpush2.msra.mxu0 0.0
        %1832 = vmatprep.subr.mxu0 0.0
        %1833 = vmatpush2.msra.mxu0 0.0
        %1834 = vmatprep.subr.mxu0 0.0
        %1835 = vmatpush2.msra.mxu0 0.0
        %1836 = vmatprep.subr.mxu0 0.0
        %1837 = vmatpush2.msra.mxu0 0.0
        %1838 = vmatprep.subr.mxu0 0.0
        %1839 = vmatpush2.msra.mxu0 0.0
        %1840 = vmatprep.subr.mxu0 0.0
        %1841 = vmatpush2.msra.mxu0 0.0
        %1842 = vmatprep.subr.mxu0 0.0
        %1843 = vmatpush2.msra.mxu0 0.0
        %1844 = vmatprep.subr.mxu0 0.0
        %1845 = vmatpush2.msra.mxu0 0.0
        %1846 = vmatprep.mubr.f32.mxu0 0.0
        %1847 = vmatmul.mubr.f32.gmra.mxu0 %v1476
        %v1848 = vpop.f32.mrf.mxu0
        %v1849 = vadd.f32 %v1775, %v1848
        %v1850 = vpop.f32.mrf.mxu0
        %1851 = vdwg.mxu0
        %1852 = vmatprep.subr.mxu0 0.0
        %1853 = vmatpush1.msra.mxu0 0.0
        %1854 = vmatprep.subr.mxu0 0.0
        %1855 = vmatpush1.msra.mxu0 0.0
        %1856 = vmatprep.subr.mxu0 0.0
        %1857 = vmatpush1.msra.mxu0 0.0
        %1858 = vmatprep.subr.mxu0 0.0
        %1859 = vmatpush1.msra.mxu0 0.0
        %1860 = vmatprep.subr.mxu0 0.0
        %1861 = vmatpush1.msra.mxu0 0.0
        %1862 = vmatprep.subr.mxu0 0.0
        %1863 = vmatpush1.msra.mxu0 0.0
        %1864 = vmatprep.subr.mxu0 0.0
        %1865 = vmatpush1.msra.mxu0 0.0
        %1866 = vmatprep.subr.mxu0 0.0
        %1867 = vmatpush1.msra.mxu0 0.0
        %1868 = vmatprep.subr.mxu0 0.0
        %1869 = vmatpush1.msra.mxu0 0.0
        %1870 = vmatprep.subr.mxu0 0.0
        %1871 = vmatpush1.msra.mxu0 0.0
        %1872 = vmatprep.subr.mxu0 0.0
        %1873 = vmatpush1.msra.mxu0 0.0
        %1874 = vmatprep.subr.mxu0 0.0
        %1875 = vmatpush1.msra.mxu0 0.0
        %1876 = vmatprep.subr.mxu0 0.0
        %1877 = vmatpush1.msra.mxu0 %v1454
        %1878 = vmatprep.subr.mxu0 0.0
        %1879 = vmatpush1.msra.mxu0 %v1453
        %1880 = vmatprep.subr.mxu0 0.0
        %1881 = vmatpush1.msra.mxu0 %v1452
        %1882 = vmatprep.subr.mxu0 0.0
        %1883 = vmatpush1.msra.mxu0 %v1451
        %1884 = vmatprep.subr.mxu0 0.0
        %1885 = vmatpush2.msra.mxu0 0.0
        %1886 = vmatprep.subr.mxu0 0.0
        %1887 = vmatpush2.msra.mxu0 0.0
        %1888 = vmatprep.subr.mxu0 0.0
        %1889 = vmatpush2.msra.mxu0 0.0
        %1890 = vmatprep.subr.mxu0 0.0
        %1891 = vmatpush2.msra.mxu0 0.0
        %1892 = vmatprep.subr.mxu0 0.0
        %1893 = vmatpush2.msra.mxu0 0.0
        %1894 = vmatprep.subr.mxu0 0.0
        %1895 = vmatpush2.msra.mxu0 0.0
        %1896 = vmatprep.subr.mxu0 0.0
        %1897 = vmatpush2.msra.mxu0 0.0
        %1898 = vmatprep.subr.mxu0 0.0
        %1899 = vmatpush2.msra.mxu0 0.0
        %1900 = vmatprep.subr.mxu0 0.0
        %1901 = vmatpush2.msra.mxu0 0.0
        %1902 = vmatprep.subr.mxu0 0.0
        %1903 = vmatpush2.msra.mxu0 0.0
        %1904 = vmatprep.subr.mxu0 0.0
        %1905 = vmatpush2.msra.mxu0 0.0
        %1906 = vmatprep.subr.mxu0 0.0
        %1907 = vmatpush2.msra.mxu0 0.0
        %1908 = vmatprep.subr.mxu0 0.0
        %1909 = vmatpush2.msra.mxu0 0.0
        %1910 = vmatprep.subr.mxu0 0.0
        %1911 = vmatpush2.msra.mxu0 0.0
        %1912 = vmatprep.subr.mxu0 0.0
        %1913 = vmatpush2.msra.mxu0 0.0
        %1914 = vmatprep.subr.mxu0 0.0
        %1915 = vmatpush2.msra.mxu0 0.0
        %1916 = vmatprep.mubr.f32.mxu0 0.0
        %1917 = vmatmul.mubr.f32.gmra.mxu0 %v1476
        %v1918 = vpop.f32.mrf.mxu0
        %v1919 = vadd.f32 %v1779, %v1918
        %v1920 = vpop.f32.mrf.mxu0
        %1921 = vdwg.mxu0
        %vm1922 = vcmask 130048
        %v1924 = vsel %vm1922, %v1545, 0
        %v1927 = vsel %vm1922, %v1697, 0
        %1929 = vmatprep.subr.mxu0 0.0
        %1930 = vmatpush1.xpose.msra.mxu0 0.0
        %1931 = vmatprep.subr.mxu0 0.0
        %1932 = vmatpush1.xpose.msra.mxu0 0.0
        %1933 = vmatprep.subr.mxu0 0.0
        %1934 = vmatpush1.xpose.msra.mxu0 0.0
        %1935 = vmatprep.subr.mxu0 0.0
        %1936 = vmatpush1.xpose.msra.mxu0 0.0
        %1937 = vmatprep.subr.mxu0 0.0
        %1938 = vmatpush1.xpose.msra.mxu0 0.0
        %1939 = vmatprep.subr.mxu0 0.0
        %1940 = vmatpush1.xpose.msra.mxu0 0.0
        %1941 = vmatprep.subr.mxu0 0.0
        %1942 = vmatpush1.xpose.msra.mxu0 0.0
        %1943 = vmatprep.subr.mxu0 0.0
        %1944 = vmatpush1.xpose.msra.mxu0 0.0
        %1945 = vmatprep.subr.mxu0 0.0
        %1946 = vmatpush1.xpose.msra.mxu0 0.0
        %1947 = vmatprep.subr.mxu0 0.0
        %1948 = vmatpush1.xpose.msra.mxu0 0.0
        %1949 = vmatprep.subr.mxu0 0.0
        %1950 = vmatpush1.xpose.msra.mxu0 0.0
        %1951 = vmatprep.subr.mxu0 0.0
        %1952 = vmatpush1.xpose.msra.mxu0 0.0
        %1953 = vmatprep.subr.mxu0 0.0
        %1954 = vmatpush1.xpose.msra.mxu0 0.0
        %1955 = vmatprep.subr.mxu0 0.0
        %1956 = vmatpush1.xpose.msra.mxu0 0.0
        %1957 = vmatprep.subr.mxu0 0.0
        %1958 = vmatpush1.xpose.msra.mxu0 0.0
        %1959 = vmatprep.subr.mxu0 0.0
        %1960 = vmatpush1.xpose.msra.mxu0 %v1927
        %1961 = vmatprep.subr.mxu0 0.0
        %1962 = vmatpush2.xpose.msra.mxu0 0.0
        %1963 = vmatprep.subr.mxu0 0.0
        %1964 = vmatpush2.xpose.msra.mxu0 0.0
        %1965 = vmatprep.subr.mxu0 0.0
        %1966 = vmatpush2.xpose.msra.mxu0 0.0
        %1967 = vmatprep.subr.mxu0 0.0
        %1968 = vmatpush2.xpose.msra.mxu0 0.0
        %1969 = vmatprep.subr.mxu0 0.0
        %1970 = vmatpush2.xpose.msra.mxu0 0.0
        %1971 = vmatprep.subr.mxu0 0.0
        %1972 = vmatpush2.xpose.msra.mxu0 0.0
        %1973 = vmatprep.subr.mxu0 0.0
        %1974 = vmatpush2.xpose.msra.mxu0 0.0
        %1975 = vmatprep.subr.mxu0 0.0
        %1976 = vmatpush2.xpose.msra.mxu0 0.0
        %1977 = vmatprep.subr.mxu0 0.0
        %1978 = vmatpush2.xpose.msra.mxu0 0.0
        %1979 = vmatprep.subr.mxu0 0.0
        %1980 = vmatpush2.xpose.msra.mxu0 0.0
        %1981 = vmatprep.subr.mxu0 0.0
        %1982 = vmatpush2.xpose.msra.mxu0 0.0
        %1983 = vmatprep.subr.mxu0 0.0
        %1984 = vmatpush2.xpose.msra.mxu0 0.0
        %1985 = vmatprep.subr.mxu0 0.0
        %1986 = vmatpush2.xpose.msra.mxu0 0.0
        %1987 = vmatprep.subr.mxu0 0.0
        %1988 = vmatpush2.xpose.msra.mxu0 0.0
        %1989 = vmatprep.subr.mxu0 0.0
        %1990 = vmatpush2.xpose.msra.mxu0 0.0
        %1991 = vmatprep.subr.mxu0 0.0
        %1992 = vmatpush2.xpose.msra.mxu0 0.0
        %1993 = vmatprep.mubr.f32.mxu0 0.0
        %1994 = vmatmul.mubr.f32.gmra.mxu0 %v1924
        %v1995 = vpop.f32.mrf.mxu0
        %v1996 = vadd.f32 0.0, %v1995
        %v1997 = vpop.f32.mrf.mxu0
        %1998 = vdwg.mxu0
        %v2000 = vsel %vm1922, %v1615, 0
        %v2003 = vsel %vm1922, %v1767, 0
        %2005 = vmatprep.subr.mxu0 0.0
        %2006 = vmatpush1.xpose.msra.mxu0 0.0
        %2007 = vmatprep.subr.mxu0 0.0
        %2008 = vmatpush1.xpose.msra.mxu0 0.0
        %2009 = vmatprep.subr.mxu0 0.0
        %2010 = vmatpush1.xpose.msra.mxu0 0.0
        %2011 = vmatprep.subr.mxu0 0.0
        %2012 = vmatpush1.xpose.msra.mxu0 0.0
        %2013 = vmatprep.subr.mxu0 0.0
        %2014 = vmatpush1.xpose.msra.mxu0 0.0
        %2015 = vmatprep.subr.mxu0 0.0
        %2016 = vmatpush1.xpose.msra.mxu0 0.0
        %2017 = vmatprep.subr.mxu0 0.0
        %2018 = vmatpush1.xpose.msra.mxu0 0.0
        %2019 = vmatprep.subr.mxu0 0.0
        %2020 = vmatpush1.xpose.msra.mxu0 0.0
        %2021 = vmatprep.subr.mxu0 0.0
        %2022 = vmatpush1.xpose.msra.mxu0 0.0
        %2023 = vmatprep.subr.mxu0 0.0
        %2024 = vmatpush1.xpose.msra.mxu0 0.0
        %2025 = vmatprep.subr.mxu0 0.0
        %2026 = vmatpush1.xpose.msra.mxu0 0.0
        %2027 = vmatprep.subr.mxu0 0.0
        %2028 = vmatpush1.xpose.msra.mxu0 0.0
        %2029 = vmatprep.subr.mxu0 0.0
        %2030 = vmatpush1.xpose.msra.mxu0 0.0
        %2031 = vmatprep.subr.mxu0 0.0
        %2032 = vmatpush1.xpose.msra.mxu0 0.0
        %2033 = vmatprep.subr.mxu0 0.0
        %2034 = vmatpush1.xpose.msra.mxu0 0.0
        %2035 = vmatprep.subr.mxu0 0.0
        %2036 = vmatpush1.xpose.msra.mxu0 %v2003
        %2037 = vmatprep.subr.mxu0 0.0
        %2038 = vmatpush2.xpose.msra.mxu0 0.0
        %2039 = vmatprep.subr.mxu0 0.0
        %2040 = vmatpush2.xpose.msra.mxu0 0.0
        %2041 = vmatprep.subr.mxu0 0.0
        %2042 = vmatpush2.xpose.msra.mxu0 0.0
        %2043 = vmatprep.subr.mxu0 0.0
        %2044 = vmatpush2.xpose.msra.mxu0 0.0
        %2045 = vmatprep.subr.mxu0 0.0
        %2046 = vmatpush2.xpose.msra.mxu0 0.0
        %2047 = vmatprep.subr.mxu0 0.0
        %2048 = vmatpush2.xpose.msra.mxu0 0.0
        %2049 = vmatprep.subr.mxu0 0.0
        %2050 = vmatpush2.xpose.msra.mxu0 0.0
        %2051 = vmatprep.subr.mxu0 0.0
        %2052 = vmatpush2.xpose.msra.mxu0 0.0
        %2053 = vmatprep.subr.mxu0 0.0
        %2054 = vmatpush2.xpose.msra.mxu0 0.0
        %2055 = vmatprep.subr.mxu0 0.0
        %2056 = vmatpush2.xpose.msra.mxu0 0.0
        %2057 = vmatprep.subr.mxu0 0.0
        %2058 = vmatpush2.xpose.msra.mxu0 0.0
        %2059 = vmatprep.subr.mxu0 0.0
        %2060 = vmatpush2.xpose.msra.mxu0 0.0
        %2061 = vmatprep.subr.mxu0 0.0
        %2062 = vmatpush2.xpose.msra.mxu0 0.0
        %2063 = vmatprep.subr.mxu0 0.0
        %2064 = vmatpush2.xpose.msra.mxu0 0.0
        %2065 = vmatprep.subr.mxu0 0.0
        %2066 = vmatpush2.xpose.msra.mxu0 0.0
        %2067 = vmatprep.subr.mxu0 0.0
        %2068 = vmatpush2.xpose.msra.mxu0 0.0
        %2069 = vmatprep.mubr.f32.mxu0 0.0
        %2070 = vmatmul.mubr.f32.gmra.mxu0 %v2000
        %v2071 = vpop.f32.mrf.mxu0
        %v2072 = vadd.f32 0.0, %v2071
        %v2073 = vpop.f32.mrf.mxu0
        %2074 = vdwg.mxu0
        %v2075 = vmul.f32 %v1996, 0.25
        %v2076 = vmul.f32 %v2072, 0.25
        %vm2077 = vcmask 64512
        %v2078 = vsel %vm2077, %v2075, -inf
        %2079 = vmax.xlane.f32.xlu0 %v2078
        %v2080 = vpop.xlane.xlu0 %2079
        %v2081 = vsel %vm2077, %v2076, -inf
        %2082 = vmax.xlane.f32.xlu0 %v2081
        %v2083 = vpop.xlane.xlu0 %2082
        %v2084 = vsub.f32 %v2075, %v2080
        %v2085 = vsub.f32 %v2076, %v2083
        %v2086 = vmul.f32 %v2084, 1.442695
        %v2087 = vpow.pop %v2086
        %v2088 = vmul.f32 %v2085, 1.442695
        %v2089 = vpow.pop %v2088
        %v2090 = vsel %vm2077, %v2087, 0.0
        %2091 = vadd.xlane.f32.xlu0 %v2090
        %v2092 = vpop.xlane.xlu0 %2091
        %v2093 = vsel %vm2077, %v2089, 0.0
        %2094 = vadd.xlane.f32.xlu0 %v2093
        %v2095 = vpop.xlane.xlu0 %2094
        %v2096 = vrcp.pop %v2092
        %v2097 = vrcp.pop %v2095
        %v2098 = vmul.f32 %v2087, %v2096
        %v2099 = vmul.f32 %v2089, %v2097
        %v2101 = vsel %vm2077, %v2098, 0
        %2103 = vmatprep.subr.mxu0 0.0
        %2104 = vmatpush1.msra.mxu0 0.0
        %2105 = vmatprep.subr.mxu0 0.0
        %2106 = vmatpush1.msra.mxu0 0.0
        %2107 = vmatprep.subr.mxu0 0.0
        %2108 = vmatpush1.msra.mxu0 0.0
        %2109 = vmatprep.subr.mxu0 0.0
        %2110 = vmatpush1.msra.mxu0 0.0
        %2111 = vmatprep.subr.mxu0 0.0
        %2112 = vmatpush1.msra.mxu0 0.0
        %2113 = vmatprep.subr.mxu0 0.0
        %2114 = vmatpush1.msra.mxu0 0.0
        %2115 = vmatprep.subr.mxu0 0.0
        %2116 = vmatpush1.msra.mxu0 0.0
        %2117 = vmatprep.subr.mxu0 0.0
        %2118 = vmatpush1.msra.mxu0 0.0
        %2119 = vmatprep.subr.mxu0 0.0
        %2120 = vmatpush1.msra.mxu0 0.0
        %2121 = vmatprep.subr.mxu0 0.0
        %2122 = vmatpush1.msra.mxu0 0.0
        %2123 = vmatprep.subr.mxu0 0.0
        %2124 = vmatpush1.msra.mxu0 0.0
        %2125 = vmatprep.subr.mxu0 0.0
        %2126 = vmatpush1.msra.mxu0 0.0
        %2127 = vmatprep.subr.mxu0 0.0
        %2128 = vmatpush1.msra.mxu0 0.0
        %2129 = vmatprep.subr.mxu0 0.0
        %2130 = vmatpush1.msra.mxu0 0.0
        %2131 = vmatprep.subr.mxu0 0.0
        %2132 = vmatpush1.msra.mxu0 0.0
        %2133 = vmatprep.subr.mxu0 0.0
        %2134 = vmatpush1.msra.mxu0 %v1849
        %2135 = vmatprep.subr.mxu0 0.0
        %2136 = vmatpush2.msra.mxu0 0.0
        %2137 = vmatprep.subr.mxu0 0.0
        %2138 = vmatpush2.msra.mxu0 0.0
        %2139 = vmatprep.subr.mxu0 0.0
        %2140 = vmatpush2.msra.mxu0 0.0
        %2141 = vmatprep.subr.mxu0 0.0
        %2142 = vmatpush2.msra.mxu0 0.0
        %2143 = vmatprep.subr.mxu0 0.0
        %2144 = vmatpush2.msra.mxu0 0.0
        %2145 = vmatprep.subr.mxu0 0.0
        %2146 = vmatpush2.msra.mxu0 0.0
        %2147 = vmatprep.subr.mxu0 0.0
        %2148 = vmatpush2.msra.mxu0 0.0
        %2149 = vmatprep.subr.mxu0 0.0
        %2150 = vmatpush2.msra.mxu0 0.0
        %2151 = vmatprep.subr.mxu0 0.0
        %2152 = vmatpush2.msra.mxu0 0.0
        %2153 = vmatprep.subr.mxu0 0.0
        %2154 = vmatpush2.msra.mxu0 0.0
        %2155 = vmatprep.subr.mxu0 0.0
        %2156 = vmatpush2.msra.mxu0 0.0
        %2157 = vmatprep.subr.mxu0 0.0
        %2158 = vmatpush2.msra.mxu0 0.0
        %2159 = vmatprep.subr.mxu0 0.0
        %2160 = vmatpush2.msra.mxu0 0.0
        %2161 = vmatprep.subr.mxu0 0.0
        %2162 = vmatpush2.msra.mxu0 0.0
        %2163 = vmatprep.subr.mxu0 0.0
        %2164 = vmatpush2.msra.mxu0 0.0
        %2165 = vmatprep.subr.mxu0 0.0
        %2166 = vmatpush2.msra.mxu0 0.0
        %2167 = vmatprep.mubr.f32.mxu0 0.0
        %2168 = vmatmul.mubr.f32.gmra.mxu0 %v2101
        %v2169 = vpop.f32.mrf.mxu0
        %v2170 = vadd.f32 0.0, %v2169
        %v2171 = vpop.f32.mrf.mxu0
        %2172 = vdwg.mxu0
        %v2174 = vsel %vm2077, %v2099, 0
        %2176 = vmatprep.subr.mxu0 0.0
        %2177 = vmatpush1.msra.mxu0 0.0
        %2178 = vmatprep.subr.mxu0 0.0
        %2179 = vmatpush1.msra.mxu0 0.0
        %2180 = vmatprep.subr.mxu0 0.0
        %2181 = vmatpush1.msra.mxu0 0.0
        %2182 = vmatprep.subr.mxu0 0.0
        %2183 = vmatpush1.msra.mxu0 0.0
        %2184 = vmatprep.subr.mxu0 0.0
        %2185 = vmatpush1.msra.mxu0 0.0
        %2186 = vmatprep.subr.mxu0 0.0
        %2187 = vmatpush1.msra.mxu0 0.0
        %2188 = vmatprep.subr.mxu0 0.0
        %2189 = vmatpush1.msra.mxu0 0.0
        %2190 = vmatprep.subr.mxu0 0.0
        %2191 = vmatpush1.msra.mxu0 0.0
        %2192 = vmatprep.subr.mxu0 0.0
        %2193 = vmatpush1.msra.mxu0 0.0
        %2194 = vmatprep.subr.mxu0 0.0
        %2195 = vmatpush1.msra.mxu0 0.0
        %2196 = vmatprep.subr.mxu0 0.0
        %2197 = vmatpush1.msra.mxu0 0.0
        %2198 = vmatprep.subr.mxu0 0.0
        %2199 = vmatpush1.msra.mxu0 0.0
        %2200 = vmatprep.subr.mxu0 0.0
        %2201 = vmatpush1.msra.mxu0 0.0
        %2202 = vmatprep.subr.mxu0 0.0
        %2203 = vmatpush1.msra.mxu0 0.0
        %2204 = vmatprep.subr.mxu0 0.0
        %2205 = vmatpush1.msra.mxu0 0.0
        %2206 = vmatprep.subr.mxu0 0.0
        %2207 = vmatpush1.msra.mxu0 %v1919
        %2208 = vmatprep.subr.mxu0 0.0
        %2209 = vmatpush2.msra.mxu0 0.0
        %2210 = vmatprep.subr.mxu0 0.0
        %2211 = vmatpush2.msra.mxu0 0.0
        %2212 = vmatprep.subr.mxu0 0.0
        %2213 = vmatpush2.msra.mxu0 0.0
        %2214 = vmatprep.subr.mxu0 0.0
        %2215 = vmatpush2.msra.mxu0 0.0
        %2216 = vmatprep.subr.mxu0 0.0
        %2217 = vmatpush2.msra.mxu0 0.0
        %2218 = vmatprep.subr.mxu0 0.0
        %2219 = vmatpush2.msra.mxu0 0.0
        %2220 = vmatprep.subr.mxu0 0.0
        %2221 = vmatpush2.msra.mxu0 0.0
        %2222 = vmatprep.subr.mxu0 0.0
        %2223 = vmatpush2.msra.mxu0 0.0
        %2224 = vmatprep.subr.mxu0 0.0
        %2225 = vmatpush2.msra.mxu0 0.0
        %2226 = vmatprep.subr.mxu0 0.0
        %2227 = vmatpush2.msra.mxu0 0.0
        %2228 = vmatprep.subr.mxu0 0.0
        %2229 = vmatpush2.msra.mxu0 0.0
        %2230 = vmatprep.subr.mxu0 0.0
        %2231 = vmatpush2.msra.mxu0 0.0
        %2232 = vmatprep.subr.mxu0 0.0
        %2233 = vmatpush2.msra.mxu0 0.0
        %2234 = vmatprep.subr.mxu0 0.0
        %2235 = vmatpush2.msra.mxu0 0.0
        %2236 = vmatprep.subr.mxu0 0.0
        %2237 = vmatpush2.msra.mxu0 0.0
        %2238 = vmatprep.subr.mxu0 0.0
        %2239 = vmatpush2.msra.mxu0 0.0
        %2240 = vmatprep.mubr.f32.mxu0 0.0
        %2241 = vmatmul.mubr.f32.gmra.mxu0 %v2174
        %v2242 = vpop.f32.mrf.mxu0
        %v2243 = vadd.f32 0.0, %v2242
        %v2244 = vpop.f32.mrf.mxu0
        %2245 = vdwg.mxu0
        %v2247 = vsel %vm1922, %v2170, 0
        %2249 = vmatprep.subr.mxu0 0.0
        %2250 = vmatpush1.msra.mxu0 0.0
        %2251 = vmatprep.subr.mxu0 0.0
        %2252 = vmatpush1.msra.mxu0 0.0
        %2253 = vmatprep.subr.mxu0 0.0
        %2254 = vmatpush1.msra.mxu0 0.0
        %2255 = vmatprep.subr.mxu0 0.0
        %2256 = vmatpush1.msra.mxu0 0.0
        %2257 = vmatprep.subr.mxu0 0.0
        %2258 = vmatpush1.msra.mxu0 0.0
        %2259 = vmatprep.subr.mxu0 0.0
        %2260 = vmatpush1.msra.mxu0 0.0
        %2261 = vmatprep.subr.mxu0 0.0
        %2262 = vmatpush1.msra.mxu0 0.0
        %2263 = vmatprep.subr.mxu0 0.0
        %2264 = vmatpush1.msra.mxu0 0.0
        %2265 = vmatprep.subr.mxu0 0.0
        %2266 = vmatpush1.msra.mxu0 0.0
        %2267 = vmatprep.subr.mxu0 0.0
        %2268 = vmatpush1.msra.mxu0 0.0
        %2269 = vmatprep.subr.mxu0 0.0
        %2270 = vmatpush1.msra.mxu0 0.0
        %2271 = vmatprep.subr.mxu0 0.0
        %2272 = vmatpush1.msra.mxu0 0.0
        %2273 = vmatprep.subr.mxu0 0.0
        %2274 = vmatpush1.msra.mxu0 0.0
        %2275 = vmatprep.subr.mxu0 0.0
        %2276 = vmatpush1.msra.mxu0 0.0
        %2277 = vmatprep.subr.mxu0 0.0
        %2278 = vmatpush1.msra.mxu0 %v1458
        %2279 = vmatprep.subr.mxu0 0.0
        %2280 = vmatpush1.msra.mxu0 %v1457
        %2281 = vmatprep.subr.mxu0 0.0
        %2282 = vmatpush2.msra.mxu0 0.0
        %2283 = vmatprep.subr.mxu0 0.0
        %2284 = vmatpush2.msra.mxu0 0.0
        %2285 = vmatprep.subr.mxu0 0.0
        %2286 = vmatpush2.msra.mxu0 0.0
        %2287 = vmatprep.subr.mxu0 0.0
        %2288 = vmatpush2.msra.mxu0 0.0
        %2289 = vmatprep.subr.mxu0 0.0
        %2290 = vmatpush2.msra.mxu0 0.0
        %2291 = vmatprep.subr.mxu0 0.0
        %2292 = vmatpush2.msra.mxu0 0.0
        %2293 = vmatprep.subr.mxu0 0.0
        %2294 = vmatpush2.msra.mxu0 0.0
        %2295 = vmatprep.subr.mxu0 0.0
        %2296 = vmatpush2.msra.mxu0 0.0
        %2297 = vmatprep.subr.mxu0 0.0
        %2298 = vmatpush2.msra.mxu0 0.0
        %2299 = vmatprep.subr.mxu0 0.0
        %2300 = vmatpush2.msra.mxu0 0.0
        %2301 = vmatprep.subr.mxu0 0.0
        %2302 = vmatpush2.msra.mxu0 0.0
        %2303 = vmatprep.subr.mxu0 0.0
        %2304 = vmatpush2.msra.mxu0 0.0
        %2305 = vmatprep.subr.mxu0 0.0
        %2306 = vmatpush2.msra.mxu0 0.0
        %2307 = vmatprep.subr.mxu0 0.0
        %2308 = vmatpush2.msra.mxu0 0.0
        %2309 = vmatprep.subr.mxu0 0.0
        %2310 = vmatpush2.msra.mxu0 0.0
        %2311 = vmatprep.subr.mxu0 0.0
        %2312 = vmatpush2.msra.mxu0 0.0
        %2313 = vmatprep.mubr.f32.mxu0 0.0
        %2314 = vmatmul.mubr.f32.gmra.mxu0 %v2247
        %v2315 = vpop.f32.mrf.mxu0
        %v2316 = vadd.f32 0.0, %v2315
        %v2317 = vpop.f32.mrf.mxu0
        %2318 = vdwg.mxu0
        %v2320 = vsel %vm1922, %v2243, 0
        %2322 = vmatprep.subr.mxu0 0.0
        %2323 = vmatpush1.msra.mxu0 0.0
        %2324 = vmatprep.subr.mxu0 0.0
        %2325 = vmatpush1.msra.mxu0 0.0
        %2326 = vmatprep.subr.mxu0 0.0
        %2327 = vmatpush1.msra.mxu0 0.0
        %2328 = vmatprep.subr.mxu0 0.0
        %2329 = vmatpush1.msra.mxu0 0.0
        %2330 = vmatprep.subr.mxu0 0.0
        %2331 = vmatpush1.msra.mxu0 0.0
        %2332 = vmatprep.subr.mxu0 0.0
        %2333 = vmatpush1.msra.mxu0 0.0
        %2334 = vmatprep.subr.mxu0 0.0
        %2335 = vmatpush1.msra.mxu0 0.0
        %2336 = vmatprep.subr.mxu0 0.0
        %2337 = vmatpush1.msra.mxu0 0.0
        %2338 = vmatprep.subr.mxu0 0.0
        %2339 = vmatpush1.msra.mxu0 0.0
        %2340 = vmatprep.subr.mxu0 0.0
        %2341 = vmatpush1.msra.mxu0 0.0
        %2342 = vmatprep.subr.mxu0 0.0
        %2343 = vmatpush1.msra.mxu0 0.0
        %2344 = vmatprep.subr.mxu0 0.0
        %2345 = vmatpush1.msra.mxu0 0.0
        %2346 = vmatprep.subr.mxu0 0.0
        %2347 = vmatpush1.msra.mxu0 0.0
        %2348 = vmatprep.subr.mxu0 0.0
        %2349 = vmatpush1.msra.mxu0 0.0
        %2350 = vmatprep.subr.mxu0 0.0
        %2351 = vmatpush1.msra.mxu0 %v1460
        %2352 = vmatprep.subr.mxu0 0.0
        %2353 = vmatpush1.msra.mxu0 %v1459
        %2354 = vmatprep.subr.mxu0 0.0
        %2355 = vmatpush2.msra.mxu0 0.0
        %2356 = vmatprep.subr.mxu0 0.0
        %2357 = vmatpush2.msra.mxu0 0.0
        %2358 = vmatprep.subr.mxu0 0.0
        %2359 = vmatpush2.msra.mxu0 0.0
        %2360 = vmatprep.subr.mxu0 0.0
        %2361 = vmatpush2.msra.mxu0 0.0
        %2362 = vmatprep.subr.mxu0 0.0
        %2363 = vmatpush2.msra.mxu0 0.0
        %2364 = vmatprep.subr.mxu0 0.0
        %2365 = vmatpush2.msra.mxu0 0.0
        %2366 = vmatprep.subr.mxu0 0.0
        %2367 = vmatpush2.msra.mxu0 0.0
        %2368 = vmatprep.subr.mxu0 0.0
        %2369 = vmatpush2.msra.mxu0 0.0
        %2370 = vmatprep.subr.mxu0 0.0
        %2371 = vmatpush2.msra.mxu0 0.0
        %2372 = vmatprep.subr.mxu0 0.0
        %2373 = vmatpush2.msra.mxu0 0.0
        %2374 = vmatprep.subr.mxu0 0.0
        %2375 = vmatpush2.msra.mxu0 0.0
        %2376 = vmatprep.subr.mxu0 0.0
        %2377 = vmatpush2.msra.mxu0 0.0
        %2378 = vmatprep.subr.mxu0 0.0
        %2379 = vmatpush2.msra.mxu0 0.0
        %2380 = vmatprep.subr.mxu0 0.0
        %2381 = vmatpush2.msra.mxu0 0.0
        %2382 = vmatprep.subr.mxu0 0.0
        %2383 = vmatpush2.msra.mxu0 0.0
        %2384 = vmatprep.subr.mxu0 0.0
        %2385 = vmatpush2.msra.mxu0 0.0
        %2386 = vmatprep.mubr.f32.mxu0 0.0
        %2387 = vmatmul.mubr.f32.gmra.mxu0 %v2320
        %v2388 = vpop.f32.mrf.mxu0
        %v2389 = vadd.f32 0.0, %v2388
        %v2390 = vpop.f32.mrf.mxu0
        %2391 = vdwg.mxu0
        %v2392 = vsel %vm1474, %v2316, 0.0
        %v2393 = vsel %vm1474, %v2389, 0.0
        %v2394 = vadd.f32 %v2392, %v2393
        %v2396 = vlaneseq
        %v2397 = vshrl.u32 %v2396, 7
        %v2398 = vsub.s32 0, %v2397
        %v2399 = vrot.slane %v1461, %v2398
        %v2401 = vadd.f32 %v2394, %v2399
        %v2402 = vadd.f32 %v1426, %v2401
        %v2403 = vld [vmem:[%s23] sm:$0x1]
        %v2404 = vld [vmem:[%s25] sm:$0x1]
        %v2405 = vsel %vm1474, %v2402, 0.0
        %2406 = vadd.xlane.f32.xlu0 %v2405
        %v2407 = vpop.xlane.xlu0 %2406
        %v2408 = vrcp.pop 32.0
        %v2409 = vmul.f32 %v2407, %v2408
        %v2410 = vsub.f32 %v2402, %v2409
        %v2411 = vmul.f32 %v2410, %v2410
        %v2412 = vsel %vm1474, %v2411, 0.0
        %2413 = vadd.xlane.f32.xlu0 %v2412
        %v2414 = vpop.xlane.xlu0 %2413
        %v2415 = vmul.f32 %v2414, %v2408
        %v2416 = vadd.f32 %v2415, 1e-05
        %v2417 = vrsqrt.pop %v2416
        %v2418 = vmul.f32 %v2410, %v2417
        %v2420 = vlaneseq
        %v2421 = vshrl.u32 %v2420, 7
        %v2422 = vsub.s32 0, %v2421
        %v2423 = vrot.slane %v2403, %v2422
        %v2425 = vmul.f32 %v2418, %v2423
        %v2427 = vlaneseq
        %v2428 = vshrl.u32 %v2427, 7
        %v2429 = vsub.s32 0, %v2428
        %v2430 = vrot.slane %v2404, %v2429
        %v2432 = vadd.f32 %v2425, %v2430
        %v2433 = vld [vmem:[%s27] sm:$0xff]
        %v2434 = vld [vmem:[%s27 + $0x8] sm:$0xff]
        %v2435 = vld [vmem:[%s27 + $0x10] sm:$0xff]
        %v2436 = vld [vmem:[%s27 + $0x18] sm:$0xff]
        %v2437 = vld [vmem:[%s29] sm:$0x1]
        %v2438 = vld [vmem:[%s31] sm:$0xff]
        %v2439 = vld [vmem:[%s31 + $0x8] sm:$0xff]
        %v2440 = vld [vmem:[%s31 + $0x10] sm:$0xff]
        %v2441 = vld [vmem:[%s31 + $0x18] sm:$0xff]
        %v2442 = vld [vmem:[%s31 + $0x20] sm:$0xff]
        %v2443 = vld [vmem:[%s31 + $0x28] sm:$0xff]
        %v2444 = vld [vmem:[%s31 + $0x30] sm:$0xff]
        %v2445 = vld [vmem:[%s31 + $0x38] sm:$0xff]
        %v2446 = vld [vmem:[%s33] sm:$0x1]
        %v2448 = vlaneseq
        %v2449 = vshrl.u32 %v2448, 7
        %v2450 = vsub.s32 0, %v2449
        %v2451 = vrot.slane %v2437, %v2450
        %v2454 = vsel %vm1474, %v2432, 0
        %2456 = vmatprep.subr.mxu0 0.0
        %2457 = vmatpush1.msra.mxu0 0.0
        %2458 = vmatprep.subr.mxu0 0.0
        %2459 = vmatpush1.msra.mxu0 0.0
        %2460 = vmatprep.subr.mxu0 0.0
        %2461 = vmatpush1.msra.mxu0 0.0
        %2462 = vmatprep.subr.mxu0 0.0
        %2463 = vmatpush1.msra.mxu0 0.0
        %2464 = vmatprep.subr.mxu0 0.0
        %2465 = vmatpush1.msra.mxu0 0.0
        %2466 = vmatprep.subr.mxu0 0.0
        %2467 = vmatpush1.msra.mxu0 0.0
        %2468 = vmatprep.subr.mxu0 0.0
        %2469 = vmatpush1.msra.mxu0 0.0
        %2470 = vmatprep.subr.mxu0 0.0
        %2471 = vmatpush1.msra.mxu0 0.0
        %2472 = vmatprep.subr.mxu0 0.0
        %2473 = vmatpush1.msra.mxu0 0.0
        %2474 = vmatprep.subr.mxu0 0.0
        %2475 = vmatpush1.msra.mxu0 0.0
        %2476 = vmatprep.subr.mxu0 0.0
        %2477 = vmatpush1.msra.mxu0 0.0
        %2478 = vmatprep.subr.mxu0 0.0
        %2479 = vmatpush1.msra.mxu0 0.0
        %2480 = vmatprep.subr.mxu0 0.0
        %2481 = vmatpush1.msra.mxu0 %v2436
        %2482 = vmatprep.subr.mxu0 0.0
        %2483 = vmatpush1.msra.mxu0 %v2435
        %2484 = vmatprep.subr.mxu0 0.0
        %2485 = vmatpush1.msra.mxu0 %v2434
        %2486 = vmatprep.subr.mxu0 0.0
        %2487 = vmatpush1.msra.mxu0 %v2433
        %2488 = vmatprep.subr.mxu0 0.0
        %2489 = vmatpush2.msra.mxu0 0.0
        %2490 = vmatprep.subr.mxu0 0.0
        %2491 = vmatpush2.msra.mxu0 0.0
        %2492 = vmatprep.subr.mxu0 0.0
        %2493 = vmatpush2.msra.mxu0 0.0
        %2494 = vmatprep.subr.mxu0 0.0
        %2495 = vmatpush2.msra.mxu0 0.0
        %2496 = vmatprep.subr.mxu0 0.0
        %2497 = vmatpush2.msra.mxu0 0.0
        %2498 = vmatprep.subr.mxu0 0.0
        %2499 = vmatpush2.msra.mxu0 0.0
        %2500 = vmatprep.subr.mxu0 0.0
        %2501 = vmatpush2.msra.mxu0 0.0
        %2502 = vmatprep.subr.mxu0 0.0
        %2503 = vmatpush2.msra.mxu0 0.0
        %2504 = vmatprep.subr.mxu0 0.0
        %2505 = vmatpush2.msra.mxu0 0.0
        %2506 = vmatprep.subr.mxu0 0.0
        %2507 = vmatpush2.msra.mxu0 0.0
        %2508 = vmatprep.subr.mxu0 0.0
        %2509 = vmatpush2.msra.mxu0 0.0
        %2510 = vmatprep.subr.mxu0 0.0
        %2511 = vmatpush2.msra.mxu0 0.0
        %2512 = vmatprep.subr.mxu0 0.0
        %2513 = vmatpush2.msra.mxu0 0.0
        %2514 = vmatprep.subr.mxu0 0.0
        %2515 = vmatpush2.msra.mxu0 0.0
        %2516 = vmatprep.subr.mxu0 0.0
        %2517 = vmatpush2.msra.mxu0 0.0
        %2518 = vmatprep.subr.mxu0 0.0
        %2519 = vmatpush2.msra.mxu0 0.0
        %2520 = vmatprep.mubr.f32.mxu0 0.0
        %2521 = vmatmul.mubr.f32.gmra.mxu0 %v2454
        %v2522 = vpop.f32.mrf.mxu0
        %v2523 = vadd.f32 %v2451, %v2522
        %v2524 = vpop.f32.mrf.mxu0
        %2525 = vdwg.mxu0
        %v2526 = vmax.f32 %v2523, 0.0
        %v2528 = vlaneseq
        %v2529 = vshrl.u32 %v2528, 7
        %v2530 = vsub.s32 0, %v2529
        %v2531 = vrot.slane %v2446, %v2530
        %vm2533 = vcmask 523264
        %v2535 = vsel %vm2533, %v2526, 0
        %2537 = vmatprep.subr.mxu0 0.0
        %2538 = vmatpush1.msra.mxu0 0.0
        %2539 = vmatprep.subr.mxu0 0.0
        %2540 = vmatpush1.msra.mxu0 0.0
        %2541 = vmatprep.subr.mxu0 0.0
        %2542 = vmatpush1.msra.mxu0 0.0
        %2543 = vmatprep.subr.mxu0 0.0
        %2544 = vmatpush1.msra.mxu0 0.0
        %2545 = vmatprep.subr.mxu0 0.0
        %2546 = vmatpush1.msra.mxu0 0.0
        %2547 = vmatprep.subr.mxu0 0.0
        %2548 = vmatpush1.msra.mxu0 0.0
        %2549 = vmatprep.subr.mxu0 0.0
        %2550 = vmatpush1.msra.mxu0 0.0
        %2551 = vmatprep.subr.mxu0 0.0
        %2552 = vmatpush1.msra.mxu0 0.0
        %2553 = vmatprep.subr.mxu0 0.0
        %2554 = vmatpush1.msra.mxu0 %v2445
        %2555 = vmatprep.subr.mxu0 0.0
        %2556 = vmatpush1.msra.mxu0 %v2444
        %2557 = vmatprep.subr.mxu0 0.0
        %2558 = vmatpush1.msra.mxu0 %v2443
        %2559 = vmatprep.subr.mxu0 0.0
        %2560 = vmatpush1.msra.mxu0 %v2442
        %2561 = vmatprep.subr.mxu0 0.0
        %2562 = vmatpush1.msra.mxu0 %v2441
        %2563 = vmatprep.subr.mxu0 0.0
        %2564 = vmatpush1.msra.mxu0 %v2440
        %2565 = vmatprep.subr.mxu0 0.0
        %2566 = vmatpush1.msra.mxu0 %v2439
        %2567 = vmatprep.subr.mxu0 0.0
        %2568 = vmatpush1.msra.mxu0 %v2438
        %2569 = vmatprep.subr.mxu0 0.0
        %2570 = vmatpush2.msra.mxu0 0.0
        %2571 = vmatprep.subr.mxu0 0.0
        %2572 = vmatpush2.msra.mxu0 0.0
        %2573 = vmatprep.subr.mxu0 0.0
        %2574 = vmatpush2.msra.mxu0 0.0
        %2575 = vmatprep.subr.mxu0 0.0
        %2576 = vmatpush2.msra.mxu0 0.0
        %2577 = vmatprep.subr.mxu0 0.0
        %2578 = vmatpush2.msra.mxu0 0.0
        %2579 = vmatprep.subr.mxu0 0.0
        %2580 = vmatpush2.msra.mxu0 0.0
        %2581 = vmatprep.subr.mxu0 0.0
        %2582 = vmatpush2.msra.mxu0 0.0
        %2583 = vmatprep.subr.mxu0 0.0
        %2584 = vmatpush2.msra.mxu0 0.0
        %2585 = vmatprep.subr.mxu0 0.0
        %2586 = vmatpush2.msra.mxu0 0.0
        %2587 = vmatprep.subr.mxu0 0.0
        %2588 = vmatpush2.msra.mxu0 0.0
        %2589 = vmatprep.subr.mxu0 0.0
        %2590 = vmatpush2.msra.mxu0 0.0
        %2591 = vmatprep.subr.mxu0 0.0
        %2592 = vmatpush2.msra.mxu0 0.0
        %2593 = vmatprep.subr.mxu0 0.0
        %2594 = vmatpush2.msra.mxu0 0.0
        %2595 = vmatprep.subr.mxu0 0.0
        %2596 = vmatpush2.msra.mxu0 0.0
        %2597 = vmatprep.subr.mxu0 0.0
        %2598 = vmatpush2.msra.mxu0 0.0
        %2599 = vmatprep.subr.mxu0 0.0
        %2600 = vmatpush2.msra.mxu0 0.0
        %2601 = vmatprep.mubr.f32.mxu0 0.0
        %2602 = vmatmul.mubr.f32.gmra.mxu0 %v2535
        %v2603 = vpop.f32.mrf.mxu0
        %v2604 = vadd.f32 %v2531, %v2603
        %v2605 = vpop.f32.mrf.mxu0
        %2606 = vdwg.mxu0
        %v2607 = vadd.f32 %v2432, %v2604
        %v2608 = vld [vmem:[%s35] sm:$0x1]
        %v2609 = vld [vmem:[%s37] sm:$0x1]
        %v2610 = vsel %vm1474, %v2607, 0.0
        %2611 = vadd.xlane.f32.xlu0 %v2610
        %v2612 = vpop.xlane.xlu0 %2611
        %v2613 = vmul.f32 %v2612, %v2408
        %v2614 = vsub.f32 %v2607, %v2613
        %v2615 = vmul.f32 %v2614, %v2614
        %v2616 = vsel %vm1474, %v2615, 0.0
        %2617 = vadd.xlane.f32.xlu0 %v2616
        %v2618 = vpop.xlane.xlu0 %2617
        %v2619 = vmul.f32 %v2618, %v2408
        %v2620 = vadd.f32 %v2619, 1e-05
        %v2621 = vrsqrt.pop %v2620
        %v2622 = vmul.f32 %v2614, %v2621
        %v2624 = vlaneseq
        %v2625 = vshrl.u32 %v2624, 7
        %v2626 = vsub.s32 0, %v2625
        %v2627 = vrot.slane %v2608, %v2626
        %v2629 = vmul.f32 %v2622, %v2627
        %v2631 = vlaneseq
        %v2632 = vshrl.u32 %v2631, 7
        %v2633 = vsub.s32 0, %v2632
        %v2634 = vrot.slane %v2609, %v2633
        %v2636 = vadd.f32 %v2629, %v2634
        %v2637 = vld [vmem:[%s1418] sm:$0xff]
        %v2638 = vadd.f32 %v2637, %v1419
        %v2639 = vld [vmem:[%s39] sm:$0xff]
        %v2640 = vld [vmem:[%s39 + $0x8] sm:$0xff]
        %v2641 = vld [vmem:[%s39 + $0x10] sm:$0xff]
        %v2642 = vld [vmem:[%s39 + $0x18] sm:$0xff]
        %v2643 = vld [vmem:[%s39 + $0x20] sm:$0xff]
        %v2644 = vld [vmem:[%s39 + $0x28] sm:$0xff]
        %v2645 = vld [vmem:[%s39 + $0x30] sm:$0xff]
        %v2646 = vld [vmem:[%s39 + $0x38] sm:$0xff]
        %v2647 = vld [vmem:[%s41] sm:$0x1]
        %v2648 = vld [vmem:[%s41 + $0x1] sm:$0x1]
        %v2649 = vld [vmem:[%s43] sm:$0xff]
        %v2650 = vld [vmem:[%s43 + $0x8] sm:$0xff]
        %v2651 = vld [vmem:[%s43 + $0x10] sm:$0xff]
        %v2652 = vld [vmem:[%s43 + $0x18] sm:$0xff]
        %v2653 = vld [vmem:[%s43 + $0x20] sm:$0xff]
        %v2654 = vld [vmem:[%s43 + $0x28] sm:$0xff]
        %v2655 = vld [vmem:[%s43 + $0x30] sm:$0xff]
        %v2656 = vld [vmem:[%s43 + $0x38] sm:$0xff]
        %v2657 = vld [vmem:[%s45] sm:$0x1]
        %v2658 = vld [vmem:[%s45 + $0x1] sm:$0x1]
        %v2659 = vld [vmem:[%s47] sm:$0xff]
        %v2660 = vld [vmem:[%s47 + $0x8] sm:$0xff]
        %v2661 = vld [vmem:[%s47 + $0x10] sm:$0xff]
        %v2662 = vld [vmem:[%s47 + $0x18] sm:$0xff]
        %v2663 = vld [vmem:[%s47 + $0x20] sm:$0xff]
        %v2664 = vld [vmem:[%s47 + $0x28] sm:$0xff]
        %v2665 = vld [vmem:[%s47 + $0x30] sm:$0xff]
        %v2666 = vld [vmem:[%s47 + $0x38] sm:$0xff]
        %v2667 = vld [vmem:[%s49] sm:$0x1]
        %v2668 = vld [vmem:[%s49 + $0x1] sm:$0x1]
        %v2669 = vld [vmem:[%s51] sm:$0xff]
        %v2670 = vld [vmem:[%s51 + $0x8] sm:$0xff]
        %v2671 = vld [vmem:[%s51 + $0x10] sm:$0xff]
        %v2672 = vld [vmem:[%s51 + $0x18] sm:$0xff]
        %v2673 = vld [vmem:[%s53] sm:$0x1]
        %v2676 = vlaneseq
        %v2677 = vshrl.u32 %v2676, 7
        %v2678 = vsub.s32 0, %v2677
        %v2679 = vrot.slane %v2647, %v2678
        %v2680 = vlaneseq
        %v2681 = vshrl.u32 %v2680, 7
        %v2682 = vsub.s32 0, %v2681
        %v2683 = vrot.slane %v2648, %v2682
        %v2687 = vsel %vm1474, %v2638, 0
        %2689 = vmatprep.subr.mxu0 0.0
        %2690 = vmatpush1.msra.mxu0 0.0
        %2691 = vmatprep.subr.mxu0 0.0
        %2692 = vmatpush1.msra.mxu0 0.0
        %2693 = vmatprep.subr.mxu0 0.0
        %2694 = vmatpush1.msra.mxu0 0.0
        %2695 = vmatprep.subr.mxu0 0.0
        %2696 = vmatpush1.msra.mxu0 0.0
        %2697 = vmatprep.subr.mxu0 0.0
        %2698 = vmatpush1.msra.mxu0 0.0
        %2699 = vmatprep.subr.mxu0 0.0
        %2700 = vmatpush1.msra.mxu0 0.0
        %2701 = vmatprep.subr.mxu0 0.0
        %2702 = vmatpush1.msra.mxu0 0.0
        %2703 = vmatprep.subr.mxu0 0.0
        %2704 = vmatpush1.msra.mxu0 0.0
        %2705 = vmatprep.subr.mxu0 0.0
        %2706 = vmatpush1.msra.mxu0 0.0
        %2707 = vmatprep.subr.mxu0 0.0
        %2708 = vmatpush1.msra.mxu0 0.0
        %2709 = vmatprep.subr.mxu0 0.0
        %2710 = vmatpush1.msra.mxu0 0.0
        %2711 = vmatprep.subr.mxu0 0.0
        %2712 = vmatpush1.msra.mxu0 0.0
        %2713 = vmatprep.subr.mxu0 0.0
        %2714 = vmatpush1.msra.mxu0 %v2642
        %2715 = vmatprep.subr.mxu0 0.0
        %2716 = vmatpush1.msra.mxu0 %v2641
        %2717 = vmatprep.subr.mxu0 0.0
        %2718 = vmatpush1.msra.mxu0 %v2640
        %2719 = vmatprep.subr.mxu0 0.0
        %2720 = vmatpush1.msra.mxu0 %v2639
        %2721 = vmatprep.subr.mxu0 0.0
        %2722 = vmatpush2.msra.mxu0 0.0
        %2723 = vmatprep.subr.mxu0 0.0
        %2724 = vmatpush2.msra.mxu0 0.0
        %2725 = vmatprep.subr.mxu0 0.0
        %2726 = vmatpush2.msra.mxu0 0.0
        %2727 = vmatprep.subr.mxu0 0.0
        %2728 = vmatpush2.msra.mxu0 0.0
        %2729 = vmatprep.subr.mxu0 0.0
        %2730 = vmatpush2.msra.mxu0 0.0
        %2731 = vmatprep.subr.mxu0 0.0
        %2732 = vmatpush2.msra.mxu0 0.0
        %2733 = vmatprep.subr.mxu0 0.0
        %2734 = vmatpush2.msra.mxu0 0.0
        %2735 = vmatprep.subr.mxu0 0.0
        %2736 = vmatpush2.msra.mxu0 0.0
        %2737 = vmatprep.subr.mxu0 0.0
        %2738 = vmatpush2.msra.mxu0 0.0
        %2739 = vmatprep.subr.mxu0 0.0
        %2740 = vmatpush2.msra.mxu0 0.0
        %2741 = vmatprep.subr.mxu0 0.0
        %2742 = vmatpush2.msra.mxu0 0.0
        %2743 = vmatprep.subr.mxu0 0.0
        %2744 = vmatpush2.msra.mxu0 0.0
        %2745 = vmatprep.subr.mxu0 0.0
        %2746 = vmatpush2.msra.mxu0 0.0
        %2747 = vmatprep.subr.mxu0 0.0
        %2748 = vmatpush2.msra.mxu0 0.0
        %2749 = vmatprep.subr.mxu0 0.0
        %2750 = vmatpush2.msra.mxu0 0.0
        %2751 = vmatprep.subr.mxu0 0.0
        %2752 = vmatpush2.msra.mxu0 0.0
        %2753 = vmatprep.mubr.f32.mxu0 0.0
        %2754 = vmatmul.mubr.f32.gmra.mxu0 %v2687
        %v2755 = vpop.f32.mrf.mxu0
        %v2756 = vadd.f32 %v2679, %v2755
        %v2757 = vpop.f32.mrf.mxu0
        %2758 = vdwg.mxu0
        %2759 = vmatprep.subr.mxu0 0.0
        %2760 = vmatpush1.msra.mxu0 0.0
        %2761 = vmatprep.subr.mxu0 0.0
        %2762 = vmatpush1.msra.mxu0 0.0
        %2763 = vmatprep.subr.mxu0 0.0
        %2764 = vmatpush1.msra.mxu0 0.0
        %2765 = vmatprep.subr.mxu0 0.0
        %2766 = vmatpush1.msra.mxu0 0.0
        %2767 = vmatprep.subr.mxu0 0.0
        %2768 = vmatpush1.msra.mxu0 0.0
        %2769 = vmatprep.subr.mxu0 0.0
        %2770 = vmatpush1.msra.mxu0 0.0
        %2771 = vmatprep.subr.mxu0 0.0
        %2772 = vmatpush1.msra.mxu0 0.0
        %2773 = vmatprep.subr.mxu0 0.0
        %2774 = vmatpush1.msra.mxu0 0.0
        %2775 = vmatprep.subr.mxu0 0.0
        %2776 = vmatpush1.msra.mxu0 0.0
        %2777 = vmatprep.subr.mxu0 0.0
        %2778 = vmatpush1.msra.mxu0 0.0
        %2779 = vmatprep.subr.mxu0 0.0
        %2780 = vmatpush1.msra.mxu0 0.0
        %2781 = vmatprep.subr.mxu0 0.0
        %2782 = vmatpush1.msra.mxu0 0.0
        %2783 = vmatprep.subr.mxu0 0.0
        %2784 = vmatpush1.msra.mxu0 %v2646
        %2785 = vmatprep.subr.mxu0 0.0
        %2786 = vmatpush1.msra.mxu0 %v2645
        %2787 = vmatprep.subr.mxu0 0.0
        %2788 = vmatpush1.msra.mxu0 %v2644
        %2789 = vmatprep.subr.mxu0 0.0
        %2790 = vmatpush1.msra.mxu0 %v2643
        %2791 = vmatprep.subr.mxu0 0.0
        %2792 = vmatpush2.msra.mxu0 0.0
        %2793 = vmatprep.subr.mxu0 0.0
        %2794 = vmatpush2.msra.mxu0 0.0
        %2795 = vmatprep.subr.mxu0 0.0
        %2796 = vmatpush2.msra.mxu0 0.0
        %2797 = vmatprep.subr.mxu0 0.0
        %2798 = vmatpush2.msra.mxu0 0.0
        %2799 = vmatprep.subr.mxu0 0.0
        %2800 = vmatpush2.msra.mxu0 0.0
        %2801 = vmatprep.subr.mxu0 0.0
        %2802 = vmatpush2.msra.mxu0 0.0
        %2803 = vmatprep.subr.mxu0 0.0
        %2804 = vmatpush2.msra.mxu0 0.0
        %2805 = vmatprep.subr.mxu0 0.0
        %2806 = vmatpush2.msra.mxu0 0.0
        %2807 = vmatprep.subr.mxu0 0.0
        %2808 = vmatpush2.msra.mxu0 0.0
        %2809 = vmatprep.subr.mxu0 0.0
        %2810 = vmatpush2.msra.mxu0 0.0
        %2811 = vmatprep.subr.mxu0 0.0
        %2812 = vmatpush2.msra.mxu0 0.0
        %2813 = vmatprep.subr.mxu0 0.0
        %2814 = vmatpush2.msra.mxu0 0.0
        %2815 = vmatprep.subr.mxu0 0.0
        %2816 = vmatpush2.msra.mxu0 0.0
        %2817 = vmatprep.subr.mxu0 0.0
        %2818 = vmatpush2.msra.mxu0 0.0
        %2819 = vmatprep.subr.mxu0 0.0
        %2820 = vmatpush2.msra.mxu0 0.0
        %2821 = vmatprep.subr.mxu0 0.0
        %2822 = vmatpush2.msra.mxu0 0.0
        %2823 = vmatprep.mubr.f32.mxu0 0.0
        %2824 = vmatmul.mubr.f32.gmra.mxu0 %v2687
        %v2825 = vpop.f32.mrf.mxu0
        %v2826 = vadd.f32 %v2683, %v2825
        %v2827 = vpop.f32.mrf.mxu0
        %2828 = vdwg.mxu0
        %v2831 = vlaneseq
        %v2832 = vshrl.u32 %v2831, 7
        %v2833 = vsub.s32 0, %v2832
        %v2834 = vrot.slane %v2657, %v2833
        %v2835 = vlaneseq
        %v2836 = vshrl.u32 %v2835, 7
        %v2837 = vsub.s32 0, %v2836
        %v2838 = vrot.slane %v2658, %v2837
        %2841 = vmatprep.subr.mxu0 0.0
        %2842 = vmatpush1.msra.mxu0 0.0
        %2843 = vmatprep.subr.mxu0 0.0
        %2844 = vmatpush1.msra.mxu0 0.0
        %2845 = vmatprep.subr.mxu0 0.0
        %2846 = vmatpush1.msra.mxu0 0.0
        %2847 = vmatprep.subr.mxu0 0.0
        %2848 = vmatpush1.msra.mxu0 0.0
        %2849 = vmatprep.subr.mxu0 0.0
        %2850 = vmatpush1.msra.mxu0 0.0
        %2851 = vmatprep.subr.mxu0 0.0
        %2852 = vmatpush1.msra.mxu0 0.0
        %2853 = vmatprep.subr.mxu0 0.0
        %2854 = vmatpush1.msra.mxu0 0.0
        %2855 = vmatprep.subr.mxu0 0.0
        %2856 = vmatpush1.msra.mxu0 0.0
        %2857 = vmatprep.subr.mxu0 0.0
        %2858 = vmatpush1.msra.mxu0 0.0
        %2859 = vmatprep.subr.mxu0 0.0
        %2860 = vmatpush1.msra.mxu0 0.0
        %2861 = vmatprep.subr.mxu0 0.0
        %2862 = vmatpush1.msra.mxu0 0.0
        %2863 = vmatprep.subr.mxu0 0.0
        %2864 = vmatpush1.msra.mxu0 0.0
        %2865 = vmatprep.subr.mxu0 0.0
        %2866 = vmatpush1.msra.mxu0 %v2652
        %2867 = vmatprep.subr.mxu0 0.0
        %2868 = vmatpush1.msra.mxu0 %v2651
        %2869 = vmatprep.subr.mxu0 0.0
        %2870 = vmatpush1.msra.mxu0 %v2650
        %2871 = vmatprep.subr.mxu0 0.0
        %2872 = vmatpush1.msra.mxu0 %v2649
        %2873 = vmatprep.subr.mxu0 0.0
        %2874 = vmatpush2.msra.mxu0 0.0
        %2875 = vmatprep.subr.mxu0 0.0
        %2876 = vmatpush2.msra.mxu0 0.0
        %2877 = vmatprep.subr.mxu0 0.0
        %2878 = vmatpush2.msra.mxu0 0.0
        %2879 = vmatprep.subr.mxu0 0.0
        %2880 = vmatpush2.msra.mxu0 0.0
        %2881 = vmatprep.subr.mxu0 0.0
        %2882 = vmatpush2.msra.mxu0 0.0
        %2883 = vmatprep.subr.mxu0 0.0
        %2884 = vmatpush2.msra.mxu0 0.0
        %2885 = vmatprep.subr.mxu0 0.0
        %2886 = vmatpush2.msra.mxu0 0.0
        %2887 = vmatprep.subr.mxu0 0.0
        %2888 = vmatpush2.msra.mxu0 0.0
        %2889 = vmatprep.subr.mxu0 0.0
        %2890 = vmatpush2.msra.mxu0 0.0
        %2891 = vmatprep.subr.mxu0 0.0
        %2892 = vmatpush2.msra.mxu0 0.0
        %2893 = vmatprep.subr.mxu0 0.0
        %2894 = vmatpush2.msra.mxu0 0.0
        %2895 = vmatprep.subr.mxu0 0.0
        %2896 = vmatpush2.msra.mxu0 0.0
        %2897 = vmatprep.subr.mxu0 0.0
        %2898 = vmatpush2.msra.mxu0 0.0
        %2899 = vmatprep.subr.mxu0 0.0
        %2900 = vmatpush2.msra.mxu0 0.0
        %2901 = vmatprep.subr.mxu0 0.0
        %2902 = vmatpush2.msra.mxu0 0.0
        %2903 = vmatprep.subr.mxu0 0.0
        %2904 = vmatpush2.msra.mxu0 0.0
        %2905 = vmatprep.mubr.f32.mxu0 0.0
        %2906 = vmatmul.mubr.f32.gmra.mxu0 %v2687
        %v2907 = vpop.f32.mrf.mxu0
        %v2908 = vadd.f32 %v2834, %v2907
        %v2909 = vpop.f32.mrf.mxu0
        %2910 = vdwg.mxu0
        %2911 = vmatprep.subr.mxu0 0.0
        %2912 = vmatpush1.msra.mxu0 0.0
        %2913 = vmatprep.subr.mxu0 0.0
        %2914 = vmatpush1.msra.mxu0 0.0
        %2915 = vmatprep.subr.mxu0 0.0
        %2916 = vmatpush1.msra.mxu0 0.0
        %2917 = vmatprep.subr.mxu0 0.0
        %2918 = vmatpush1.msra.mxu0 0.0
        %2919 = vmatprep.subr.mxu0 0.0
        %2920 = vmatpush1.msra.mxu0 0.0
        %2921 = vmatprep.subr.mxu0 0.0
        %2922 = vmatpush1.msra.mxu0 0.0
        %2923 = vmatprep.subr.mxu0 0.0
        %2924 = vmatpush1.msra.mxu0 0.0
        %2925 = vmatprep.subr.mxu0 0.0
        %2926 = vmatpush1.msra.mxu0 0.0
        %2927 = vmatprep.subr.mxu0 0.0
        %2928 = vmatpush1.msra.mxu0 0.0
        %2929 = vmatprep.subr.mxu0 0.0
        %2930 = vmatpush1.msra.mxu0 0.0
        %2931 = vmatprep.subr.mxu0 0.0
        %2932 = vmatpush1.msra.mxu0 0.0
        %2933 = vmatprep.subr.mxu0 0.0
        %2934 = vmatpush1.msra.mxu0 0.0
        %2935 = vmatprep.subr.mxu0 0.0
        %2936 = vmatpush1.msra.mxu0 %v2656
        %2937 = vmatprep.subr.mxu0 0.0
        %2938 = vmatpush1.msra.mxu0 %v2655
        %2939 = vmatprep.subr.mxu0 0.0
        %2940 = vmatpush1.msra.mxu0 %v2654
        %2941 = vmatprep.subr.mxu0 0.0
        %2942 = vmatpush1.msra.mxu0 %v2653
        %2943 = vmatprep.subr.mxu0 0.0
        %2944 = vmatpush2.msra.mxu0 0.0
        %2945 = vmatprep.subr.mxu0 0.0
        %2946 = vmatpush2.msra.mxu0 0.0
        %2947 = vmatprep.subr.mxu0 0.0
        %2948 = vmatpush2.msra.mxu0 0.0
        %2949 = vmatprep.subr.mxu0 0.0
        %2950 = vmatpush2.msra.mxu0 0.0
        %2951 = vmatprep.subr.mxu0 0.0
        %2952 = vmatpush2.msra.mxu0 0.0
        %2953 = vmatprep.subr.mxu0 0.0
        %2954 = vmatpush2.msra.mxu0 0.0
        %2955 = vmatprep.subr.mxu0 0.0
        %2956 = vmatpush2.msra.mxu0 0.0
        %2957 = vmatprep.subr.mxu0 0.0
        %2958 = vmatpush2.msra.mxu0 0.0
        %2959 = vmatprep.subr.mxu0 0.0
        %2960 = vmatpush2.msra.mxu0 0.0
        %2961 = vmatprep.subr.mxu0 0.0
        %2962 = vmatpush2.msra.mxu0 0.0
        %2963 = vmatprep.subr.mxu0 0.0
        %2964 = vmatpush2.msra.mxu0 0.0
        %2965 = vmatprep.subr.mxu0 0.0
        %2966 = vmatpush2.msra.mxu0 0.0
        %2967 = vmatprep.subr.mxu0 0.0
        %2968 = vmatpush2.msra.mxu0 0.0
        %2969 = vmatprep.subr.mxu0 0.0
        %2970 = vmatpush2.msra.mxu0 0.0
        %2971 = vmatprep.subr.mxu0 0.0
        %2972 = vmatpush2.msra.mxu0 0.0
        %2973 = vmatprep.subr.mxu0 0.0
        %2974 = vmatpush2.msra.mxu0 0.0
        %2975 = vmatprep.mubr.f32.mxu0 0.0
        %2976 = vmatmul.mubr.f32.gmra.mxu0 %v2687
        %v2977 = vpop.f32.mrf.mxu0
        %v2978 = vadd.f32 %v2838, %v2977
        %v2979 = vpop.f32.mrf.mxu0
        %2980 = vdwg.mxu0
        %v2983 = vlaneseq
        %v2984 = vshrl.u32 %v2983, 7
        %v2985 = vsub.s32 0, %v2984
        %v2986 = vrot.slane %v2667, %v2985
        %v2987 = vlaneseq
        %v2988 = vshrl.u32 %v2987, 7
        %v2989 = vsub.s32 0, %v2988
        %v2990 = vrot.slane %v2668, %v2989
        %2993 = vmatprep.subr.mxu0 0.0
        %2994 = vmatpush1.msra.mxu0 0.0
        %2995 = vmatprep.subr.mxu0 0.0
        %2996 = vmatpush1.msra.mxu0 0.0
        %2997 = vmatprep.subr.mxu0 0.0
        %2998 = vmatpush1.msra.mxu0 0.0
        %2999 = vmatprep.subr.mxu0 0.0
        %3000 = vmatpush1.msra.mxu0 0.0
        %3001 = vmatprep.subr.mxu0 0.0
        %3002 = vmatpush1.msra.mxu0 0.0
        %3003 = vmatprep.subr.mxu0 0.0
        %3004 = vmatpush1.msra.mxu0 0.0
        %3005 = vmatprep.subr.mxu0 0.0
        %3006 = vmatpush1.msra.mxu0 0.0
        %3007 = vmatprep.subr.mxu0 0.0
        %3008 = vmatpush1.msra.mxu0 0.0
        %3009 = vmatprep.subr.mxu0 0.0
        %3010 = vmatpush1.msra.mxu0 0.0
        %3011 = vmatprep.subr.mxu0 0.0
        %3012 = vmatpush1.msra.mxu0 0.0
        %3013 = vmatprep.subr.mxu0 0.0
        %3014 = vmatpush1.msra.mxu0 0.0
        %3015 = vmatprep.subr.mxu0 0.0
        %3016 = vmatpush1.msra.mxu0 0.0
        %3017 = vmatprep.subr.mxu0 0.0
        %3018 = vmatpush1.msra.mxu0 %v2662
        %3019 = vmatprep.subr.mxu0 0.0
        %3020 = vmatpush1.msra.mxu0 %v2661
        %3021 = vmatprep.subr.mxu0 0.0
        %3022 = vmatpush1.msra.mxu0 %v2660
        %3023 = vmatprep.subr.mxu0 0.0
        %3024 = vmatpush1.msra.mxu0 %v2659
        %3025 = vmatprep.subr.mxu0 0.0
        %3026 = vmatpush2.msra.mxu0 0.0
        %3027 = vmatprep.subr.mxu0 0.0
        %3028 = vmatpush2.msra.mxu0 0.0
        %3029 = vmatprep.subr.mxu0 0.0
        %3030 = vmatpush2.msra.mxu0 0.0
        %3031 = vmatprep.subr.mxu0 0.0
        %3032 = vmatpush2.msra.mxu0 0.0
        %3033 = vmatprep.subr.mxu0 0.0
        %3034 = vmatpush2.msra.mxu0 0.0
        %3035 = vmatprep.subr.mxu0 0.0
        %3036 = vmatpush2.msra.mxu0 0.0
        %3037 = vmatprep.subr.mxu0 0.0
        %3038 = vmatpush2.msra.mxu0 0.0
        %3039 = vmatprep.subr.mxu0 0.0
        %3040 = vmatpush2.msra.mxu0 0.0
        %3041 = vmatprep.subr.mxu0 0.0
        %3042 = vmatpush2.msra.mxu0 0.0
        %3043 = vmatprep.subr.mxu0 0.0
        %3044 = vmatpush2.msra.mxu0 0.0
        %3045 = vmatprep.subr.mxu0 0.0
        %3046 = vmatpush2.msra.mxu0 0.0
        %3047 = vmatprep.subr.mxu0 0.0
        %3048 = vmatpush2.msra.mxu0 0.0
        %3049 = vmatprep.subr.mxu0 0.0
        %3050 = vmatpush2.msra.mxu0 0.0
        %3051 = vmatprep.subr.mxu0 0.0
        %3052 = vmatpush2.msra.mxu0 0.0
        %3053 = vmatprep.subr.mxu0 0.0
        %3054 = vmatpush2.msra.mxu0 0.0
        %3055 = vmatprep.subr.mxu0 0.0
        %3056 = vmatpush2.msra.mxu0 0.0
        %3057 = vmatprep.mubr.f32.mxu0 0.0
        %3058 = vmatmul.mubr.f32.gmra.mxu0 %v2687
        %v3059 = vpop.f32.mrf.mxu0
        %v3060 = vadd.f32 %v2986, %v3059
        %v3061 = vpop.f32.mrf.mxu0
        %3062 = vdwg.mxu0
        %3063 = vmatprep.subr.mxu0 0.0
        %3064 = vmatpush1.msra.mxu0 0.0
        %3065 = vmatprep.subr.mxu0 0.0
        %3066 = vmatpush1.msra.mxu0 0.0
        %3067 = vmatprep.subr.mxu0 0.0
        %3068 = vmatpush1.msra.mxu0 0.0
        %3069 = vmatprep.subr.mxu0 0.0
        %3070 = vmatpush1.msra.mxu0 0.0
        %3071 = vmatprep.subr.mxu0 0.0
        %3072 = vmatpush1.msra.mxu0 0.0
        %3073 = vmatprep.subr.mxu0 0.0
        %3074 = vmatpush1.msra.mxu0 0.0
        %3075 = vmatprep.subr.mxu0 0.0
        %3076 = vmatpush1.msra.mxu0 0.0
        %3077 = vmatprep.subr.mxu0 0.0
        %3078 = vmatpush1.msra.mxu0 0.0
        %3079 = vmatprep.subr.mxu0 0.0
        %3080 = vmatpush1.msra.mxu0 0.0
        %3081 = vmatprep.subr.mxu0 0.0
        %3082 = vmatpush1.msra.mxu0 0.0
        %3083 = vmatprep.subr.mxu0 0.0
        %3084 = vmatpush1.msra.mxu0 0.0
        %3085 = vmatprep.subr.mxu0 0.0
        %3086 = vmatpush1.msra.mxu0 0.0
        %3087 = vmatprep.subr.mxu0 0.0
        %3088 = vmatpush1.msra.mxu0 %v2666
        %3089 = vmatprep.subr.mxu0 0.0
        %3090 = vmatpush1.msra.mxu0 %v2665
        %3091 = vmatprep.subr.mxu0 0.0
        %3092 = vmatpush1.msra.mxu0 %v2664
        %3093 = vmatprep.subr.mxu0 0.0
        %3094 = vmatpush1.msra.mxu0 %v2663
        %3095 = vmatprep.subr.mxu0 0.0
        %3096 = vmatpush2.msra.mxu0 0.0
        %3097 = vmatprep.subr.mxu0 0.0
        %3098 = vmatpush2.msra.mxu0 0.0
        %3099 = vmatprep.subr.mxu0 0.0
        %3100 = vmatpush2.msra.mxu0 0.0
        %3101 = vmatprep.subr.mxu0 0.0
        %3102 = vmatpush2.msra.mxu0 0.0
        %3103 = vmatprep.subr.mxu0 0.0
        %3104 = vmatpush2.msra.mxu0 0.0
        %3105 = vmatprep.subr.mxu0 0.0
        %3106 = vmatpush2.msra.mxu0 0.0
        %3107 = vmatprep.subr.mxu0 0.0
        %3108 = vmatpush2.msra.mxu0 0.0
        %3109 = vmatprep.subr.mxu0 0.0
        %3110 = vmatpush2.msra.mxu0 0.0
        %3111 = vmatprep.subr.mxu0 0.0
        %3112 = vmatpush2.msra.mxu0 0.0
        %3113 = vmatprep.subr.mxu0 0.0
        %3114 = vmatpush2.msra.mxu0 0.0
        %3115 = vmatprep.subr.mxu0 0.0
        %3116 = vmatpush2.msra.mxu0 0.0
        %3117 = vmatprep.subr.mxu0 0.0
        %3118 = vmatpush2.msra.mxu0 0.0
        %3119 = vmatprep.subr.mxu0 0.0
        %3120 = vmatpush2.msra.mxu0 0.0
        %3121 = vmatprep.subr.mxu0 0.0
        %3122 = vmatpush2.msra.mxu0 0.0
        %3123 = vmatprep.subr.mxu0 0.0
        %3124 = vmatpush2.msra.mxu0 0.0
        %3125 = vmatprep.subr.mxu0 0.0
        %3126 = vmatpush2.msra.mxu0 0.0
        %3127 = vmatprep.mubr.f32.mxu0 0.0
        %3128 = vmatmul.mubr.f32.gmra.mxu0 %v2687
        %v3129 = vpop.f32.mrf.mxu0
        %v3130 = vadd.f32 %v2990, %v3129
        %v3131 = vpop.f32.mrf.mxu0
        %3132 = vdwg.mxu0
        %v3134 = vsel %vm1922, %v2756, 0
        %v3137 = vsel %vm1922, %v2908, 0
        %3139 = vmatprep.subr.mxu0 0.0
        %3140 = vmatpush1.xpose.msra.mxu0 0.0
        %3141 = vmatprep.subr.mxu0 0.0
        %3142 = vmatpush1.xpose.msra.mxu0 0.0
        %3143 = vmatprep.subr.mxu0 0.0
        %3144 = vmatpush1.xpose.msra.mxu0 0.0
        %3145 = vmatprep.subr.mxu0 0.0
        %3146 = vmatpush1.xpose.msra.mxu0 0.0
        %3147 = vmatprep.subr.mxu0 0.0
        %3148 = vmatpush1.xpose.msra.mxu0 0.0
        %3149 = vmatprep.subr.mxu0 0.0
        %3150 = vmatpush1.xpose.msra.mxu0 0.0
        %3151 = vmatprep.subr.mxu0 0.0
        %3152 = vmatpush1.xpose.msra.mxu0 0.0
        %3153 = vmatprep.subr.mxu0 0.0
        %3154 = vmatpush1.xpose.msra.mxu0 0.0
        %3155 = vmatprep.subr.mxu0 0.0
        %3156 = vmatpush1.xpose.msra.mxu0 0.0
        %3157 = vmatprep.subr.mxu0 0.0
        %3158 = vmatpush1.xpose.msra.mxu0 0.0
        %3159 = vmatprep.subr.mxu0 0.0
        %3160 = vmatpush1.xpose.msra.mxu0 0.0
        %3161 = vmatprep.subr.mxu0 0.0
        %3162 = vmatpush1.xpose.msra.mxu0 0.0
        %3163 = vmatprep.subr.mxu0 0.0
        %3164 = vmatpush1.xpose.msra.mxu0 0.0
        %3165 = vmatprep.subr.mxu0 0.0
        %3166 = vmatpush1.xpose.msra.mxu0 0.0
        %3167 = vmatprep.subr.mxu0 0.0
        %3168 = vmatpush1.xpose.msra.mxu0 0.0
        %3169 = vmatprep.subr.mxu0 0.0
        %3170 = vmatpush1.xpose.msra.mxu0 %v3137
        %3171 = vmatprep.subr.mxu0 0.0
        %3172 = vmatpush2.xpose.msra.mxu0 0.0
        %3173 = vmatprep.subr.mxu0 0.0
        %3174 = vmatpush2.xpose.msra.mxu0 0.0
        %3175 = vmatprep.subr.mxu0 0.0
        %3176 = vmatpush2.xpose.msra.mxu0 0.0
        %3177 = vmatprep.subr.mxu0 0.0
        %3178 = vmatpush2.xpose.msra.mxu0 0.0
        %3179 = vmatprep.subr.mxu0 0.0
        %3180 = vmatpush2.xpose.msra.mxu0 0.0
        %3181 = vmatprep.subr.mxu0 0.0
        %3182 = vmatpush2.xpose.msra.mxu0 0.0
        %3183 = vmatprep.subr.mxu0 0.0
        %3184 = vmatpush2.xpose.msra.mxu0 0.0
        %3185 = vmatprep.subr.mxu0 0.0
        %3186 = vmatpush2.xpose.msra.mxu0 0.0
        %3187 = vmatprep.subr.mxu0 0.0
        %3188 = vmatpush2.xpose.msra.mxu0 0.0
        %3189 = vmatprep.subr.mxu0 0.0
        %3190 = vmatpush2.xpose.msra.mxu0 0.0
        %3191 = vmatprep.subr.mxu0 0.0
        %3192 = vmatpush2.xpose.msra.mxu0 0.0
        %3193 = vmatprep.subr.mxu0 0.0
        %3194 = vmatpush2.xpose.msra.mxu0 0.0
        %3195 = vmatprep.subr.mxu0 0.0
        %3196 = vmatpush2.xpose.msra.mxu0 0.0
        %3197 = vmatprep.subr.mxu0 0.0
        %3198 = vmatpush2.xpose.msra.mxu0 0.0
        %3199 = vmatprep.subr.mxu0 0.0
        %3200 = vmatpush2.xpose.msra.mxu0 0.0
        %3201 = vmatprep.subr.mxu0 0.0
        %3202 = vmatpush2.xpose.msra.mxu0 0.0
        %3203 = vmatprep.mubr.f32.mxu0 0.0
        %3204 = vmatmul.mubr.f32.gmra.mxu0 %v3134
        %v3205 = vpop.f32.mrf.mxu0
        %v3206 = vadd.f32 0.0, %v3205
        %v3207 = vpop.f32.mrf.mxu0
        %3208 = vdwg.mxu0
        %v3210 = vsel %vm1922, %v2826, 0
        %v3213 = vsel %vm1922, %v2978, 0
        %3215 = vmatprep.subr.mxu0 0.0
        %3216 = vmatpush1.xpose.msra.mxu0 0.0
        %3217 = vmatprep.subr.mxu0 0.0
        %3218 = vmatpush1.xpose.msra.mxu0 0.0
        %3219 = vmatprep.subr.mxu0 0.0
        %3220 = vmatpush1.xpose.msra.mxu0 0.0
        %3221 = vmatprep.subr.mxu0 0.0
        %3222 = vmatpush1.xpose.msra.mxu0 0.0
        %3223 = vmatprep.subr.mxu0 0.0
        %3224 = vmatpush1.xpose.msra.mxu0 0.0
        %3225 = vmatprep.subr.mxu0 0.0
        %3226 = vmatpush1.xpose.msra.mxu0 0.0
        %3227 = vmatprep.subr.mxu0 0.0
        %3228 = vmatpush1.xpose.msra.mxu0 0.0
        %3229 = vmatprep.subr.mxu0 0.0
        %3230 = vmatpush1.xpose.msra.mxu0 0.0
        %3231 = vmatprep.subr.mxu0 0.0
        %3232 = vmatpush1.xpose.msra.mxu0 0.0
        %3233 = vmatprep.subr.mxu0 0.0
        %3234 = vmatpush1.xpose.msra.mxu0 0.0
        %3235 = vmatprep.subr.mxu0 0.0
        %3236 = vmatpush1.xpose.msra.mxu0 0.0
        %3237 = vmatprep.subr.mxu0 0.0
        %3238 = vmatpush1.xpose.msra.mxu0 0.0
        %3239 = vmatprep.subr.mxu0 0.0
        %3240 = vmatpush1.xpose.msra.mxu0 0.0
        %3241 = vmatprep.subr.mxu0 0.0
        %3242 = vmatpush1.xpose.msra.mxu0 0.0
        %3243 = vmatprep.subr.mxu0 0.0
        %3244 = vmatpush1.xpose.msra.mxu0 0.0
        %3245 = vmatprep.subr.mxu0 0.0
        %3246 = vmatpush1.xpose.msra.mxu0 %v3213
        %3247 = vmatprep.subr.mxu0 0.0
        %3248 = vmatpush2.xpose.msra.mxu0 0.0
        %3249 = vmatprep.subr.mxu0 0.0
        %3250 = vmatpush2.xpose.msra.mxu0 0.0
        %3251 = vmatprep.subr.mxu0 0.0
        %3252 = vmatpush2.xpose.msra.mxu0 0.0
        %3253 = vmatprep.subr.mxu0 0.0
        %3254 = vmatpush2.xpose.msra.mxu0 0.0
        %3255 = vmatprep.subr.mxu0 0.0
        %3256 = vmatpush2.xpose.msra.mxu0 0.0
        %3257 = vmatprep.subr.mxu0 0.0
        %3258 = vmatpush2.xpose.msra.mxu0 0.0
        %3259 = vmatprep.subr.mxu0 0.0
        %3260 = vmatpush2.xpose.msra.mxu0 0.0
        %3261 = vmatprep.subr.mxu0 0.0
        %3262 = vmatpush2.xpose.msra.mxu0 0.0
        %3263 = vmatprep.subr.mxu0 0.0
        %3264 = vmatpush2.xpose.msra.mxu0 0.0
        %3265 = vmatprep.subr.mxu0 0.0
        %3266 = vmatpush2.xpose.msra.mxu0 0.0
        %3267 = vmatprep.subr.mxu0 0.0
        %3268 = vmatpush2.xpose.msra.mxu0 0.0
        %3269 = vmatprep.subr.mxu0 0.0
        %3270 = vmatpush2.xpose.msra.mxu0 0.0
        %3271 = vmatprep.subr.mxu0 0.0
        %3272 = vmatpush2.xpose.msra.mxu0 0.0
        %3273 = vmatprep.subr.mxu0 0.0
        %3274 = vmatpush2.xpose.msra.mxu0 0.0
        %3275 = vmatprep.subr.mxu0 0.0
        %3276 = vmatpush2.xpose.msra.mxu0 0.0
        %3277 = vmatprep.subr.mxu0 0.0
        %3278 = vmatpush2.xpose.msra.mxu0 0.0
        %3279 = vmatprep.mubr.f32.mxu0 0.0
        %3280 = vmatmul.mubr.f32.gmra.mxu0 %v3210
        %v3281 = vpop.f32.mrf.mxu0
        %v3282 = vadd.f32 0.0, %v3281
        %v3283 = vpop.f32.mrf.mxu0
        %3284 = vdwg.mxu0
        %v3285 = vmul.f32 %v3206, 0.25
        %v3286 = vmul.f32 %v3282, 0.25
        %v3287 = vsel %vm1424, 1, 0
        %vm3288 = vcmp.eq.s32.totalorder %v3287, 1
        %v3289 = vsel %vm3288, %v3285, -1e+30
        %v3290 = vsel %vm3288, %v3286, -1e+30
        %v3291 = vsel %vm2077, %v3289, -inf
        %3292 = vmax.xlane.f32.xlu0 %v3291
        %v3293 = vpop.xlane.xlu0 %3292
        %v3294 = vsel %vm2077, %v3290, -inf
        %3295 = vmax.xlane.f32.xlu0 %v3294
        %v3296 = vpop.xlane.xlu0 %3295
        %v3297 = vsub.f32 %v3289, %v3293
        %v3298 = vsub.f32 %v3290, %v3296
        %v3299 = vmul.f32 %v3297, 1.442695
        %v3300 = vpow.pop %v3299
        %v3301 = vmul.f32 %v3298, 1.442695
        %v3302 = vpow.pop %v3301
        %v3303 = vsel %vm2077, %v3300, 0.0
        %3304 = vadd.xlane.f32.xlu0 %v3303
        %v3305 = vpop.xlane.xlu0 %3304
        %v3306 = vsel %vm2077, %v3302, 0.0
        %3307 = vadd.xlane.f32.xlu0 %v3306
        %v3308 = vpop.xlane.xlu0 %3307
        %v3309 = vrcp.pop %v3305
        %v3310 = vrcp.pop %v3308
        %v3311 = vmul.f32 %v3300, %v3309
        %v3312 = vmul.f32 %v3302, %v3310
        %v3314 = vsel %vm2077, %v3311, 0
        %3316 = vmatprep.subr.mxu0 0.0
        %3317 = vmatpush1.msra.mxu0 0.0
        %3318 = vmatprep.subr.mxu0 0.0
        %3319 = vmatpush1.msra.mxu0 0.0
        %3320 = vmatprep.subr.mxu0 0.0
        %3321 = vmatpush1.msra.mxu0 0.0
        %3322 = vmatprep.subr.mxu0 0.0
        %3323 = vmatpush1.msra.mxu0 0.0
        %3324 = vmatprep.subr.mxu0 0.0
        %3325 = vmatpush1.msra.mxu0 0.0
        %3326 = vmatprep.subr.mxu0 0.0
        %3327 = vmatpush1.msra.mxu0 0.0
        %3328 = vmatprep.subr.mxu0 0.0
        %3329 = vmatpush1.msra.mxu0 0.0
        %3330 = vmatprep.subr.mxu0 0.0
        %3331 = vmatpush1.msra.mxu0 0.0
        %3332 = vmatprep.subr.mxu0 0.0
        %3333 = vmatpush1.msra.mxu0 0.0
        %3334 = vmatprep.subr.mxu0 0.0
        %3335 = vmatpush1.msra.mxu0 0.0
        %3336 = vmatprep.subr.mxu0 0.0
        %3337 = vmatpush1.msra.mxu0 0.0
        %3338 = vmatprep.subr.mxu0 0.0
        %3339 = vmatpush1.msra.mxu0 0.0
        %3340 = vmatprep.subr.mxu0 0.0
        %3341 = vmatpush1.msra.mxu0 0.0
        %3342 = vmatprep.subr.mxu0 0.0
        %3343 = vmatpush1.msra.mxu0 0.0
        %3344 = vmatprep.subr.mxu0 0.0
        %3345 = vmatpush1.msra.mxu0 0.0
        %3346 = vmatprep.subr.mxu0 0.0
        %3347 = vmatpush1.msra.mxu0 %v3060
        %3348 = vmatprep.subr.mxu0 0.0
        %3349 = vmatpush2.msra.mxu0 0.0
        %3350 = vmatprep.subr.mxu0 0.0
        %3351 = vmatpush2.msra.mxu0 0.0
        %3352 = vmatprep.subr.mxu0 0.0
        %3353 = vmatpush2.msra.mxu0 0.0
        %3354 = vmatprep.subr.mxu0 0.0
        %3355 = vmatpush2.msra.mxu0 0.0
        %3356 = vmatprep.subr.mxu0 0.0
        %3357 = vmatpush2.msra.mxu0 0.0
        %3358 = vmatprep.subr.mxu0 0.0
        %3359 = vmatpush2.msra.mxu0 0.0
        %3360 = vmatprep.subr.mxu0 0.0
        %3361 = vmatpush2.msra.mxu0 0.0
        %3362 = vmatprep.subr.mxu0 0.0
        %3363 = vmatpush2.msra.mxu0 0.0
        %3364 = vmatprep.subr.mxu0 0.0
        %3365 = vmatpush2.msra.mxu0 0.0
        %3366 = vmatprep.subr.mxu0 0.0
        %3367 = vmatpush2.msra.mxu0 0.0
        %3368 = vmatprep.subr.mxu0 0.0
        %3369 = vmatpush2.msra.mxu0 0.0
        %3370 = vmatprep.subr.mxu0 0.0
        %3371 = vmatpush2.msra.mxu0 0.0
        %3372 = vmatprep.subr.mxu0 0.0
        %3373 = vmatpush2.msra.mxu0 0.0
        %3374 = vmatprep.subr.mxu0 0.0
        %3375 = vmatpush2.msra.mxu0 0.0
        %3376 = vmatprep.subr.mxu0 0.0
        %3377 = vmatpush2.msra.mxu0 0.0
        %3378 = vmatprep.subr.mxu0 0.0
        %3379 = vmatpush2.msra.mxu0 0.0
        %3380 = vmatprep.mubr.f32.mxu0 0.0
        %3381 = vmatmul.mubr.f32.gmra.mxu0 %v3314
        %v3382 = vpop.f32.mrf.mxu0
        %v3383 = vadd.f32 0.0, %v3382
        %v3384 = vpop.f32.mrf.mxu0
        %3385 = vdwg.mxu0
        %v3387 = vsel %vm2077, %v3312, 0
        %3389 = vmatprep.subr.mxu0 0.0
        %3390 = vmatpush1.msra.mxu0 0.0
        %3391 = vmatprep.subr.mxu0 0.0
        %3392 = vmatpush1.msra.mxu0 0.0
        %3393 = vmatprep.subr.mxu0 0.0
        %3394 = vmatpush1.msra.mxu0 0.0
        %3395 = vmatprep.subr.mxu0 0.0
        %3396 = vmatpush1.msra.mxu0 0.0
        %3397 = vmatprep.subr.mxu0 0.0
        %3398 = vmatpush1.msra.mxu0 0.0
        %3399 = vmatprep.subr.mxu0 0.0
        %3400 = vmatpush1.msra.mxu0 0.0
        %3401 = vmatprep.subr.mxu0 0.0
        %3402 = vmatpush1.msra.mxu0 0.0
        %3403 = vmatprep.subr.mxu0 0.0
        %3404 = vmatpush1.msra.mxu0 0.0
        %3405 = vmatprep.subr.mxu0 0.0
        %3406 = vmatpush1.msra.mxu0 0.0
        %3407 = vmatprep.subr.mxu0 0.0
        %3408 = vmatpush1.msra.mxu0 0.0
        %3409 = vmatprep.subr.mxu0 0.0
        %3410 = vmatpush1.msra.mxu0 0.0
        %3411 = vmatprep.subr.mxu0 0.0
        %3412 = vmatpush1.msra.mxu0 0.0
        %3413 = vmatprep.subr.mxu0 0.0
        %3414 = vmatpush1.msra.mxu0 0.0
        %3415 = vmatprep.subr.mxu0 0.0
        %3416 = vmatpush1.msra.mxu0 0.0
        %3417 = vmatprep.subr.mxu0 0.0
        %3418 = vmatpush1.msra.mxu0 0.0
        %3419 = vmatprep.subr.mxu0 0.0
        %3420 = vmatpush1.msra.mxu0 %v3130
        %3421 = vmatprep.subr.mxu0 0.0
        %3422 = vmatpush2.msra.mxu0 0.0
        %3423 = vmatprep.subr.mxu0 0.0
        %3424 = vmatpush2.msra.mxu0 0.0
        %3425 = vmatprep.subr.mxu0 0.0
        %3426 = vmatpush2.msra.mxu0 0.0
        %3427 = vmatprep.subr.mxu0 0.0
        %3428 = vmatpush2.msra.mxu0 0.0
        %3429 = vmatprep.subr.mxu0 0.0
        %3430 = vmatpush2.msra.mxu0 0.0
        %3431 = vmatprep.subr.mxu0 0.0
        %3432 = vmatpush2.msra.mxu0 0.0
        %3433 = vmatprep.subr.mxu0 0.0
        %3434 = vmatpush2.msra.mxu0 0.0
        %3435 = vmatprep.subr.mxu0 0.0
        %3436 = vmatpush2.msra.mxu0 0.0
        %3437 = vmatprep.subr.mxu0 0.0
        %3438 = vmatpush2.msra.mxu0 0.0
        %3439 = vmatprep.subr.mxu0 0.0
        %3440 = vmatpush2.msra.mxu0 0.0
        %3441 = vmatprep.subr.mxu0 0.0
        %3442 = vmatpush2.msra.mxu0 0.0
        %3443 = vmatprep.subr.mxu0 0.0
        %3444 = vmatpush2.msra.mxu0 0.0
        %3445 = vmatprep.subr.mxu0 0.0
        %3446 = vmatpush2.msra.mxu0 0.0
        %3447 = vmatprep.subr.mxu0 0.0
        %3448 = vmatpush2.msra.mxu0 0.0
        %3449 = vmatprep.subr.mxu0 0.0
        %3450 = vmatpush2.msra.mxu0 0.0
        %3451 = vmatprep.subr.mxu0 0.0
        %3452 = vmatpush2.msra.mxu0 0.0
        %3453 = vmatprep.mubr.f32.mxu0 0.0
        %3454 = vmatmul.mubr.f32.gmra.mxu0 %v3387
        %v3455 = vpop.f32.mrf.mxu0
        %v3456 = vadd.f32 0.0, %v3455
        %v3457 = vpop.f32.mrf.mxu0
        %3458 = vdwg.mxu0
        %v3460 = vsel %vm1922, %v3383, 0
        %3462 = vmatprep.subr.mxu0 0.0
        %3463 = vmatpush1.msra.mxu0 0.0
        %3464 = vmatprep.subr.mxu0 0.0
        %3465 = vmatpush1.msra.mxu0 0.0
        %3466 = vmatprep.subr.mxu0 0.0
        %3467 = vmatpush1.msra.mxu0 0.0
        %3468 = vmatprep.subr.mxu0 0.0
        %3469 = vmatpush1.msra.mxu0 0.0
        %3470 = vmatprep.subr.mxu0 0.0
        %3471 = vmatpush1.msra.mxu0 0.0
        %3472 = vmatprep.subr.mxu0 0.0
        %3473 = vmatpush1.msra.mxu0 0.0
        %3474 = vmatprep.subr.mxu0 0.0
        %3475 = vmatpush1.msra.mxu0 0.0
        %3476 = vmatprep.subr.mxu0 0.0
        %3477 = vmatpush1.msra.mxu0 0.0
        %3478 = vmatprep.subr.mxu0 0.0
        %3479 = vmatpush1.msra.mxu0 0.0
        %3480 = vmatprep.subr.mxu0 0.0
        %3481 = vmatpush1.msra.mxu0 0.0
        %3482 = vmatprep.subr.mxu0 0.0
        %3483 = vmatpush1.msra.mxu0 0.0
        %3484 = vmatprep.subr.mxu0 0.0
        %3485 = vmatpush1.msra.mxu0 0.0
        %3486 = vmatprep.subr.mxu0 0.0
        %3487 = vmatpush1.msra.mxu0 0.0
        %3488 = vmatprep.subr.mxu0 0.0
        %3489 = vmatpush1.msra.mxu0 0.0
        %3490 = vmatprep.subr.mxu0 0.0
        %3491 = vmatpush1.msra.mxu0 %v2670
        %3492 = vmatprep.subr.mxu0 0.0
        %3493 = vmatpush1.msra.mxu0 %v2669
        %3494 = vmatprep.subr.mxu0 0.0
        %3495 = vmatpush2.msra.mxu0 0.0
        %3496 = vmatprep.subr.mxu0 0.0
        %3497 = vmatpush2.msra.mxu0 0.0
        %3498 = vmatprep.subr.mxu0 0.0
        %3499 = vmatpush2.msra.mxu0 0.0
        %3500 = vmatprep.subr.mxu0 0.0
        %3501 = vmatpush2.msra.mxu0 0.0
        %3502 = vmatprep.subr.mxu0 0.0
        %3503 = vmatpush2.msra.mxu0 0.0
        %3504 = vmatprep.subr.mxu0 0.0
        %3505 = vmatpush2.msra.mxu0 0.0
        %3506 = vmatprep.subr.mxu0 0.0
        %3507 = vmatpush2.msra.mxu0 0.0
        %3508 = vmatprep.subr.mxu0 0.0
        %3509 = vmatpush2.msra.mxu0 0.0
        %3510 = vmatprep.subr.mxu0 0.0
        %3511 = vmatpush2.msra.mxu0 0.0
        %3512 = vmatprep.subr.mxu0 0.0
        %3513 = vmatpush2.msra.mxu0 0.0
        %3514 = vmatprep.subr.mxu0 0.0
        %3515 = vmatpush2.msra.mxu0 0.0
        %3516 = vmatprep.subr.mxu0 0.0
        %3517 = vmatpush2.msra.mxu0 0.0
        %3518 = vmatprep.subr.mxu0 0.0
        %3519 = vmatpush2.msra.mxu0 0.0
        %3520 = vmatprep.subr.mxu0 0.0
        %3521 = vmatpush2.msra.mxu0 0.0
        %3522 = vmatprep.subr.mxu0 0.0
        %3523 = vmatpush2.msra.mxu0 0.0
        %3524 = vmatprep.subr.mxu0 0.0
        %3525 = vmatpush2.msra.mxu0 0.0
        %3526 = vmatprep.mubr.f32.mxu0 0.0
        %3527 = vmatmul.mubr.f32.gmra.mxu0 %v3460
        %v3528 = vpop.f32.mrf.mxu0
        %v3529 = vadd.f32 0.0, %v3528
        %v3530 = vpop.f32.mrf.mxu0
        %3531 = vdwg.mxu0
        %v3533 = vsel %vm1922, %v3456, 0
        %3535 = vmatprep.subr.mxu0 0.0
        %3536 = vmatpush1.msra.mxu0 0.0
        %3537 = vmatprep.subr.mxu0 0.0
        %3538 = vmatpush1.msra.mxu0 0.0
        %3539 = vmatprep.subr.mxu0 0.0
        %3540 = vmatpush1.msra.mxu0 0.0
        %3541 = vmatprep.subr.mxu0 0.0
        %3542 = vmatpush1.msra.mxu0 0.0
        %3543 = vmatprep.subr.mxu0 0.0
        %3544 = vmatpush1.msra.mxu0 0.0
        %3545 = vmatprep.subr.mxu0 0.0
        %3546 = vmatpush1.msra.mxu0 0.0
        %3547 = vmatprep.subr.mxu0 0.0
        %3548 = vmatpush1.msra.mxu0 0.0
        %3549 = vmatprep.subr.mxu0 0.0
        %3550 = vmatpush1.msra.mxu0 0.0
        %3551 = vmatprep.subr.mxu0 0.0
        %3552 = vmatpush1.msra.mxu0 0.0
        %3553 = vmatprep.subr.mxu0 0.0
        %3554 = vmatpush1.msra.mxu0 0.0
        %3555 = vmatprep.subr.mxu0 0.0
        %3556 = vmatpush1.msra.mxu0 0.0
        %3557 = vmatprep.subr.mxu0 0.0
        %3558 = vmatpush1.msra.mxu0 0.0
        %3559 = vmatprep.subr.mxu0 0.0
        %3560 = vmatpush1.msra.mxu0 0.0
        %3561 = vmatprep.subr.mxu0 0.0
        %3562 = vmatpush1.msra.mxu0 0.0
        %3563 = vmatprep.subr.mxu0 0.0
        %3564 = vmatpush1.msra.mxu0 %v2672
        %3565 = vmatprep.subr.mxu0 0.0
        %3566 = vmatpush1.msra.mxu0 %v2671
        %3567 = vmatprep.subr.mxu0 0.0
        %3568 = vmatpush2.msra.mxu0 0.0
        %3569 = vmatprep.subr.mxu0 0.0
        %3570 = vmatpush2.msra.mxu0 0.0
        %3571 = vmatprep.subr.mxu0 0.0
        %3572 = vmatpush2.msra.mxu0 0.0
        %3573 = vmatprep.subr.mxu0 0.0
        %3574 = vmatpush2.msra.mxu0 0.0
        %3575 = vmatprep.subr.mxu0 0.0
        %3576 = vmatpush2.msra.mxu0 0.0
        %3577 = vmatprep.subr.mxu0 0.0
        %3578 = vmatpush2.msra.mxu0 0.0
        %3579 = vmatprep.subr.mxu0 0.0
        %3580 = vmatpush2.msra.mxu0 0.0
        %3581 = vmatprep.subr.mxu0 0.0
        %3582 = vmatpush2.msra.mxu0 0.0
        %3583 = vmatprep.subr.mxu0 0.0
        %3584 = vmatpush2.msra.mxu0 0.0
        %3585 = vmatprep.subr.mxu0 0.0
        %3586 = vmatpush2.msra.mxu0 0.0
        %3587 = vmatprep.subr.mxu0 0.0
        %3588 = vmatpush2.msra.mxu0 0.0
        %3589 = vmatprep.subr.mxu0 0.0
        %3590 = vmatpush2.msra.mxu0 0.0
        %3591 = vmatprep.subr.mxu0 0.0
        %3592 = vmatpush2.msra.mxu0 0.0
        %3593 = vmatprep.subr.mxu0 0.0
        %3594 = vmatpush2.msra.mxu0 0.0
        %3595 = vmatprep.subr.mxu0 0.0
        %3596 = vmatpush2.msra.mxu0 0.0
        %3597 = vmatprep.subr.mxu0 0.0
        %3598 = vmatpush2.msra.mxu0 0.0
        %3599 = vmatprep.mubr.f32.mxu0 0.0
        %3600 = vmatmul.mubr.f32.gmra.mxu0 %v3533
        %v3601 = vpop.f32.mrf.mxu0
        %v3602 = vadd.f32 0.0, %v3601
        %v3603 = vpop.f32.mrf.mxu0
        %3604 = vdwg.mxu0
        %v3605 = vsel %vm1474, %v3529, 0.0
        %v3606 = vsel %vm1474, %v3602, 0.0
        %v3607 = vadd.f32 %v3605, %v3606
        %v3609 = vlaneseq
        %v3610 = vshrl.u32 %v3609, 7
        %v3611 = vsub.s32 0, %v3610
        %v3612 = vrot.slane %v2673, %v3611
        %v3614 = vadd.f32 %v3607, %v3612
        %v3615 = vadd.f32 %v2638, %v3614
        %v3616 = vld [vmem:[%s55] sm:$0x1]
        %v3617 = vld [vmem:[%s57] sm:$0x1]
        %v3618 = vsel %vm1474, %v3615, 0.0
        %3619 = vadd.xlane.f32.xlu0 %v3618
        %v3620 = vpop.xlane.xlu0 %3619
        %v3621 = vmul.f32 %v3620, %v2408
        %v3622 = vsub.f32 %v3615, %v3621
        %v3623 = vmul.f32 %v3622, %v3622
        %v3624 = vsel %vm1474, %v3623, 0.0
        %3625 = vadd.xlane.f32.xlu0 %v3624
        %v3626 = vpop.xlane.xlu0 %3625
        %v3627 = vmul.f32 %v3626, %v2408
        %v3628 = vadd.f32 %v3627, 1e-05
        %v3629 = vrsqrt.pop %v3628
        %v3630 = vmul.f32 %v3622, %v3629
        %v3632 = vlaneseq
        %v3633 = vshrl.u32 %v3632, 7
        %v3634 = vsub.s32 0, %v3633
        %v3635 = vrot.slane %v3616, %v3634
        %v3637 = vmul.f32 %v3630, %v3635
        %v3639 = vlaneseq
        %v3640 = vshrl.u32 %v3639, 7
        %v3641 = vsub.s32 0, %v3640
        %v3642 = vrot.slane %v3617, %v3641
        %v3644 = vadd.f32 %v3637, %v3642
        %v3645 = vld [vmem:[%s59] sm:$0xff]
        %v3646 = vld [vmem:[%s59 + $0x8] sm:$0xff]
        %v3647 = vld [vmem:[%s59 + $0x10] sm:$0xff]
        %v3648 = vld [vmem:[%s59 + $0x18] sm:$0xff]
        %v3649 = vld [vmem:[%s59 + $0x20] sm:$0xff]
        %v3650 = vld [vmem:[%s59 + $0x28] sm:$0xff]
        %v3651 = vld [vmem:[%s59 + $0x30] sm:$0xff]
        %v3652 = vld [vmem:[%s59 + $0x38] sm:$0xff]
        %v3653 = vld [vmem:[%s61] sm:$0x1]
        %v3654 = vld [vmem:[%s61 + $0x1] sm:$0x1]
        %v3655 = vld [vmem:[%s63] sm:$0xff]
        %v3656 = vld [vmem:[%s63 + $0x8] sm:$0xff]
        %v3657 = vld [vmem:[%s63 + $0x10] sm:$0xff]
        %v3658 = vld [vmem:[%s63 + $0x18] sm:$0xff]
        %v3659 = vld [vmem:[%s63 + $0x20] sm:$0xff]
        %v3660 = vld [vmem:[%s63 + $0x28] sm:$0xff]
        %v3661 = vld [vmem:[%s63 + $0x30] sm:$0xff]
        %v3662 = vld [vmem:[%s63 + $0x38] sm:$0xff]
        %v3663 = vld [vmem:[%s65] sm:$0x1]
        %v3664 = vld [vmem:[%s65 + $0x1] sm:$0x1]
        %v3665 = vld [vmem:[%s67] sm:$0xff]
        %v3666 = vld [vmem:[%s67 + $0x8] sm:$0xff]
        %v3667 = vld [vmem:[%s67 + $0x10] sm:$0xff]
        %v3668 = vld [vmem:[%s67 + $0x18] sm:$0xff]
        %v3669 = vld [vmem:[%s67 + $0x20] sm:$0xff]
        %v3670 = vld [vmem:[%s67 + $0x28] sm:$0xff]
        %v3671 = vld [vmem:[%s67 + $0x30] sm:$0xff]
        %v3672 = vld [vmem:[%s67 + $0x38] sm:$0xff]
        %v3673 = vld [vmem:[%s69] sm:$0x1]
        %v3674 = vld [vmem:[%s69 + $0x1] sm:$0x1]
        %v3675 = vld [vmem:[%s71] sm:$0xff]
        %v3676 = vld [vmem:[%s71 + $0x8] sm:$0xff]
        %v3677 = vld [vmem:[%s71 + $0x10] sm:$0xff]
        %v3678 = vld [vmem:[%s71 + $0x18] sm:$0xff]
        %v3679 = vld [vmem:[%s73] sm:$0x1]
        %v3682 = vlaneseq
        %v3683 = vshrl.u32 %v3682, 7
        %v3684 = vsub.s32 0, %v3683
        %v3685 = vrot.slane %v3653, %v3684
        %v3686 = vlaneseq
        %v3687 = vshrl.u32 %v3686, 7
        %v3688 = vsub.s32 0, %v3687
        %v3689 = vrot.slane %v3654, %v3688
        %v3693 = vsel %vm1474, %v3644, 0
        %3695 = vmatprep.subr.mxu0 0.0
        %3696 = vmatpush1.msra.mxu0 0.0
        %3697 = vmatprep.subr.mxu0 0.0
        %3698 = vmatpush1.msra.mxu0 0.0
        %3699 = vmatprep.subr.mxu0 0.0
        %3700 = vmatpush1.msra.mxu0 0.0
        %3701 = vmatprep.subr.mxu0 0.0
        %3702 = vmatpush1.msra.mxu0 0.0
        %3703 = vmatprep.subr.mxu0 0.0
        %3704 = vmatpush1.msra.mxu0 0.0
        %3705 = vmatprep.subr.mxu0 0.0
        %3706 = vmatpush1.msra.mxu0 0.0
        %3707 = vmatprep.subr.mxu0 0.0
        %3708 = vmatpush1.msra.mxu0 0.0
        %3709 = vmatprep.subr.mxu0 0.0
        %3710 = vmatpush1.msra.mxu0 0.0
        %3711 = vmatprep.subr.mxu0 0.0
        %3712 = vmatpush1.msra.mxu0 0.0
        %3713 = vmatprep.subr.mxu0 0.0
        %3714 = vmatpush1.msra.mxu0 0.0
        %3715 = vmatprep.subr.mxu0 0.0
        %3716 = vmatpush1.msra.mxu0 0.0
        %3717 = vmatprep.subr.mxu0 0.0
        %3718 = vmatpush1.msra.mxu0 0.0
        %3719 = vmatprep.subr.mxu0 0.0
        %3720 = vmatpush1.msra.mxu0 %v3648
        %3721 = vmatprep.subr.mxu0 0.0
        %3722 = vmatpush1.msra.mxu0 %v3647
        %3723 = vmatprep.subr.mxu0 0.0
        %3724 = vmatpush1.msra.mxu0 %v3646
        %3725 = vmatprep.subr.mxu0 0.0
        %3726 = vmatpush1.msra.mxu0 %v3645
        %3727 = vmatprep.subr.mxu0 0.0
        %3728 = vmatpush2.msra.mxu0 0.0
        %3729 = vmatprep.subr.mxu0 0.0
        %3730 = vmatpush2.msra.mxu0 0.0
        %3731 = vmatprep.subr.mxu0 0.0
        %3732 = vmatpush2.msra.mxu0 0.0
        %3733 = vmatprep.subr.mxu0 0.0
        %3734 = vmatpush2.msra.mxu0 0.0
        %3735 = vmatprep.subr.mxu0 0.0
        %3736 = vmatpush2.msra.mxu0 0.0
        %3737 = vmatprep.subr.mxu0 0.0
        %3738 = vmatpush2.msra.mxu0 0.0
        %3739 = vmatprep.subr.mxu0 0.0
        %3740 = vmatpush2.msra.mxu0 0.0
        %3741 = vmatprep.subr.mxu0 0.0
        %3742 = vmatpush2.msra.mxu0 0.0
        %3743 = vmatprep.subr.mxu0 0.0
        %3744 = vmatpush2.msra.mxu0 0.0
        %3745 = vmatprep.subr.mxu0 0.0
        %3746 = vmatpush2.msra.mxu0 0.0
        %3747 = vmatprep.subr.mxu0 0.0
        %3748 = vmatpush2.msra.mxu0 0.0
        %3749 = vmatprep.subr.mxu0 0.0
        %3750 = vmatpush2.msra.mxu0 0.0
        %3751 = vmatprep.subr.mxu0 0.0
        %3752 = vmatpush2.msra.mxu0 0.0
        %3753 = vmatprep.subr.mxu0 0.0
        %3754 = vmatpush2.msra.mxu0 0.0
        %3755 = vmatprep.subr.mxu0 0.0
        %3756 = vmatpush2.msra.mxu0 0.0
        %3757 = vmatprep.subr.mxu0 0.0
        %3758 = vmatpush2.msra.mxu0 0.0
        %3759 = vmatprep.mubr.f32.mxu0 0.0
        %3760 = vmatmul.mubr.f32.gmra.mxu0 %v3693
        %v3761 = vpop.f32.mrf.mxu0
        %v3762 = vadd.f32 %v3685, %v3761
        %v3763 = vpop.f32.mrf.mxu0
        %3764 = vdwg.mxu0
        %3765 = vmatprep.subr.mxu0 0.0
        %3766 = vmatpush1.msra.mxu0 0.0
        %3767 = vmatprep.subr.mxu0 0.0
        %3768 = vmatpush1.msra.mxu0 0.0
        %3769 = vmatprep.subr.mxu0 0.0
        %3770 = vmatpush1.msra.mxu0 0.0
        %3771 = vmatprep.subr.mxu0 0.0
        %3772 = vmatpush1.msra.mxu0 0.0
        %3773 = vmatprep.subr.mxu0 0.0
        %3774 = vmatpush1.msra.mxu0 0.0
        %3775 = vmatprep.subr.mxu0 0.0
        %3776 = vmatpush1.msra.mxu0 0.0
        %3777 = vmatprep.subr.mxu0 0.0
        %3778 = vmatpush1.msra.mxu0 0.0
        %3779 = vmatprep.subr.mxu0 0.0
        %3780 = vmatpush1.msra.mxu0 0.0
        %3781 = vmatprep.subr.mxu0 0.0
        %3782 = vmatpush1.msra.mxu0 0.0
        %3783 = vmatprep.subr.mxu0 0.0
        %3784 = vmatpush1.msra.mxu0 0.0
        %3785 = vmatprep.subr.mxu0 0.0
        %3786 = vmatpush1.msra.mxu0 0.0
        %3787 = vmatprep.subr.mxu0 0.0
        %3788 = vmatpush1.msra.mxu0 0.0
        %3789 = vmatprep.subr.mxu0 0.0
        %3790 = vmatpush1.msra.mxu0 %v3652
        %3791 = vmatprep.subr.mxu0 0.0
        %3792 = vmatpush1.msra.mxu0 %v3651
        %3793 = vmatprep.subr.mxu0 0.0
        %3794 = vmatpush1.msra.mxu0 %v3650
        %3795 = vmatprep.subr.mxu0 0.0
        %3796 = vmatpush1.msra.mxu0 %v3649
        %3797 = vmatprep.subr.mxu0 0.0
        %3798 = vmatpush2.msra.mxu0 0.0
        %3799 = vmatprep.subr.mxu0 0.0
        %3800 = vmatpush2.msra.mxu0 0.0
        %3801 = vmatprep.subr.mxu0 0.0
        %3802 = vmatpush2.msra.mxu0 0.0
        %3803 = vmatprep.subr.mxu0 0.0
        %3804 = vmatpush2.msra.mxu0 0.0
        %3805 = vmatprep.subr.mxu0 0.0
        %3806 = vmatpush2.msra.mxu0 0.0
        %3807 = vmatprep.subr.mxu0 0.0
        %3808 = vmatpush2.msra.mxu0 0.0
        %3809 = vmatprep.subr.mxu0 0.0
        %3810 = vmatpush2.msra.mxu0 0.0
        %3811 = vmatprep.subr.mxu0 0.0
        %3812 = vmatpush2.msra.mxu0 0.0
        %3813 = vmatprep.subr.mxu0 0.0
        %3814 = vmatpush2.msra.mxu0 0.0
        %3815 = vmatprep.subr.mxu0 0.0
        %3816 = vmatpush2.msra.mxu0 0.0
        %3817 = vmatprep.subr.mxu0 0.0
        %3818 = vmatpush2.msra.mxu0 0.0
        %3819 = vmatprep.subr.mxu0 0.0
        %3820 = vmatpush2.msra.mxu0 0.0
        %3821 = vmatprep.subr.mxu0 0.0
        %3822 = vmatpush2.msra.mxu0 0.0
        %3823 = vmatprep.subr.mxu0 0.0
        %3824 = vmatpush2.msra.mxu0 0.0
        %3825 = vmatprep.subr.mxu0 0.0
        %3826 = vmatpush2.msra.mxu0 0.0
        %3827 = vmatprep.subr.mxu0 0.0
        %3828 = vmatpush2.msra.mxu0 0.0
        %3829 = vmatprep.mubr.f32.mxu0 0.0
        %3830 = vmatmul.mubr.f32.gmra.mxu0 %v3693
        %v3831 = vpop.f32.mrf.mxu0
        %v3832 = vadd.f32 %v3689, %v3831
        %v3833 = vpop.f32.mrf.mxu0
        %3834 = vdwg.mxu0
        %v3837 = vlaneseq
        %v3838 = vshrl.u32 %v3837, 7
        %v3839 = vsub.s32 0, %v3838
        %v3840 = vrot.slane %v3663, %v3839
        %v3841 = vlaneseq
        %v3842 = vshrl.u32 %v3841, 7
        %v3843 = vsub.s32 0, %v3842
        %v3844 = vrot.slane %v3664, %v3843
        %v3848 = vsel %vm1474, %v2636, 0
        %3850 = vmatprep.subr.mxu0 0.0
        %3851 = vmatpush1.msra.mxu0 0.0
        %3852 = vmatprep.subr.mxu0 0.0
        %3853 = vmatpush1.msra.mxu0 0.0
        %3854 = vmatprep.subr.mxu0 0.0
        %3855 = vmatpush1.msra.mxu0 0.0
        %3856 = vmatprep.subr.mxu0 0.0
        %3857 = vmatpush1.msra.mxu0 0.0
        %3858 = vmatprep.subr.mxu0 0.0
        %3859 = vmatpush1.msra.mxu0 0.0
        %3860 = vmatprep.subr.mxu0 0.0
        %3861 = vmatpush1.msra.mxu0 0.0
        %3862 = vmatprep.subr.mxu0 0.0
        %3863 = vmatpush1.msra.mxu0 0.0
        %3864 = vmatprep.subr.mxu0 0.0
        %3865 = vmatpush1.msra.mxu0 0.0
        %3866 = vmatprep.subr.mxu0 0.0
        %3867 = vmatpush1.msra.mxu0 0.0
        %3868 = vmatprep.subr.mxu0 0.0
        %3869 = vmatpush1.msra.mxu0 0.0
        %3870 = vmatprep.subr.mxu0 0.0
        %3871 = vmatpush1.msra.mxu0 0.0
        %3872 = vmatprep.subr.mxu0 0.0
        %3873 = vmatpush1.msra.mxu0 0.0
        %3874 = vmatprep.subr.mxu0 0.0
        %3875 = vmatpush1.msra.mxu0 %v3658
        %3876 = vmatprep.subr.mxu0 0.0
        %3877 = vmatpush1.msra.mxu0 %v3657
        %3878 = vmatprep.subr.mxu0 0.0
        %3879 = vmatpush1.msra.mxu0 %v3656
        %3880 = vmatprep.subr.mxu0 0.0
        %3881 = vmatpush1.msra.mxu0 %v3655
        %3882 = vmatprep.subr.mxu0 0.0
        %3883 = vmatpush2.msra.mxu0 0.0
        %3884 = vmatprep.subr.mxu0 0.0
        %3885 = vmatpush2.msra.mxu0 0.0
        %3886 = vmatprep.subr.mxu0 0.0
        %3887 = vmatpush2.msra.mxu0 0.0
        %3888 = vmatprep.subr.mxu0 0.0
        %3889 = vmatpush2.msra.mxu0 0.0
        %3890 = vmatprep.subr.mxu0 0.0
        %3891 = vmatpush2.msra.mxu0 0.0
        %3892 = vmatprep.subr.mxu0 0.0
        %3893 = vmatpush2.msra.mxu0 0.0
        %3894 = vmatprep.subr.mxu0 0.0
        %3895 = vmatpush2.msra.mxu0 0.0
        %3896 = vmatprep.subr.mxu0 0.0
        %3897 = vmatpush2.msra.mxu0 0.0
        %3898 = vmatprep.subr.mxu0 0.0
        %3899 = vmatpush2.msra.mxu0 0.0
        %3900 = vmatprep.subr.mxu0 0.0
        %3901 = vmatpush2.msra.mxu0 0.0
        %3902 = vmatprep.subr.mxu0 0.0
        %3903 = vmatpush2.msra.mxu0 0.0
        %3904 = vmatprep.subr.mxu0 0.0
        %3905 = vmatpush2.msra.mxu0 0.0
        %3906 = vmatprep.subr.mxu0 0.0
        %3907 = vmatpush2.msra.mxu0 0.0
        %3908 = vmatprep.subr.mxu0 0.0
        %3909 = vmatpush2.msra.mxu0 0.0
        %3910 = vmatprep.subr.mxu0 0.0
        %3911 = vmatpush2.msra.mxu0 0.0
        %3912 = vmatprep.subr.mxu0 0.0
        %3913 = vmatpush2.msra.mxu0 0.0
        %3914 = vmatprep.mubr.f32.mxu0 0.0
        %3915 = vmatmul.mubr.f32.gmra.mxu0 %v3848
        %v3916 = vpop.f32.mrf.mxu0
        %v3917 = vadd.f32 %v3840, %v3916
        %v3918 = vpop.f32.mrf.mxu0
        %3919 = vdwg.mxu0
        %3920 = vmatprep.subr.mxu0 0.0
        %3921 = vmatpush1.msra.mxu0 0.0
        %3922 = vmatprep.subr.mxu0 0.0
        %3923 = vmatpush1.msra.mxu0 0.0
        %3924 = vmatprep.subr.mxu0 0.0
        %3925 = vmatpush1.msra.mxu0 0.0
        %3926 = vmatprep.subr.mxu0 0.0
        %3927 = vmatpush1.msra.mxu0 0.0
        %3928 = vmatprep.subr.mxu0 0.0
        %3929 = vmatpush1.msra.mxu0 0.0
        %3930 = vmatprep.subr.mxu0 0.0
        %3931 = vmatpush1.msra.mxu0 0.0
        %3932 = vmatprep.subr.mxu0 0.0
        %3933 = vmatpush1.msra.mxu0 0.0
        %3934 = vmatprep.subr.mxu0 0.0
        %3935 = vmatpush1.msra.mxu0 0.0
        %3936 = vmatprep.subr.mxu0 0.0
        %3937 = vmatpush1.msra.mxu0 0.0
        %3938 = vmatprep.subr.mxu0 0.0
        %3939 = vmatpush1.msra.mxu0 0.0
        %3940 = vmatprep.subr.mxu0 0.0
        %3941 = vmatpush1.msra.mxu0 0.0
        %3942 = vmatprep.subr.mxu0 0.0
        %3943 = vmatpush1.msra.mxu0 0.0
        %3944 = vmatprep.subr.mxu0 0.0
        %3945 = vmatpush1.msra.mxu0 %v3662
        %3946 = vmatprep.subr.mxu0 0.0
        %3947 = vmatpush1.msra.mxu0 %v3661
        %3948 = vmatprep.subr.mxu0 0.0
        %3949 = vmatpush1.msra.mxu0 %v3660
        %3950 = vmatprep.subr.mxu0 0.0
        %3951 = vmatpush1.msra.mxu0 %v3659
        %3952 = vmatprep.subr.mxu0 0.0
        %3953 = vmatpush2.msra.mxu0 0.0
        %3954 = vmatprep.subr.mxu0 0.0
        %3955 = vmatpush2.msra.mxu0 0.0
        %3956 = vmatprep.subr.mxu0 0.0
        %3957 = vmatpush2.msra.mxu0 0.0
        %3958 = vmatprep.subr.mxu0 0.0
        %3959 = vmatpush2.msra.mxu0 0.0
        %3960 = vmatprep.subr.mxu0 0.0
        %3961 = vmatpush2.msra.mxu0 0.0
        %3962 = vmatprep.subr.mxu0 0.0
        %3963 = vmatpush2.msra.mxu0 0.0
        %3964 = vmatprep.subr.mxu0 0.0
        %3965 = vmatpush2.msra.mxu0 0.0
        %3966 = vmatprep.subr.mxu0 0.0
        %3967 = vmatpush2.msra.mxu0 0.0
        %3968 = vmatprep.subr.mxu0 0.0
        %3969 = vmatpush2.msra.mxu0 0.0
        %3970 = vmatprep.subr.mxu0 0.0
        %3971 = vmatpush2.msra.mxu0 0.0
        %3972 = vmatprep.subr.mxu0 0.0
        %3973 = vmatpush2.msra.mxu0 0.0
        %3974 = vmatprep.subr.mxu0 0.0
        %3975 = vmatpush2.msra.mxu0 0.0
        %3976 = vmatprep.subr.mxu0 0.0
        %3977 = vmatpush2.msra.mxu0 0.0
        %3978 = vmatprep.subr.mxu0 0.0
        %3979 = vmatpush2.msra.mxu0 0.0
        %3980 = vmatprep.subr.mxu0 0.0
        %3981 = vmatpush2.msra.mxu0 0.0
        %3982 = vmatprep.subr.mxu0 0.0
        %3983 = vmatpush2.msra.mxu0 0.0
        %3984 = vmatprep.mubr.f32.mxu0 0.0
        %3985 = vmatmul.mubr.f32.gmra.mxu0 %v3848
        %v3986 = vpop.f32.mrf.mxu0
        %v3987 = vadd.f32 %v3844, %v3986
        %v3988 = vpop.f32.mrf.mxu0
        %3989 = vdwg.mxu0
        %v3992 = vlaneseq
        %v3993 = vshrl.u32 %v3992, 7
        %v3994 = vsub.s32 0, %v3993
        %v3995 = vrot.slane %v3673, %v3994
        %v3996 = vlaneseq
        %v3997 = vshrl.u32 %v3996, 7
        %v3998 = vsub.s32 0, %v3997
        %v3999 = vrot.slane %v3674, %v3998
        %4002 = vmatprep.subr.mxu0 0.0
        %4003 = vmatpush1.msra.mxu0 0.0
        %4004 = vmatprep.subr.mxu0 0.0
        %4005 = vmatpush1.msra.mxu0 0.0
        %4006 = vmatprep.subr.mxu0 0.0
        %4007 = vmatpush1.msra.mxu0 0.0
        %4008 = vmatprep.subr.mxu0 0.0
        %4009 = vmatpush1.msra.mxu0 0.0
        %4010 = vmatprep.subr.mxu0 0.0
        %4011 = vmatpush1.msra.mxu0 0.0
        %4012 = vmatprep.subr.mxu0 0.0
        %4013 = vmatpush1.msra.mxu0 0.0
        %4014 = vmatprep.subr.mxu0 0.0
        %4015 = vmatpush1.msra.mxu0 0.0
        %4016 = vmatprep.subr.mxu0 0.0
        %4017 = vmatpush1.msra.mxu0 0.0
        %4018 = vmatprep.subr.mxu0 0.0
        %4019 = vmatpush1.msra.mxu0 0.0
        %4020 = vmatprep.subr.mxu0 0.0
        %4021 = vmatpush1.msra.mxu0 0.0
        %4022 = vmatprep.subr.mxu0 0.0
        %4023 = vmatpush1.msra.mxu0 0.0
        %4024 = vmatprep.subr.mxu0 0.0
        %4025 = vmatpush1.msra.mxu0 0.0
        %4026 = vmatprep.subr.mxu0 0.0
        %4027 = vmatpush1.msra.mxu0 %v3668
        %4028 = vmatprep.subr.mxu0 0.0
        %4029 = vmatpush1.msra.mxu0 %v3667
        %4030 = vmatprep.subr.mxu0 0.0
        %4031 = vmatpush1.msra.mxu0 %v3666
        %4032 = vmatprep.subr.mxu0 0.0
        %4033 = vmatpush1.msra.mxu0 %v3665
        %4034 = vmatprep.subr.mxu0 0.0
        %4035 = vmatpush2.msra.mxu0 0.0
        %4036 = vmatprep.subr.mxu0 0.0
        %4037 = vmatpush2.msra.mxu0 0.0
        %4038 = vmatprep.subr.mxu0 0.0
        %4039 = vmatpush2.msra.mxu0 0.0
        %4040 = vmatprep.subr.mxu0 0.0
        %4041 = vmatpush2.msra.mxu0 0.0
        %4042 = vmatprep.subr.mxu0 0.0
        %4043 = vmatpush2.msra.mxu0 0.0
        %4044 = vmatprep.subr.mxu0 0.0
        %4045 = vmatpush2.msra.mxu0 0.0
        %4046 = vmatprep.subr.mxu0 0.0
        %4047 = vmatpush2.msra.mxu0 0.0
        %4048 = vmatprep.subr.mxu0 0.0
        %4049 = vmatpush2.msra.mxu0 0.0
        %4050 = vmatprep.subr.mxu0 0.0
        %4051 = vmatpush2.msra.mxu0 0.0
        %4052 = vmatprep.subr.mxu0 0.0
        %4053 = vmatpush2.msra.mxu0 0.0
        %4054 = vmatprep.subr.mxu0 0.0
        %4055 = vmatpush2.msra.mxu0 0.0
        %4056 = vmatprep.subr.mxu0 0.0
        %4057 = vmatpush2.msra.mxu0 0.0
        %4058 = vmatprep.subr.mxu0 0.0
        %4059 = vmatpush2.msra.mxu0 0.0
        %4060 = vmatprep.subr.mxu0 0.0
        %4061 = vmatpush2.msra.mxu0 0.0
        %4062 = vmatprep.subr.mxu0 0.0
        %4063 = vmatpush2.msra.mxu0 0.0
        %4064 = vmatprep.subr.mxu0 0.0
        %4065 = vmatpush2.msra.mxu0 0.0
        %4066 = vmatprep.mubr.f32.mxu0 0.0
        %4067 = vmatmul.mubr.f32.gmra.mxu0 %v3848
        %v4068 = vpop.f32.mrf.mxu0
        %v4069 = vadd.f32 %v3995, %v4068
        %v4070 = vpop.f32.mrf.mxu0
        %4071 = vdwg.mxu0
        %4072 = vmatprep.subr.mxu0 0.0
        %4073 = vmatpush1.msra.mxu0 0.0
        %4074 = vmatprep.subr.mxu0 0.0
        %4075 = vmatpush1.msra.mxu0 0.0
        %4076 = vmatprep.subr.mxu0 0.0
        %4077 = vmatpush1.msra.mxu0 0.0
        %4078 = vmatprep.subr.mxu0 0.0
        %4079 = vmatpush1.msra.mxu0 0.0
        %4080 = vmatprep.subr.mxu0 0.0
        %4081 = vmatpush1.msra.mxu0 0.0
        %4082 = vmatprep.subr.mxu0 0.0
        %4083 = vmatpush1.msra.mxu0 0.0
        %4084 = vmatprep.subr.mxu0 0.0
        %4085 = vmatpush1.msra.mxu0 0.0
        %4086 = vmatprep.subr.mxu0 0.0
        %4087 = vmatpush1.msra.mxu0 0.0
        %4088 = vmatprep.subr.mxu0 0.0
        %4089 = vmatpush1.msra.mxu0 0.0
        %4090 = vmatprep.subr.mxu0 0.0
        %4091 = vmatpush1.msra.mxu0 0.0
        %4092 = vmatprep.subr.mxu0 0.0
        %4093 = vmatpush1.msra.mxu0 0.0
        %4094 = vmatprep.subr.mxu0 0.0
        %4095 = vmatpush1.msra.mxu0 0.0
        %4096 = vmatprep.subr.mxu0 0.0
        %4097 = vmatpush1.msra.mxu0 %v3672
        %4098 = vmatprep.subr.mxu0 0.0
        %4099 = vmatpush1.msra.mxu0 %v3671
        %4100 = vmatprep.subr.mxu0 0.0
        %4101 = vmatpush1.msra.mxu0 %v3670
        %4102 = vmatprep.subr.mxu0 0.0
        %4103 = vmatpush1.msra.mxu0 %v3669
        %4104 = vmatprep.subr.mxu0 0.0
        %4105 = vmatpush2.msra.mxu0 0.0
        %4106 = vmatprep.subr.mxu0 0.0
        %4107 = vmatpush2.msra.mxu0 0.0
        %4108 = vmatprep.subr.mxu0 0.0
        %4109 = vmatpush2.msra.mxu0 0.0
        %4110 = vmatprep.subr.mxu0 0.0
        %4111 = vmatpush2.msra.mxu0 0.0
        %4112 = vmatprep.subr.mxu0 0.0
        %4113 = vmatpush2.msra.mxu0 0.0
        %4114 = vmatprep.subr.mxu0 0.0
        %4115 = vmatpush2.msra.mxu0 0.0
        %4116 = vmatprep.subr.mxu0 0.0
        %4117 = vmatpush2.msra.mxu0 0.0
        %4118 = vmatprep.subr.mxu0 0.0
        %4119 = vmatpush2.msra.mxu0 0.0
        %4120 = vmatprep.subr.mxu0 0.0
        %4121 = vmatpush2.msra.mxu0 0.0
        %4122 = vmatprep.subr.mxu0 0.0
        %4123 = vmatpush2.msra.mxu0 0.0
        %4124 = vmatprep.subr.mxu0 0.0
        %4125 = vmatpush2.msra.mxu0 0.0
        %4126 = vmatprep.subr.mxu0 0.0
        %4127 = vmatpush2.msra.mxu0 0.0
        %4128 = vmatprep.subr.mxu0 0.0
        %4129 = vmatpush2.msra.mxu0 0.0
        %4130 = vmatprep.subr.mxu0 0.0
        %4131 = vmatpush2.msra.mxu0 0.0
        %4132 = vmatprep.subr.mxu0 0.0
        %4133 = vmatpush2.msra.mxu0 0.0
        %4134 = vmatprep.subr.mxu0 0.0
        %4135 = vmatpush2.msra.mxu0 0.0
        %4136 = vmatprep.mubr.f32.mxu0 0.0
        %4137 = vmatmul.mubr.f32.gmra.mxu0 %v3848
        %v4138 = vpop.f32.mrf.mxu0
        %v4139 = vadd.f32 %v3999, %v4138
        %v4140 = vpop.f32.mrf.mxu0
        %4141 = vdwg.mxu0
        %v4143 = vsel %vm1922, %v3762, 0
        %v4146 = vsel %vm1922, %v3917, 0
        %4148 = vmatprep.subr.mxu0 0.0
        %4149 = vmatpush1.xpose.msra.mxu0 0.0
        %4150 = vmatprep.subr.mxu0 0.0
        %4151 = vmatpush1.xpose.msra.mxu0 0.0
        %4152 = vmatprep.subr.mxu0 0.0
        %4153 = vmatpush1.xpose.msra.mxu0 0.0
        %4154 = vmatprep.subr.mxu0 0.0
        %4155 = vmatpush1.xpose.msra.mxu0 0.0
        %4156 = vmatprep.subr.mxu0 0.0
        %4157 = vmatpush1.xpose.msra.mxu0 0.0
        %4158 = vmatprep.subr.mxu0 0.0
        %4159 = vmatpush1.xpose.msra.mxu0 0.0
        %4160 = vmatprep.subr.mxu0 0.0
        %4161 = vmatpush1.xpose.msra.mxu0 0.0
        %4162 = vmatprep.subr.mxu0 0.0
        %4163 = vmatpush1.xpose.msra.mxu0 0.0
        %4164 = vmatprep.subr.mxu0 0.0
        %4165 = vmatpush1.xpose.msra.mxu0 0.0
        %4166 = vmatprep.subr.mxu0 0.0
        %4167 = vmatpush1.xpose.msra.mxu0 0.0
        %4168 = vmatprep.subr.mxu0 0.0
        %4169 = vmatpush1.xpose.msra.mxu0 0.0
        %4170 = vmatprep.subr.mxu0 0.0
        %4171 = vmatpush1.xpose.msra.mxu0 0.0
        %4172 = vmatprep.subr.mxu0 0.0
        %4173 = vmatpush1.xpose.msra.mxu0 0.0
        %4174 = vmatprep.subr.mxu0 0.0
        %4175 = vmatpush1.xpose.msra.mxu0 0.0
        %4176 = vmatprep.subr.mxu0 0.0
        %4177 = vmatpush1.xpose.msra.mxu0 0.0
        %4178 = vmatprep.subr.mxu0 0.0
        %4179 = vmatpush1.xpose.msra.mxu0 %v4146
        %4180 = vmatprep.subr.mxu0 0.0
        %4181 = vmatpush2.xpose.msra.mxu0 0.0
        %4182 = vmatprep.subr.mxu0 0.0
        %4183 = vmatpush2.xpose.msra.mxu0 0.0
        %4184 = vmatprep.subr.mxu0 0.0
        %4185 = vmatpush2.xpose.msra.mxu0 0.0
        %4186 = vmatprep.subr.mxu0 0.0
        %4187 = vmatpush2.xpose.msra.mxu0 0.0
        %4188 = vmatprep.subr.mxu0 0.0
        %4189 = vmatpush2.xpose.msra.mxu0 0.0
        %4190 = vmatprep.subr.mxu0 0.0
        %4191 = vmatpush2.xpose.msra.mxu0 0.0
        %4192 = vmatprep.subr.mxu0 0.0
        %4193 = vmatpush2.xpose.msra.mxu0 0.0
        %4194 = vmatprep.subr.mxu0 0.0
        %4195 = vmatpush2.xpose.msra.mxu0 0.0
        %4196 = vmatprep.subr.mxu0 0.0
        %4197 = vmatpush2.xpose.msra.mxu0 0.0
        %4198 = vmatprep.subr.mxu0 0.0
        %4199 = vmatpush2.xpose.msra.mxu0 0.0
        %4200 = vmatprep.subr.mxu0 0.0
        %4201 = vmatpush2.xpose.msra.mxu0 0.0
        %4202 = vmatprep.subr.mxu0 0.0
        %4203 = vmatpush2.xpose.msra.mxu0 0.0
        %4204 = vmatprep.subr.mxu0 0.0
        %4205 = vmatpush2.xpose.msra.mxu0 0.0
        %4206 = vmatprep.subr.mxu0 0.0
        %4207 = vmatpush2.xpose.msra.mxu0 0.0
        %4208 = vmatprep.subr.mxu0 0.0
        %4209 = vmatpush2.xpose.msra.mxu0 0.0
        %4210 = vmatprep.subr.mxu0 0.0
        %4211 = vmatpush2.xpose.msra.mxu0 0.0
        %4212 = vmatprep.mubr.f32.mxu0 0.0
        %4213 = vmatmul.mubr.f32.gmra.mxu0 %v4143
        %v4214 = vpop.f32.mrf.mxu0
        %v4215 = vadd.f32 0.0, %v4214
        %v4216 = vpop.f32.mrf.mxu0
        %4217 = vdwg.mxu0
        %v4219 = vsel %vm1922, %v3832, 0
        %v4222 = vsel %vm1922, %v3987, 0
        %4224 = vmatprep.subr.mxu0 0.0
        %4225 = vmatpush1.xpose.msra.mxu0 0.0
        %4226 = vmatprep.subr.mxu0 0.0
        %4227 = vmatpush1.xpose.msra.mxu0 0.0
        %4228 = vmatprep.subr.mxu0 0.0
        %4229 = vmatpush1.xpose.msra.mxu0 0.0
        %4230 = vmatprep.subr.mxu0 0.0
        %4231 = vmatpush1.xpose.msra.mxu0 0.0
        %4232 = vmatprep.subr.mxu0 0.0
        %4233 = vmatpush1.xpose.msra.mxu0 0.0
        %4234 = vmatprep.subr.mxu0 0.0
        %4235 = vmatpush1.xpose.msra.mxu0 0.0
        %4236 = vmatprep.subr.mxu0 0.0
        %4237 = vmatpush1.xpose.msra.mxu0 0.0
        %4238 = vmatprep.subr.mxu0 0.0
        %4239 = vmatpush1.xpose.msra.mxu0 0.0
        %4240 = vmatprep.subr.mxu0 0.0
        %4241 = vmatpush1.xpose.msra.mxu0 0.0
        %4242 = vmatprep.subr.mxu0 0.0
        %4243 = vmatpush1.xpose.msra.mxu0 0.0
        %4244 = vmatprep.subr.mxu0 0.0
        %4245 = vmatpush1.xpose.msra.mxu0 0.0
        %4246 = vmatprep.subr.mxu0 0.0
        %4247 = vmatpush1.xpose.msra.mxu0 0.0
        %4248 = vmatprep.subr.mxu0 0.0
        %4249 = vmatpush1.xpose.msra.mxu0 0.0
        %4250 = vmatprep.subr.mxu0 0.0
        %4251 = vmatpush1.xpose.msra.mxu0 0.0
        %4252 = vmatprep.subr.mxu0 0.0
        %4253 = vmatpush1.xpose.msra.mxu0 0.0
        %4254 = vmatprep.subr.mxu0 0.0
        %4255 = vmatpush1.xpose.msra.mxu0 %v4222
        %4256 = vmatprep.subr.mxu0 0.0
        %4257 = vmatpush2.xpose.msra.mxu0 0.0
        %4258 = vmatprep.subr.mxu0 0.0
        %4259 = vmatpush2.xpose.msra.mxu0 0.0
        %4260 = vmatprep.subr.mxu0 0.0
        %4261 = vmatpush2.xpose.msra.mxu0 0.0
        %4262 = vmatprep.subr.mxu0 0.0
        %4263 = vmatpush2.xpose.msra.mxu0 0.0
        %4264 = vmatprep.subr.mxu0 0.0
        %4265 = vmatpush2.xpose.msra.mxu0 0.0
        %4266 = vmatprep.subr.mxu0 0.0
        %4267 = vmatpush2.xpose.msra.mxu0 0.0
        %4268 = vmatprep.subr.mxu0 0.0
        %4269 = vmatpush2.xpose.msra.mxu0 0.0
        %4270 = vmatprep.subr.mxu0 0.0
        %4271 = vmatpush2.xpose.msra.mxu0 0.0
        %4272 = vmatprep.subr.mxu0 0.0
        %4273 = vmatpush2.xpose.msra.mxu0 0.0
        %4274 = vmatprep.subr.mxu0 0.0
        %4275 = vmatpush2.xpose.msra.mxu0 0.0
        %4276 = vmatprep.subr.mxu0 0.0
        %4277 = vmatpush2.xpose.msra.mxu0 0.0
        %4278 = vmatprep.subr.mxu0 0.0
        %4279 = vmatpush2.xpose.msra.mxu0 0.0
        %4280 = vmatprep.subr.mxu0 0.0
        %4281 = vmatpush2.xpose.msra.mxu0 0.0
        %4282 = vmatprep.subr.mxu0 0.0
        %4283 = vmatpush2.xpose.msra.mxu0 0.0
        %4284 = vmatprep.subr.mxu0 0.0
        %4285 = vmatpush2.xpose.msra.mxu0 0.0
        %4286 = vmatprep.subr.mxu0 0.0
        %4287 = vmatpush2.xpose.msra.mxu0 0.0
        %4288 = vmatprep.mubr.f32.mxu0 0.0
        %4289 = vmatmul.mubr.f32.gmra.mxu0 %v4219
        %v4290 = vpop.f32.mrf.mxu0
        %v4291 = vadd.f32 0.0, %v4290
        %v4292 = vpop.f32.mrf.mxu0
        %4293 = vdwg.mxu0
        %v4294 = vmul.f32 %v4215, 0.25
        %v4295 = vmul.f32 %v4291, 0.25
        %v4296 = vsel %vm2077, %v4294, -inf
        %4297 = vmax.xlane.f32.xlu0 %v4296
        %v4298 = vpop.xlane.xlu0 %4297
        %v4299 = vsel %vm2077, %v4295, -inf
        %4300 = vmax.xlane.f32.xlu0 %v4299
        %v4301 = vpop.xlane.xlu0 %4300
        %v4302 = vsub.f32 %v4294, %v4298
        %v4303 = vsub.f32 %v4295, %v4301
        %v4304 = vmul.f32 %v4302, 1.442695
        %v4305 = vpow.pop %v4304
        %v4306 = vmul.f32 %v4303, 1.442695
        %v4307 = vpow.pop %v4306
        %v4308 = vsel %vm2077, %v4305, 0.0
        %4309 = vadd.xlane.f32.xlu0 %v4308
        %v4310 = vpop.xlane.xlu0 %4309
        %v4311 = vsel %vm2077, %v4307, 0.0
        %4312 = vadd.xlane.f32.xlu0 %v4311
        %v4313 = vpop.xlane.xlu0 %4312
        %v4314 = vrcp.pop %v4310
        %v4315 = vrcp.pop %v4313
        %v4316 = vmul.f32 %v4305, %v4314
        %v4317 = vmul.f32 %v4307, %v4315
        %v4319 = vsel %vm2077, %v4316, 0
        %4321 = vmatprep.subr.mxu0 0.0
        %4322 = vmatpush1.msra.mxu0 0.0
        %4323 = vmatprep.subr.mxu0 0.0
        %4324 = vmatpush1.msra.mxu0 0.0
        %4325 = vmatprep.subr.mxu0 0.0
        %4326 = vmatpush1.msra.mxu0 0.0
        %4327 = vmatprep.subr.mxu0 0.0
        %4328 = vmatpush1.msra.mxu0 0.0
        %4329 = vmatprep.subr.mxu0 0.0
        %4330 = vmatpush1.msra.mxu0 0.0
        %4331 = vmatprep.subr.mxu0 0.0
        %4332 = vmatpush1.msra.mxu0 0.0
        %4333 = vmatprep.subr.mxu0 0.0
        %4334 = vmatpush1.msra.mxu0 0.0
        %4335 = vmatprep.subr.mxu0 0.0
        %4336 = vmatpush1.msra.mxu0 0.0
        %4337 = vmatprep.subr.mxu0 0.0
        %4338 = vmatpush1.msra.mxu0 0.0
        %4339 = vmatprep.subr.mxu0 0.0
        %4340 = vmatpush1.msra.mxu0 0.0
        %4341 = vmatprep.subr.mxu0 0.0
        %4342 = vmatpush1.msra.mxu0 0.0
        %4343 = vmatprep.subr.mxu0 0.0
        %4344 = vmatpush1.msra.mxu0 0.0
        %4345 = vmatprep.subr.mxu0 0.0
        %4346 = vmatpush1.msra.mxu0 0.0
        %4347 = vmatprep.subr.mxu0 0.0
        %4348 = vmatpush1.msra.mxu0 0.0
        %4349 = vmatprep.subr.mxu0 0.0
        %4350 = vmatpush1.msra.mxu0 0.0
        %4351 = vmatprep.subr.mxu0 0.0
        %4352 = vmatpush1.msra.mxu0 %v4069
        %4353 = vmatprep.subr.mxu0 0.0
        %4354 = vmatpush2.msra.mxu0 0.0
        %4355 = vmatprep.subr.mxu0 0.0
        %4356 = vmatpush2.msra.mxu0 0.0
        %4357 = vmatprep.subr.mxu0 0.0
        %4358 = vmatpush2.msra.mxu0 0.0
        %4359 = vmatprep.subr.mxu0 0.0
        %4360 = vmatpush2.msra.mxu0 0.0
        %4361 = vmatprep.subr.mxu0 0.0
        %4362 = vmatpush2.msra.mxu0 0.0
        %4363 = vmatprep.subr.mxu0 0.0
        %4364 = vmatpush2.msra.mxu0 0.0
        %4365 = vmatprep.subr.mxu0 0.0
        %4366 = vmatpush2.msra.mxu0 0.0
        %4367 = vmatprep.subr.mxu0 0.0
        %4368 = vmatpush2.msra.mxu0 0.0
        %4369 = vmatprep.subr.mxu0 0.0
        %4370 = vmatpush2.msra.mxu0 0.0
        %4371 = vmatprep.subr.mxu0 0.0
        %4372 = vmatpush2.msra.mxu0 0.0
        %4373 = vmatprep.subr.mxu0 0.0
        %4374 = vmatpush2.msra.mxu0 0.0
        %4375 = vmatprep.subr.mxu0 0.0
        %4376 = vmatpush2.msra.mxu0 0.0
        %4377 = vmatprep.subr.mxu0 0.0
        %4378 = vmatpush2.msra.mxu0 0.0
        %4379 = vmatprep.subr.mxu0 0.0
        %4380 = vmatpush2.msra.mxu0 0.0
        %4381 = vmatprep.subr.mxu0 0.0
        %4382 = vmatpush2.msra.mxu0 0.0
        %4383 = vmatprep.subr.mxu0 0.0
        %4384 = vmatpush2.msra.mxu0 0.0
        %4385 = vmatprep.mubr.f32.mxu0 0.0
        %4386 = vmatmul.mubr.f32.gmra.mxu0 %v4319
        %v4387 = vpop.f32.mrf.mxu0
        %v4388 = vadd.f32 0.0, %v4387
        %v4389 = vpop.f32.mrf.mxu0
        %4390 = vdwg.mxu0
        %v4392 = vsel %vm2077, %v4317, 0
        %4394 = vmatprep.subr.mxu0 0.0
        %4395 = vmatpush1.msra.mxu0 0.0
        %4396 = vmatprep.subr.mxu0 0.0
        %4397 = vmatpush1.msra.mxu0 0.0
        %4398 = vmatprep.subr.mxu0 0.0
        %4399 = vmatpush1.msra.mxu0 0.0
        %4400 = vmatprep.subr.mxu0 0.0
        %4401 = vmatpush1.msra.mxu0 0.0
        %4402 = vmatprep.subr.mxu0 0.0
        %4403 = vmatpush1.msra.mxu0 0.0
        %4404 = vmatprep.subr.mxu0 0.0
        %4405 = vmatpush1.msra.mxu0 0.0
        %4406 = vmatprep.subr.mxu0 0.0
        %4407 = vmatpush1.msra.mxu0 0.0
        %4408 = vmatprep.subr.mxu0 0.0
        %4409 = vmatpush1.msra.mxu0 0.0
        %4410 = vmatprep.subr.mxu0 0.0
        %4411 = vmatpush1.msra.mxu0 0.0
        %4412 = vmatprep.subr.mxu0 0.0
        %4413 = vmatpush1.msra.mxu0 0.0
        %4414 = vmatprep.subr.mxu0 0.0
        %4415 = vmatpush1.msra.mxu0 0.0
        %4416 = vmatprep.subr.mxu0 0.0
        %4417 = vmatpush1.msra.mxu0 0.0
        %4418 = vmatprep.subr.mxu0 0.0
        %4419 = vmatpush1.msra.mxu0 0.0
        %4420 = vmatprep.subr.mxu0 0.0
        %4421 = vmatpush1.msra.mxu0 0.0
        %4422 = vmatprep.subr.mxu0 0.0
        %4423 = vmatpush1.msra.mxu0 0.0
        %4424 = vmatprep.subr.mxu0 0.0
        %4425 = vmatpush1.msra.mxu0 %v4139
        %4426 = vmatprep.subr.mxu0 0.0
        %4427 = vmatpush2.msra.mxu0 0.0
        %4428 = vmatprep.subr.mxu0 0.0
        %4429 = vmatpush2.msra.mxu0 0.0
        %4430 = vmatprep.subr.mxu0 0.0
        %4431 = vmatpush2.msra.mxu0 0.0
        %4432 = vmatprep.subr.mxu0 0.0
        %4433 = vmatpush2.msra.mxu0 0.0
        %4434 = vmatprep.subr.mxu0 0.0
        %4435 = vmatpush2.msra.mxu0 0.0
        %4436 = vmatprep.subr.mxu0 0.0
        %4437 = vmatpush2.msra.mxu0 0.0
        %4438 = vmatprep.subr.mxu0 0.0
        %4439 = vmatpush2.msra.mxu0 0.0
        %4440 = vmatprep.subr.mxu0 0.0
        %4441 = vmatpush2.msra.mxu0 0.0
        %4442 = vmatprep.subr.mxu0 0.0
        %4443 = vmatpush2.msra.mxu0 0.0
        %4444 = vmatprep.subr.mxu0 0.0
        %4445 = vmatpush2.msra.mxu0 0.0
        %4446 = vmatprep.subr.mxu0 0.0
        %4447 = vmatpush2.msra.mxu0 0.0
        %4448 = vmatprep.subr.mxu0 0.0
        %4449 = vmatpush2.msra.mxu0 0.0
        %4450 = vmatprep.subr.mxu0 0.0
        %4451 = vmatpush2.msra.mxu0 0.0
        %4452 = vmatprep.subr.mxu0 0.0
        %4453 = vmatpush2.msra.mxu0 0.0
        %4454 = vmatprep.subr.mxu0 0.0
        %4455 = vmatpush2.msra.mxu0 0.0
        %4456 = vmatprep.subr.mxu0 0.0
        %4457 = vmatpush2.msra.mxu0 0.0
        %4458 = vmatprep.mubr.f32.mxu0 0.0
        %4459 = vmatmul.mubr.f32.gmra.mxu0 %v4392
        %v4460 = vpop.f32.mrf.mxu0
        %v4461 = vadd.f32 0.0, %v4460
        %v4462 = vpop.f32.mrf.mxu0
        %4463 = vdwg.mxu0
        %v4465 = vsel %vm1922, %v4388, 0
        %4467 = vmatprep.subr.mxu0 0.0
        %4468 = vmatpush1.msra.mxu0 0.0
        %4469 = vmatprep.subr.mxu0 0.0
        %4470 = vmatpush1.msra.mxu0 0.0
        %4471 = vmatprep.subr.mxu0 0.0
        %4472 = vmatpush1.msra.mxu0 0.0
        %4473 = vmatprep.subr.mxu0 0.0
        %4474 = vmatpush1.msra.mxu0 0.0
        %4475 = vmatprep.subr.mxu0 0.0
        %4476 = vmatpush1.msra.mxu0 0.0
        %4477 = vmatprep.subr.mxu0 0.0
        %4478 = vmatpush1.msra.mxu0 0.0
        %4479 = vmatprep.subr.mxu0 0.0
        %4480 = vmatpush1.msra.mxu0 0.0
        %4481 = vmatprep.subr.mxu0 0.0
        %4482 = vmatpush1.msra.mxu0 0.0
        %4483 = vmatprep.subr.mxu0 0.0
        %4484 = vmatpush1.msra.mxu0 0.0
        %4485 = vmatprep.subr.mxu0 0.0
        %4486 = vmatpush1.msra.mxu0 0.0
        %4487 = vmatprep.subr.mxu0 0.0
        %4488 = vmatpush1.msra.mxu0 0.0
        %4489 = vmatprep.subr.mxu0 0.0
        %4490 = vmatpush1.msra.mxu0 0.0
        %4491 = vmatprep.subr.mxu0 0.0
        %4492 = vmatpush1.msra.mxu0 0.0
        %4493 = vmatprep.subr.mxu0 0.0
        %4494 = vmatpush1.msra.mxu0 0.0
        %4495 = vmatprep.subr.mxu0 0.0
        %4496 = vmatpush1.msra.mxu0 %v3676
        %4497 = vmatprep.subr.mxu0 0.0
        %4498 = vmatpush1.msra.mxu0 %v3675
        %4499 = vmatprep.subr.mxu0 0.0
        %4500 = vmatpush2.msra.mxu0 0.0
        %4501 = vmatprep.subr.mxu0 0.0
        %4502 = vmatpush2.msra.mxu0 0.0
        %4503 = vmatprep.subr.mxu0 0.0
        %4504 = vmatpush2.msra.mxu0 0.0
        %4505 = vmatprep.subr.mxu0 0.0
        %4506 = vmatpush2.msra.mxu0 0.0
        %4507 = vmatprep.subr.mxu0 0.0
        %4508 = vmatpush2.msra.mxu0 0.0
        %4509 = vmatprep.subr.mxu0 0.0
        %4510 = vmatpush2.msra.mxu0 0.0
        %4511 = vmatprep.subr.mxu0 0.0
        %4512 = vmatpush2.msra.mxu0 0.0
        %4513 = vmatprep.subr.mxu0 0.0
        %4514 = vmatpush2.msra.mxu0 0.0
        %4515 = vmatprep.subr.mxu0 0.0
        %4516 = vmatpush2.msra.mxu0 0.0
        %4517 = vmatprep.subr.mxu0 0.0
        %4518 = vmatpush2.msra.mxu0 0.0
        %4519 = vmatprep.subr.mxu0 0.0
        %4520 = vmatpush2.msra.mxu0 0.0
        %4521 = vmatprep.subr.mxu0 0.0
        %4522 = vmatpush2.msra.mxu0 0.0
        %4523 = vmatprep.subr.mxu0 0.0
        %4524 = vmatpush2.msra.mxu0 0.0
        %4525 = vmatprep.subr.mxu0 0.0
        %4526 = vmatpush2.msra.mxu0 0.0
        %4527 = vmatprep.subr.mxu0 0.0
        %4528 = vmatpush2.msra.mxu0 0.0
        %4529 = vmatprep.subr.mxu0 0.0
        %4530 = vmatpush2.msra.mxu0 0.0
        %4531 = vmatprep.mubr.f32.mxu0 0.0
        %4532 = vmatmul.mubr.f32.gmra.mxu0 %v4465
        %v4533 = vpop.f32.mrf.mxu0
        %v4534 = vadd.f32 0.0, %v4533
        %v4535 = vpop.f32.mrf.mxu0
        %4536 = vdwg.mxu0
        %v4538 = vsel %vm1922, %v4461, 0
        %4540 = vmatprep.subr.mxu0 0.0
        %4541 = vmatpush1.msra.mxu0 0.0
        %4542 = vmatprep.subr.mxu0 0.0
        %4543 = vmatpush1.msra.mxu0 0.0
        %4544 = vmatprep.subr.mxu0 0.0
        %4545 = vmatpush1.msra.mxu0 0.0
        %4546 = vmatprep.subr.mxu0 0.0
        %4547 = vmatpush1.msra.mxu0 0.0
        %4548 = vmatprep.subr.mxu0 0.0
        %4549 = vmatpush1.msra.mxu0 0.0
        %4550 = vmatprep.subr.mxu0 0.0
        %4551 = vmatpush1.msra.mxu0 0.0
        %4552 = vmatprep.subr.mxu0 0.0
        %4553 = vmatpush1.msra.mxu0 0.0
        %4554 = vmatprep.subr.mxu0 0.0
        %4555 = vmatpush1.msra.mxu0 0.0
        %4556 = vmatprep.subr.mxu0 0.0
        %4557 = vmatpush1.msra.mxu0 0.0
        %4558 = vmatprep.subr.mxu0 0.0
        %4559 = vmatpush1.msra.mxu0 0.0
        %4560 = vmatprep.subr.mxu0 0.0
        %4561 = vmatpush1.msra.mxu0 0.0
        %4562 = vmatprep.subr.mxu0 0.0
        %4563 = vmatpush1.msra.mxu0 0.0
        %4564 = vmatprep.subr.mxu0 0.0
        %4565 = vmatpush1.msra.mxu0 0.0
        %4566 = vmatprep.subr.mxu0 0.0
        %4567 = vmatpush1.msra.mxu0 0.0
        %4568 = vmatprep.subr.mxu0 0.0
        %4569 = vmatpush1.msra.mxu0 %v3678
        %4570 = vmatprep.subr.mxu0 0.0
        %4571 = vmatpush1.msra.mxu0 %v3677
        %4572 = vmatprep.subr.mxu0 0.0
        %4573 = vmatpush2.msra.mxu0 0.0
        %4574 = vmatprep.subr.mxu0 0.0
        %4575 = vmatpush2.msra.mxu0 0.0
        %4576 = vmatprep.subr.mxu0 0.0
        %4577 = vmatpush2.msra.mxu0 0.0
        %4578 = vmatprep.subr.mxu0 0.0
        %4579 = vmatpush2.msra.mxu0 0.0
        %4580 = vmatprep.subr.mxu0 0.0
        %4581 = vmatpush2.msra.mxu0 0.0
        %4582 = vmatprep.subr.mxu0 0.0
        %4583 = vmatpush2.msra.mxu0 0.0
        %4584 = vmatprep.subr.mxu0 0.0
        %4585 = vmatpush2.msra.mxu0 0.0
        %4586 = vmatprep.subr.mxu0 0.0
        %4587 = vmatpush2.msra.mxu0 0.0
        %4588 = vmatprep.subr.mxu0 0.0
        %4589 = vmatpush2.msra.mxu0 0.0
        %4590 = vmatprep.subr.mxu0 0.0
        %4591 = vmatpush2.msra.mxu0 0.0
        %4592 = vmatprep.subr.mxu0 0.0
        %4593 = vmatpush2.msra.mxu0 0.0
        %4594 = vmatprep.subr.mxu0 0.0
        %4595 = vmatpush2.msra.mxu0 0.0
        %4596 = vmatprep.subr.mxu0 0.0
        %4597 = vmatpush2.msra.mxu0 0.0
        %4598 = vmatprep.subr.mxu0 0.0
        %4599 = vmatpush2.msra.mxu0 0.0
        %4600 = vmatprep.subr.mxu0 0.0
        %4601 = vmatpush2.msra.mxu0 0.0
        %4602 = vmatprep.subr.mxu0 0.0
        %4603 = vmatpush2.msra.mxu0 0.0
        %4604 = vmatprep.mubr.f32.mxu0 0.0
        %4605 = vmatmul.mubr.f32.gmra.mxu0 %v4538
        %v4606 = vpop.f32.mrf.mxu0
        %v4607 = vadd.f32 0.0, %v4606
        %v4608 = vpop.f32.mrf.mxu0
        %4609 = vdwg.mxu0
        %v4610 = vsel %vm1474, %v4534, 0.0
        %v4611 = vsel %vm1474, %v4607, 0.0
        %v4612 = vadd.f32 %v4610, %v4611
        %v4614 = vlaneseq
        %v4615 = vshrl.u32 %v4614, 7
        %v4616 = vsub.s32 0, %v4615
        %v4617 = vrot.slane %v3679, %v4616
        %v4619 = vadd.f32 %v4612, %v4617
        %v4620 = vadd.f32 %v3644, %v4619
        %v4621 = vld [vmem:[%s75] sm:$0x1]
        %v4622 = vld [vmem:[%s77] sm:$0x1]
        %v4623 = vsel %vm1474, %v4620, 0.0
        %4624 = vadd.xlane.f32.xlu0 %v4623
        %v4625 = vpop.xlane.xlu0 %4624
        %v4626 = vmul.f32 %v4625, %v2408
        %v4627 = vsub.f32 %v4620, %v4626
        %v4628 = vmul.f32 %v4627, %v4627
        %v4629 = vsel %vm1474, %v4628, 0.0
        %4630 = vadd.xlane.f32.xlu0 %v4629
        %v4631 = vpop.xlane.xlu0 %4630
        %v4632 = vmul.f32 %v4631, %v2408
        %v4633 = vadd.f32 %v4632, 1e-05
        %v4634 = vrsqrt.pop %v4633
        %v4635 = vmul.f32 %v4627, %v4634
        %v4637 = vlaneseq
        %v4638 = vshrl.u32 %v4637, 7
        %v4639 = vsub.s32 0, %v4638
        %v4640 = vrot.slane %v4621, %v4639
        %v4642 = vmul.f32 %v4635, %v4640
        %v4644 = vlaneseq
        %v4645 = vshrl.u32 %v4644, 7
        %v4646 = vsub.s32 0, %v4645
        %v4647 = vrot.slane %v4622, %v4646
        %v4649 = vadd.f32 %v4642, %v4647
        %v4650 = vld [vmem:[%s79] sm:$0xff]
        %v4651 = vld [vmem:[%s79 + $0x8] sm:$0xff]
        %v4652 = vld [vmem:[%s79 + $0x10] sm:$0xff]
        %v4653 = vld [vmem:[%s79 + $0x18] sm:$0xff]
        %v4654 = vld [vmem:[%s81] sm:$0x1]
        %v4655 = vld [vmem:[%s83] sm:$0xff]
        %v4656 = vld [vmem:[%s83 + $0x8] sm:$0xff]
        %v4657 = vld [vmem:[%s83 + $0x10] sm:$0xff]
        %v4658 = vld [vmem:[%s83 + $0x18] sm:$0xff]
        %v4659 = vld [vmem:[%s83 + $0x20] sm:$0xff]
        %v4660 = vld [vmem:[%s83 + $0x28] sm:$0xff]
        %v4661 = vld [vmem:[%s83 + $0x30] sm:$0xff]
        %v4662 = vld [vmem:[%s83 + $0x38] sm:$0xff]
        %v4663 = vld [vmem:[%s85] sm:$0x1]
        %v4665 = vlaneseq
        %v4666 = vshrl.u32 %v4665, 7
        %v4667 = vsub.s32 0, %v4666
        %v4668 = vrot.slane %v4654, %v4667
        %v4671 = vsel %vm1474, %v4649, 0
        %4673 = vmatprep.subr.mxu0 0.0
        %4674 = vmatpush1.msra.mxu0 0.0
        %4675 = vmatprep.subr.mxu0 0.0
        %4676 = vmatpush1.msra.mxu0 0.0
        %4677 = vmatprep.subr.mxu0 0.0
        %4678 = vmatpush1.msra.mxu0 0.0
        %4679 = vmatprep.subr.mxu0 0.0
        %4680 = vmatpush1.msra.mxu0 0.0
        %4681 = vmatprep.subr.mxu0 0.0
        %4682 = vmatpush1.msra.mxu0 0.0
        %4683 = vmatprep.subr.mxu0 0.0
        %4684 = vmatpush1.msra.mxu0 0.0
        %4685 = vmatprep.subr.mxu0 0.0
        %4686 = vmatpush1.msra.mxu0 0.0
        %4687 = vmatprep.subr.mxu0 0.0
        %4688 = vmatpush1.msra.mxu0 0.0
        %4689 = vmatprep.subr.mxu0 0.0
        %4690 = vmatpush1.msra.mxu0 0.0
        %4691 = vmatprep.subr.mxu0 0.0
        %4692 = vmatpush1.msra.mxu0 0.0
        %4693 = vmatprep.subr.mxu0 0.0
        %4694 = vmatpush1.msra.mxu0 0.0
        %4695 = vmatprep.subr.mxu0 0.0
        %4696 = vmatpush1.msra.mxu0 0.0
        %4697 = vmatprep.subr.mxu0 0.0
        %4698 = vmatpush1.msra.mxu0 %v4653
        %4699 = vmatprep.subr.mxu0 0.0
        %4700 = vmatpush1.msra.mxu0 %v4652
        %4701 = vmatprep.subr.mxu0 0.0
        %4702 = vmatpush1.msra.mxu0 %v4651
        %4703 = vmatprep.subr.mxu0 0.0
        %4704 = vmatpush1.msra.mxu0 %v4650
        %4705 = vmatprep.subr.mxu0 0.0
        %4706 = vmatpush2.msra.mxu0 0.0
        %4707 = vmatprep.subr.mxu0 0.0
        %4708 = vmatpush2.msra.mxu0 0.0
        %4709 = vmatprep.subr.mxu0 0.0
        %4710 = vmatpush2.msra.mxu0 0.0
        %4711 = vmatprep.subr.mxu0 0.0
        %4712 = vmatpush2.msra.mxu0 0.0
        %4713 = vmatprep.subr.mxu0 0.0
        %4714 = vmatpush2.msra.mxu0 0.0
        %4715 = vmatprep.subr.mxu0 0.0
        %4716 = vmatpush2.msra.mxu0 0.0
        %4717 = vmatprep.subr.mxu0 0.0
        %4718 = vmatpush2.msra.mxu0 0.0
        %4719 = vmatprep.subr.mxu0 0.0
        %4720 = vmatpush2.msra.mxu0 0.0
        %4721 = vmatprep.subr.mxu0 0.0
        %4722 = vmatpush2.msra.mxu0 0.0
        %4723 = vmatprep.subr.mxu0 0.0
        %4724 = vmatpush2.msra.mxu0 0.0
        %4725 = vmatprep.subr.mxu0 0.0
        %4726 = vmatpush2.msra.mxu0 0.0
        %4727 = vmatprep.subr.mxu0 0.0
        %4728 = vmatpush2.msra.mxu0 0.0
        %4729 = vmatprep.subr.mxu0 0.0
        %4730 = vmatpush2.msra.mxu0 0.0
        %4731 = vmatprep.subr.mxu0 0.0
        %4732 = vmatpush2.msra.mxu0 0.0
        %4733 = vmatprep.subr.mxu0 0.0
        %4734 = vmatpush2.msra.mxu0 0.0
        %4735 = vmatprep.subr.mxu0 0.0
        %4736 = vmatpush2.msra.mxu0 0.0
        %4737 = vmatprep.mubr.f32.mxu0 0.0
        %4738 = vmatmul.mubr.f32.gmra.mxu0 %v4671
        %v4739 = vpop.f32.mrf.mxu0
        %v4740 = vadd.f32 %v4668, %v4739
        %v4741 = vpop.f32.mrf.mxu0
        %4742 = vdwg.mxu0
        %v4743 = vmax.f32 %v4740, 0.0
        %v4745 = vlaneseq
        %v4746 = vshrl.u32 %v4745, 7
        %v4747 = vsub.s32 0, %v4746
        %v4748 = vrot.slane %v4663, %v4747
        %v4751 = vsel %vm2533, %v4743, 0
        %4753 = vmatprep.subr.mxu0 0.0
        %4754 = vmatpush1.msra.mxu0 0.0
        %4755 = vmatprep.subr.mxu0 0.0
        %4756 = vmatpush1.msra.mxu0 0.0
        %4757 = vmatprep.subr.mxu0 0.0
        %4758 = vmatpush1.msra.mxu0 0.0
        %4759 = vmatprep.subr.mxu0 0.0
        %4760 = vmatpush1.msra.mxu0 0.0
        %4761 = vmatprep.subr.mxu0 0.0
        %4762 = vmatpush1.msra.mxu0 0.0
        %4763 = vmatprep.subr.mxu0 0.0
        %4764 = vmatpush1.msra.mxu0 0.0
        %4765 = vmatprep.subr.mxu0 0.0
        %4766 = vmatpush1.msra.mxu0 0.0
        %4767 = vmatprep.subr.mxu0 0.0
        %4768 = vmatpush1.msra.mxu0 0.0
        %4769 = vmatprep.subr.mxu0 0.0
        %4770 = vmatpush1.msra.mxu0 %v4662
        %4771 = vmatprep.subr.mxu0 0.0
        %4772 = vmatpush1.msra.mxu0 %v4661
        %4773 = vmatprep.subr.mxu0 0.0
        %4774 = vmatpush1.msra.mxu0 %v4660
        %4775 = vmatprep.subr.mxu0 0.0
        %4776 = vmatpush1.msra.mxu0 %v4659
        %4777 = vmatprep.subr.mxu0 0.0
        %4778 = vmatpush1.msra.mxu0 %v4658
        %4779 = vmatprep.subr.mxu0 0.0
        %4780 = vmatpush1.msra.mxu0 %v4657
        %4781 = vmatprep.subr.mxu0 0.0
        %4782 = vmatpush1.msra.mxu0 %v4656
        %4783 = vmatprep.subr.mxu0 0.0
        %4784 = vmatpush1.msra.mxu0 %v4655
        %4785 = vmatprep.subr.mxu0 0.0
        %4786 = vmatpush2.msra.mxu0 0.0
        %4787 = vmatprep.subr.mxu0 0.0
        %4788 = vmatpush2.msra.mxu0 0.0
        %4789 = vmatprep.subr.mxu0 0.0
        %4790 = vmatpush2.msra.mxu0 0.0
        %4791 = vmatprep.subr.mxu0 0.0
        %4792 = vmatpush2.msra.mxu0 0.0
        %4793 = vmatprep.subr.mxu0 0.0
        %4794 = vmatpush2.msra.mxu0 0.0
        %4795 = vmatprep.subr.mxu0 0.0
        %4796 = vmatpush2.msra.mxu0 0.0
        %4797 = vmatprep.subr.mxu0 0.0
        %4798 = vmatpush2.msra.mxu0 0.0
        %4799 = vmatprep.subr.mxu0 0.0
        %4800 = vmatpush2.msra.mxu0 0.0
        %4801 = vmatprep.subr.mxu0 0.0
        %4802 = vmatpush2.msra.mxu0 0.0
        %4803 = vmatprep.subr.mxu0 0.0
        %4804 = vmatpush2.msra.mxu0 0.0
        %4805 = vmatprep.subr.mxu0 0.0
        %4806 = vmatpush2.msra.mxu0 0.0
        %4807 = vmatprep.subr.mxu0 0.0
        %4808 = vmatpush2.msra.mxu0 0.0
        %4809 = vmatprep.subr.mxu0 0.0
        %4810 = vmatpush2.msra.mxu0 0.0
        %4811 = vmatprep.subr.mxu0 0.0
        %4812 = vmatpush2.msra.mxu0 0.0
        %4813 = vmatprep.subr.mxu0 0.0
        %4814 = vmatpush2.msra.mxu0 0.0
        %4815 = vmatprep.subr.mxu0 0.0
        %4816 = vmatpush2.msra.mxu0 0.0
        %4817 = vmatprep.mubr.f32.mxu0 0.0
        %4818 = vmatmul.mubr.f32.gmra.mxu0 %v4751
        %v4819 = vpop.f32.mrf.mxu0
        %v4820 = vadd.f32 %v4748, %v4819
        %v4821 = vpop.f32.mrf.mxu0
        %4822 = vdwg.mxu0
        %v4823 = vadd.f32 %v4649, %v4820
        %v4824 = vld [vmem:[%s87] sm:$0x1]
        %v4825 = vld [vmem:[%s89] sm:$0x1]
        %v4826 = vsel %vm1474, %v4823, 0.0
        %4827 = vadd.xlane.f32.xlu0 %v4826
        %v4828 = vpop.xlane.xlu0 %4827
        %v4829 = vmul.f32 %v4828, %v2408
        %v4830 = vsub.f32 %v4823, %v4829
        %v4831 = vmul.f32 %v4830, %v4830
        %v4832 = vsel %vm1474, %v4831, 0.0
        %4833 = vadd.xlane.f32.xlu0 %v4832
        %v4834 = vpop.xlane.xlu0 %4833
        %v4835 = vmul.f32 %v4834, %v2408
        %v4836 = vadd.f32 %v4835, 1e-05
        %v4837 = vrsqrt.pop %v4836
        %v4838 = vmul.f32 %v4830, %v4837
        %v4840 = vlaneseq
        %v4841 = vshrl.u32 %v4840, 7
        %v4842 = vsub.s32 0, %v4841
        %v4843 = vrot.slane %v4824, %v4842
        %v4845 = vmul.f32 %v4838, %v4843
        %v4847 = vlaneseq
        %v4848 = vshrl.u32 %v4847, 7
        %v4849 = vsub.s32 0, %v4848
        %v4850 = vrot.slane %v4825, %v4849
        %v4852 = vadd.f32 %v4845, %v4850
        %v4853 = vld [vmem:[%s91] sm:$0xff]
        %v4854 = vld [vmem:[%s91 + $0x8] sm:$0xff]
        %v4855 = vld [vmem:[%s91 + $0x10] sm:$0xff]
        %v4856 = vld [vmem:[%s91 + $0x18] sm:$0xff]
        %v4857 = vld [vmem:[%s93] sm:$0x1]
        %v4859 = vlaneseq
        %v4860 = vshrl.u32 %v4859, 7
        %v4861 = vsub.s32 0, %v4860
        %v4862 = vrot.slane %v4857, %v4861
        %v4865 = vsel %vm1474, %v4852, 0
        %4867 = vmatprep.subr.mxu0 0.0
        %4868 = vmatpush1.msra.mxu0 0.0
        %4869 = vmatprep.subr.mxu0 0.0
        %4870 = vmatpush1.msra.mxu0 0.0
        %4871 = vmatprep.subr.mxu0 0.0
        %4872 = vmatpush1.msra.mxu0 0.0
        %4873 = vmatprep.subr.mxu0 0.0
        %4874 = vmatpush1.msra.mxu0 0.0
        %4875 = vmatprep.subr.mxu0 0.0
        %4876 = vmatpush1.msra.mxu0 0.0
        %4877 = vmatprep.subr.mxu0 0.0
        %4878 = vmatpush1.msra.mxu0 0.0
        %4879 = vmatprep.subr.mxu0 0.0
        %4880 = vmatpush1.msra.mxu0 0.0
        %4881 = vmatprep.subr.mxu0 0.0
        %4882 = vmatpush1.msra.mxu0 0.0
        %4883 = vmatprep.subr.mxu0 0.0
        %4884 = vmatpush1.msra.mxu0 0.0
        %4885 = vmatprep.subr.mxu0 0.0
        %4886 = vmatpush1.msra.mxu0 0.0
        %4887 = vmatprep.subr.mxu0 0.0
        %4888 = vmatpush1.msra.mxu0 0.0
        %4889 = vmatprep.subr.mxu0 0.0
        %4890 = vmatpush1.msra.mxu0 0.0
        %4891 = vmatprep.subr.mxu0 0.0
        %4892 = vmatpush1.msra.mxu0 %v4856
        %4893 = vmatprep.subr.mxu0 0.0
        %4894 = vmatpush1.msra.mxu0 %v4855
        %4895 = vmatprep.subr.mxu0 0.0
        %4896 = vmatpush1.msra.mxu0 %v4854
        %4897 = vmatprep.subr.mxu0 0.0
        %4898 = vmatpush1.msra.mxu0 %v4853
        %4899 = vmatprep.subr.mxu0 0.0
        %4900 = vmatpush2.msra.mxu0 0.0
        %4901 = vmatprep.subr.mxu0 0.0
        %4902 = vmatpush2.msra.mxu0 0.0
        %4903 = vmatprep.subr.mxu0 0.0
        %4904 = vmatpush2.msra.mxu0 0.0
        %4905 = vmatprep.subr.mxu0 0.0
        %4906 = vmatpush2.msra.mxu0 0.0
        %4907 = vmatprep.subr.mxu0 0.0
        %4908 = vmatpush2.msra.mxu0 0.0
        %4909 = vmatprep.subr.mxu0 0.0
        %4910 = vmatpush2.msra.mxu0 0.0
        %4911 = vmatprep.subr.mxu0 0.0
        %4912 = vmatpush2.msra.mxu0 0.0
        %4913 = vmatprep.subr.mxu0 0.0
        %4914 = vmatpush2.msra.mxu0 0.0
        %4915 = vmatprep.subr.mxu0 0.0
        %4916 = vmatpush2.msra.mxu0 0.0
        %4917 = vmatprep.subr.mxu0 0.0
        %4918 = vmatpush2.msra.mxu0 0.0
        %4919 = vmatprep.subr.mxu0 0.0
        %4920 = vmatpush2.msra.mxu0 0.0
        %4921 = vmatprep.subr.mxu0 0.0
        %4922 = vmatpush2.msra.mxu0 0.0
        %4923 = vmatprep.subr.mxu0 0.0
        %4924 = vmatpush2.msra.mxu0 0.0
        %4925 = vmatprep.subr.mxu0 0.0
        %4926 = vmatpush2.msra.mxu0 0.0
        %4927 = vmatprep.subr.mxu0 0.0
        %4928 = vmatpush2.msra.mxu0 0.0
        %4929 = vmatprep.subr.mxu0 0.0
        %4930 = vmatpush2.msra.mxu0 0.0
        %4931 = vmatprep.mubr.f32.mxu0 0.0
        %4932 = vmatmul.mubr.f32.gmra.mxu0 %v4865
        %v4933 = vpop.f32.mrf.mxu0
        %v4934 = vadd.f32 %v4862, %v4933
        %v4935 = vpop.f32.mrf.mxu0
        %4936 = vdwg.mxu0
        %4937 = vst.msk [vmem:[%s1410] sm:$0xff] %vm1474, %v4934
        %s4938 = sand.u32 %s1114, 1
        %s4939 = scalar_lea.sflag [#allocation3], %s4938
        %s4940 = sand.u32 %s1114, 1
        %s4941 = smul.addr %s4940, 8
        %s4942 = scalar_lea.vmem [#allocation2], %s4941
        // Predicated region
        $region209: #{transformer_forward.1} parent=207 // pred_check
          %p4943 = pneg %p1124
        $region210: #{transformer_forward.1} parent=207 // pred_check_branch
          %4945 = sbr.rel (%p4943) target = $region212
        $region211: #{transformer_forward.1} parent=207 // pred_region
          %s4947 = ssub.s32 128, 128
          %4948 = vsyncadd %s4939, %s4947
          %s4949 = smul.addr %s109, 128
          %s4950 = scalar_lea.hbm %s95, %s4949
          %s4952 = sshll.u32 %s4942, 4
          %s4953 = int_to_ptr.vmem [resolvable:$true] %s4952
          %4955 = dma.vmem_to_hbm [thread:$0]  %s4953, 128, %s4950, %s4939
        $region212: #{transformer_forward.1} parent=207 // pred_fallthru
          _
      $region208: #{transformer_forward.1} parent=5 // pred_fallthru
        _
      %p4956 = scmp.le.s32.totalorder 2, %s104
      // Predicated region
      $region213: #{transformer_forward.1} parent=5 // pred_check
        %p4957 = pneg %p4956
      $region214: #{transformer_forward.1} parent=5 // pred_check_branch
        %4959 = sbr.rel (%p4957) target = $region216
      $region215: #{transformer_forward.1} parent=5 // pred_region
        %s4960 = ssub.s32 %s104, 2
        // Predicated region
        $region217: #{transformer_forward.1} parent=215 // pred_check
          %p4961 = pneg %p1130
        $region218: #{transformer_forward.1} parent=215 // pred_check_branch
          %4963 = sbr.rel (%p4961) target = $region220
        $region219: #{transformer_forward.1} parent=215 // pred_region
          %s4964 = sand.u32 %s1115, 1
          %s4965 = scalar_lea.sflag [#allocation3], %s4964
          %s4966 = sand.u32 %s1115, 1
          %s4967 = smul.addr %s4966, 8
          %s4968 = scalar_lea.vmem [#allocation2], %s4967
          %4969 = dma.done %s4965, 128
        $region220: #{transformer_forward.1} parent=215 // pred_fallthru
          _
      $region216: #{transformer_forward.1} parent=5 // pred_fallthru
        _
    $region6: #{transformer_forward.1} parent=1 // loop_footer
      %s108 = sadd.s32 1, %s104
    $region7: #{transformer_forward.1} parent=1 // loop_footer_branch
      %103 = sbr.rel target = $region3
    $region8: #{transformer_forward.1} parent=1 // loop_exit
      _
    %4970 = vsyncpa [#allocation3], 1
    %s4971 = scalar_lea.sflag [#allocation3], 1
    %4972 = vsyncpa %s4971, 1

</llo_original>
